<compile_context>
chip_gen: v7x
topology: tpu7x:2x2x1
jax: 0.10.0
libtpu: 0.0.40
codegen_flags: <defaults>
</compile_context>

<pallas_src>
import functools
import math

import jax
import jax.numpy as jnp
from jax.experimental import pallas as pl
from jax.experimental.pallas import tpu as pltpu

VMEM = pltpu.MemorySpace.VMEM

# ----------------------------- configuration ------------------------------
B = 2            # batch
D = 4            # enc_in (channels)
W = 16           # window_size
NM = 4           # number of time-mark features
PS = 6           # patch_size
STRIDE = 4       # stride
PN_BASE = (W - PS) // STRIDE + 1
PAD = 0 if (W - PS) % STRIDE == 0 else STRIDE - (W - PS) % STRIDE
PN = PN_BASE + (1 if PAD else 0)          # patch_num (= 4)
DM = 32          # d_model
NH = 4           # gpt2 heads
HD = DM // NH    # head dim
DFF = 64         # d_ff (gpt2 mlp inner)
NLAYERS = 2      # gpt_layers
PRED = 8         # pred_len
REVIN_EPS = 1e-5

BD = B * D       # rows = (batch, channel)              (= 8)
R = PN * BD      # transformer slab rows, row = p*BD+bd (= 32)
NMPS = NM * PS
HR = NH * R      # head-stacked rows                    (= 128)


# ------------------------------ fused kernel ------------------------------
def _llm4ts_fused_kernel(
    x_ref,          # (BD, W)          raw series rows (for RevIN stats)
    vpatch_ref,     # (R, PS)          raw value patches, row = p*BD+bd
    mpatch_ref,     # (R, NM*PS)       raw mark patches (broadcast over D)
    rw_ref,         # (BD, 1)          RevIN affine weight per row
    rb_ref,         # (BD, 1)          RevIN affine bias per row
    invrw_ref,      # (BD, 1)          1 / (rw + eps^2)  (precomputed)
    wvm_ref,        # (PS+NM*PS, DM)   [W_val; W_mark] stacked
    pebias_ref,     # (R, DM)          sinusoidal PE + wpe + b_val + b_mark
    addmask_ref,    # (R, NH*R)        additive causal/block mask (0 / -1e30)
    headmask_ref,   # (NH*R, DM)       block-diagonal head selector (0/1)
    segones_ref,    # (NH*R, NH*R)     block-diagonal ones (segmented sums)
    ln1g_ref, ln1b_ref,        # (L, 1, DM)
    wqkv_ref, bqkv_ref,        # (L, DM, 3*DM), (L, 1, 3*DM)  (Q pre-scaled)
    wapr_ref, bapr_ref,        # (L, DM, DM),   (L, 1, DM)
    ln2g_ref, ln2b_ref,        # (L, 1, DM)
    wfc_ref, bfc_ref,          # (L, DM, DFF),  (L, 1, DFF)
    wmp_ref, bmp_ref,          # (L, DFF, DM),  (L, 1, DM)
    lnfg_ref, lnfb_ref,        # (1, DM)
    wout_ref, bout_ref,        # (PN*DM, PRED), (1, PRED)
    patch_out_ref,  # (R, PS)          normalized patches (output)
    dec_out_ref,    # (BD, PRED)       forecast (output, pre-transpose)
):
    f32 = jnp.float32

    # ------------- RevIN 'norm' statistics (per (batch, channel) row) -------
    x = x_ref[...]                                            # (BD, W)
    mean = jnp.mean(x, axis=-1, keepdims=True)                # (BD, 1)
    var = jnp.mean((x - mean) ** 2, axis=-1, keepdims=True)
    std = jnp.sqrt(var + REVIN_EPS)
    inv_std = jax.lax.rsqrt(var + REVIN_EPS)
    rw = rw_ref[...]
    rb = rb_ref[...]

    # Tile per-row stats to the (R, *) patch-major layout (row = p*BD + bd).
    mean_r = jnp.concatenate([mean] * PN, axis=0)             # (R, 1)
    invstd_r = jnp.concatenate([inv_std] * PN, axis=0)
    rw_r = jnp.concatenate([rw] * PN, axis=0)
    rb_r = jnp.concatenate([rb] * PN, axis=0)

    # RevIN norm commutes with the (data-independent) unfold done host-side.
    pnorm = (vpatch_ref[...] - mean_r) * invstd_r * rw_r + rb_r   # (R, PS)
    patch_out_ref[...] = pnorm

    # ------------- patch + mark embedding (single matmul) -------------------
    emb_in = jnp.concatenate([pnorm, mpatch_ref[...]], axis=1)    # (R, PS+NM*PS)
    h2 = jnp.dot(emb_in, wvm_ref[...],
                 preferred_element_type=f32) + pebias_ref[...]    # (R, DM)

    add_mask = addmask_ref[...]                               # (R, HR)
    head_mask = headmask_ref[...]                              # (HR, DM)
    seg_ones = segones_ref[...]                                # (HR, HR)

    def layernorm(v, g, b):
        mu = jnp.mean(v, axis=-1, keepdims=True)
        va = jnp.mean((v - mu) ** 2, axis=-1, keepdims=True)
        return (v - mu) * jax.lax.rsqrt(va + 1e-5) * g + b

    # ------------- GPT-2 trunk (pre-LN blocks), heads fused ------------------
    for l in range(NLAYERS):
        a = layernorm(h2, ln1g_ref[l], ln1b_ref[l])
        qkv = jnp.dot(a, wqkv_ref[l], preferred_element_type=f32) + bqkv_ref[l]
        q = qkv[:, :DM]                                        # scale pre-folded
        k = qkv[:, DM:2 * DM]
        v = qkv[:, 2 * DM:]

        # Stack heads block-diagonally along sublanes: (HR, DM) = (128, 32).
        k_st = jnp.concatenate([k] * NH, axis=0) * head_mask
        v_st = jnp.concatenate([v] * NH, axis=0) * head_mask

        # All heads' scores in one push: (R, HR) = (32, 128).
        s = jax.lax.dot_general(q, k_st, (((1,), (1,)), ((), ())),
                                preferred_element_type=f32)
        s = s + add_mask
        s = s - jnp.max(s, axis=-1, keepdims=True)             # global row max
        pexp = jnp.exp(s)
        # Per-head softmax denominator via block-ones matmul (segmented sums).
        denom = jnp.dot(pexp, seg_ones, preferred_element_type=f32)
        p = pexp / denom                                       # exact divide

        # PV with block-diagonal V gives the multi-head concat directly.
        o_cat = jnp.dot(p, v_st, preferred_element_type=f32)   # (R, DM)
        attn = jnp.dot(o_cat, wapr_ref[l],
                       preferred_element_type=f32) + bapr_ref[l]
        h2 = h2 + attn

        m = layernorm(h2, ln2g_ref[l], ln2b_ref[l])
        m = jnp.dot(m, wfc_ref[l], preferred_element_type=f32) + bfc_ref[l]
        m = jax.nn.gelu(m, approximate=True)                   # GPT-2 gelu_new
        m = jnp.dot(m, wmp_ref[l], preferred_element_type=f32) + bmp_ref[l]
        h2 = h2 + m

    hf = layernorm(h2, lnfg_ref[...], lnfb_ref[...])           # (R, DM)

    # ------------- DFT output head: feat[bd] = concat_p hf[p*BD+bd, :] -------
    # Flatten is patch-major (feature index = p*DM + k), matching
    # outputs.reshape(B*D, -1) on a (B*D, patch_num, d_model) tensor.
    feat = jnp.concatenate(
        [hf[p * BD:(p + 1) * BD, :] for p in range(PN)], axis=1)  # (BD, PN*DM)
    pred = jnp.dot(feat, wout_ref[...],
                   preferred_element_type=f32) + bout_ref[...]    # (BD, PRED)

    # ------------- RevIN 'denorm' (reciprocal precomputed host-side) ---------
    pred = (pred - rb) * invrw_ref[...]
    dec_out_ref[...] = pred * std + mean


# ----------------------------- model composition --------------------------
def sinusoidal_pe(length, d_model):
    pos = jnp.arange(length, dtype=jnp.float32)[:, None]
    div = jnp.exp(jnp.arange(0, d_model, 2, dtype=jnp.float32)
                  * (-math.log(10000.0) / d_model))
    pe = jnp.zeros((length, d_model), jnp.float32)
    pe = pe.at[:, 0::2].set(jnp.sin(pos * div))
    pe = pe.at[:, 1::2].set(jnp.cos(pos * div))
    return pe


def init_params(key):
    def nrm(k, shape, scale=0.02):
        return scale * jax.random.normal(k, shape, jnp.float32)

    keys = iter(jax.random.split(key, 64))
    p = {
        "revin_w": jnp.ones((D,), jnp.float32),
        "revin_b": jnp.zeros((D,), jnp.float32),
        "W_val": nrm(next(keys), (PS, DM)),
        "b_val": jnp.zeros((DM,), jnp.float32),
        "W_mark": nrm(next(keys), (NM * PS, DM)),
        "b_mark": jnp.zeros((DM,), jnp.float32),
        "wpe": nrm(next(keys), (PN, DM)),
        "lnf_g": jnp.ones((DM,), jnp.float32),
        "lnf_b": jnp.zeros((DM,), jnp.float32),
        "W_out": nrm(next(keys), (DM * PN, PRED)),
        "b_out": jnp.zeros((PRED,), jnp.float32),
        "layers": [],
    }
    for _ in range(NLAYERS):
        p["layers"].append({
            "ln1_g": jnp.ones((DM,), jnp.float32),
            "ln1_b": jnp.zeros((DM,), jnp.float32),
            "attn_w": nrm(next(keys), (DM, 3 * DM)),
            "attn_b": jnp.zeros((3 * DM,), jnp.float32),
            "attn_proj_w": nrm(next(keys), (DM, DM)),
            "attn_proj_b": jnp.zeros((DM,), jnp.float32),
            "ln2_g": jnp.ones((DM,), jnp.float32),
            "ln2_b": jnp.zeros((DM,), jnp.float32),
            "fc_w": nrm(next(keys), (DM, DFF)),
            "fc_b": jnp.zeros((DFF,), jnp.float32),
            "mlp_proj_w": nrm(next(keys), (DFF, DM)),
            "mlp_proj_b": jnp.zeros((DM,), jnp.float32),
        })
    return p


def make_patches_raw(x_bt):
    """x_bt: (..., W) -> (..., PN, PS) with right replication padding."""
    pad_widths = [(0, 0)] * (x_bt.ndim - 1) + [(0, PAD)]
    xp = jnp.pad(x_bt, pad_widths, mode="edge")
    idx = (jnp.arange(PN) * STRIDE)[:, None] + jnp.arange(PS)[None, :]
    return xp[..., idx]


def llm4ts_forward(params, x_enc, x_mark_enc):
    """Returns (patch_x, dec_out) matching forward() for long_term_forecast / DFT."""
    Bs, Ws, Ds = x_enc.shape
    scale = 1.0 / math.sqrt(HD)

    # ---- input prep (cheap, data-independent XLA glue on raw inputs) ----
    x_t = jnp.transpose(x_enc, (0, 2, 1))                         # (B, D, W)
    x_bdw = x_t.reshape(Bs * Ds, Ws)
    vpatch = make_patches_raw(x_t)                                # (B, D, PN, PS)
    vpatch_r = jnp.transpose(vpatch, (2, 0, 1, 3)).reshape(R, PS)

    mark_t = jnp.transpose(x_mark_enc, (0, 2, 1))                 # (B, NM, W)
    mpatch = make_patches_raw(mark_t)                             # (B, NM, PN, PS)
    mpatch_p = jnp.transpose(mpatch, (2, 0, 1, 3)).reshape(PN, Bs, NMPS)
    mpatch_r = jnp.broadcast_to(mpatch_p[:, :, None, :],
                                (PN, Bs, Ds, NMPS)).reshape(R, NMPS)

    rw_rows = jnp.tile(params["revin_w"], (Bs,)).reshape(Bs * Ds, 1)
    rb_rows = jnp.tile(params["revin_b"], (Bs,)).reshape(Bs * Ds, 1)
    inv_rw_rows = 1.0 / (rw_rows + REVIN_EPS * REVIN_EPS)

    # PE + wpe + embedding biases, pre-tiled to the (R, DM) row layout.
    pe_bias = (sinusoidal_pe(PN, DM) + params["wpe"][:PN]
               + params["b_val"][None, :] + params["b_mark"][None, :])
    pe_bias_r = jnp.repeat(pe_bias, BD, axis=0)                   # (R, DM)

    # Stacked value+mark embedding weight.
    wvm = jnp.concatenate([params["W_val"], params["W_mark"]], axis=0)

    # Additive causal + block-diagonal (same (b,d) row) mask, tiled per head.
    ri = jnp.arange(R)[:, None]
    ci = jnp.arange(R)[None, :]
    allowed = (ri % BD == ci % BD) & (ci // BD <= ri // BD)
    base_mask = jnp.where(allowed, 0.0, -1e30).astype(jnp.float32)   # (R, R)
    add_mask = jnp.tile(base_mask, (1, NH))                          # (R, HR)

    # Block-diagonal head selector for sublane-stacked K/V.
    hm = (jnp.arange(HR)[:, None] // R
          == jnp.arange(DM)[None, :] // HD).astype(jnp.float32)      # (HR, DM)
    # Block-diagonal ones for segmented (per-head) softmax sums.
    seg = (jnp.arange(HR)[:, None] // R
           == jnp.arange(HR)[None, :] // R).astype(jnp.float32)      # (HR, HR)

    # ---- stack per-layer weights (leading layer dim); fold Q scale in -------
    def stk(name, rs=None):
        arrs = [lp[name] for lp in params["layers"]]
        if rs is not None:
            arrs = [a.reshape(rs) for a in arrs]
        return jnp.stack(arrs)

    wqkv = stk("attn_w")                                   # (L, DM, 3DM)
    wqkv = wqkv.at[:, :, :DM].multiply(scale)
    bqkv = stk("attn_b", (1, 3 * DM))
    bqkv = bqkv.at[:, :, :DM].multiply(scale)

    operands = (
        x_bdw, vpatch_r, mpatch_r, rw_rows, rb_rows, inv_rw_rows,
        wvm, pe_bias_r, add_mask, hm, seg,
        stk("ln1_g", (1, DM)), stk("ln1_b", (1, DM)),
        wqkv, bqkv,
        stk("attn_proj_w"), stk("attn_proj_b", (1, DM)),
        stk("ln2_g", (1, DM)), stk("ln2_b", (1, DM)),
        stk("fc_w"), stk("fc_b", (1, DFF)),
        stk("mlp_proj_w"), stk("mlp_proj_b", (1, DM)),
        params["lnf_g"].reshape(1, DM), params["lnf_b"].reshape(1, DM),
        params["W_out"], params["b_out"].reshape(1, PRED),
    )

    vspec = pl.BlockSpec(memory_space=VMEM)
    patch_flat, dec_flat = pl.pallas_call(
        _llm4ts_fused_kernel,
        out_shape=(jax.ShapeDtypeStruct((R, PS), jnp.float32),
                   jax.ShapeDtypeStruct((Bs * Ds, PRED), jnp.float32)),
        in_specs=[vspec] * len(operands),
        out_specs=(vspec, vspec),
    )(*operands)

    patch_x = patch_flat.reshape(PN, Bs, Ds, PS).transpose(1, 2, 0, 3)  # (B,D,PN,PS)
    dec_out = dec_flat.reshape(Bs, Ds, PRED).transpose(0, 2, 1)         # (B,pred,D)
    return patch_x, dec_out


# ---------------------------------- main -----------------------------------
if __name__ == "__main__":
    key = jax.random.PRNGKey(0)
    k_param, k_x, k_mark = jax.random.split(key, 3)

    params = init_params(k_param)
    x_enc = jax.random.normal(k_x, (B, W, D), jnp.float32)
    x_mark_enc = jax.random.normal(k_mark, (B, W, NM), jnp.float32)
    # x_dec / x_mark_dec are unused by the forecast path; mask=None.

    fwd = jax.jit(functools.partial(llm4ts_forward, params))
    patch_x, dec_out = fwd(x_enc, x_mark_enc)
    jax.block_until_ready((patch_x, dec_out))

    assert patch_x.shape == (B, D, PN, PS), patch_x.shape
    assert dec_out.shape == (B, PRED, D), dec_out.shape
    assert jnp.all(jnp.isfinite(patch_x)) and jnp.all(jnp.isfinite(dec_out))
    print("KERNEL_OK")
</pallas_src>

<mosaic_0001>
module attributes {stable_mosaic.version = 11 : i64} {
  func.func @_llm4ts_fused_kernel(%arg0: memref<8x16xf32, #tpu.memory_space<vmem>>, %arg1: memref<32x6xf32, #tpu.memory_space<vmem>>, %arg2: memref<32x24xf32, #tpu.memory_space<vmem>>, %arg3: memref<8x1xf32, #tpu.memory_space<vmem>>, %arg4: memref<8x1xf32, #tpu.memory_space<vmem>>, %arg5: memref<8x1xf32, #tpu.memory_space<vmem>>, %arg6: memref<30x32xf32, #tpu.memory_space<vmem>>, %arg7: memref<32x32xf32, #tpu.memory_space<vmem>>, %arg8: memref<32x128xf32, #tpu.memory_space<vmem>>, %arg9: memref<128x32xf32, #tpu.memory_space<vmem>>, %arg10: memref<128x128xf32, #tpu.memory_space<vmem>>, %arg11: memref<2x1x32xf32, #tpu.memory_space<vmem>>, %arg12: memref<2x1x32xf32, #tpu.memory_space<vmem>>, %arg13: memref<2x32x96xf32, #tpu.memory_space<vmem>>, %arg14: memref<2x1x96xf32, #tpu.memory_space<vmem>>, %arg15: memref<2x32x32xf32, #tpu.memory_space<vmem>>, %arg16: memref<2x1x32xf32, #tpu.memory_space<vmem>>, %arg17: memref<2x1x32xf32, #tpu.memory_space<vmem>>, %arg18: memref<2x1x32xf32, #tpu.memory_space<vmem>>, %arg19: memref<2x32x64xf32, #tpu.memory_space<vmem>>, %arg20: memref<2x1x64xf32, #tpu.memory_space<vmem>>, %arg21: memref<2x64x32xf32, #tpu.memory_space<vmem>>, %arg22: memref<2x1x32xf32, #tpu.memory_space<vmem>>, %arg23: memref<1x32xf32, #tpu.memory_space<vmem>>, %arg24: memref<1x32xf32, #tpu.memory_space<vmem>>, %arg25: memref<128x8xf32, #tpu.memory_space<vmem>>, %arg26: memref<1x8xf32, #tpu.memory_space<vmem>>, %arg27: memref<32x6xf32, #tpu.memory_space<vmem>>, %arg28: memref<8x8xf32, #tpu.memory_space<vmem>>) attributes {dimension_semantics = [], scalar_prefetch = 0 : i64, scratch_operands = 0 : i64, tpu.core_type = #tpu.core_type<tc>} {
    %c0 = arith.constant 0 : index
    %c0_0 = arith.constant 0 : index
    %0 = vector.load %arg0[%c0, %c0_0] : memref<8x16xf32, #tpu.memory_space<vmem>>, vector<8x16xf32>
    %cst = arith.constant dense<0.000000e+00> : vector<8xf32>
    %1 = vector.multi_reduction <add>, %0, %cst [1] : vector<8x16xf32> to vector<8xf32>
    %2 = vector.shape_cast %1 : vector<8xf32> to vector<8x1xf32>
    %cst_1 = arith.constant 1.600000e+01 : f32
    %3 = vector.broadcast %cst_1 : f32 to vector<8x1xf32>
    %4 = arith.divf %2, %3 : vector<8x1xf32>
    %5 = vector.broadcast %4 : vector<8x1xf32> to vector<8x16xf32>
    %6 = arith.subf %0, %5 : vector<8x16xf32>
    %7 = arith.mulf %6, %6 : vector<8x16xf32>
    %cst_2 = arith.constant dense<0.000000e+00> : vector<8xf32>
    %8 = vector.multi_reduction <add>, %7, %cst_2 [1] : vector<8x16xf32> to vector<8xf32>
    %9 = vector.shape_cast %8 : vector<8xf32> to vector<8x1xf32>
    %cst_3 = arith.constant 1.600000e+01 : f32
    %10 = vector.broadcast %cst_3 : f32 to vector<8x1xf32>
    %11 = arith.divf %9, %10 : vector<8x1xf32>
    %cst_4 = arith.constant 9.99999974E-6 : f32
    %12 = vector.broadcast %cst_4 : f32 to vector<8x1xf32>
    %13 = arith.addf %11, %12 : vector<8x1xf32>
    %14 = math.sqrt %13 : vector<8x1xf32>
    %cst_5 = arith.constant 9.99999974E-6 : f32
    %15 = vector.broadcast %cst_5 : f32 to vector<8x1xf32>
    %16 = arith.addf %11, %15 : vector<8x1xf32>
    %17 = math.rsqrt %16 : vector<8x1xf32>
    %c0_6 = arith.constant 0 : index
    %c0_7 = arith.constant 0 : index
    %18 = vector.load %arg3[%c0_6, %c0_7] : memref<8x1xf32, #tpu.memory_space<vmem>>, vector<8x1xf32>
    %c0_8 = arith.constant 0 : index
    %c0_9 = arith.constant 0 : index
    %19 = vector.load %arg4[%c0_8, %c0_9] : memref<8x1xf32, #tpu.memory_space<vmem>>, vector<8x1xf32>
    %20 = tpu.concatenate %4, %4, %4, %4 in 0 : vector<8x1xf32>, vector<8x1xf32>, vector<8x1xf32>, vector<8x1xf32> -> vector<32x1xf32>
    %21 = tpu.concatenate %17, %17, %17, %17 in 0 : vector<8x1xf32>, vector<8x1xf32>, vector<8x1xf32>, vector<8x1xf32> -> vector<32x1xf32>
    %22 = tpu.concatenate %18, %18, %18, %18 in 0 : vector<8x1xf32>, vector<8x1xf32>, vector<8x1xf32>, vector<8x1xf32> -> vector<32x1xf32>
    %23 = tpu.concatenate %19, %19, %19, %19 in 0 : vector<8x1xf32>, vector<8x1xf32>, vector<8x1xf32>, vector<8x1xf32> -> vector<32x1xf32>
    %c0_10 = arith.constant 0 : index
    %c0_11 = arith.constant 0 : index
    %24 = vector.load %arg1[%c0_10, %c0_11] : memref<32x6xf32, #tpu.memory_space<vmem>>, vector<32x6xf32>
    %25 = vector.broadcast %20 : vector<32x1xf32> to vector<32x6xf32>
    %26 = arith.subf %24, %25 : vector<32x6xf32>
    %27 = vector.broadcast %21 : vector<32x1xf32> to vector<32x6xf32>
    %28 = arith.mulf %26, %27 : vector<32x6xf32>
    %29 = vector.broadcast %22 : vector<32x1xf32> to vector<32x6xf32>
    %30 = arith.mulf %28, %29 : vector<32x6xf32>
    %31 = vector.broadcast %23 : vector<32x1xf32> to vector<32x6xf32>
    %32 = arith.addf %30, %31 : vector<32x6xf32>
    %c0_12 = arith.constant 0 : index
    %c0_13 = arith.constant 0 : index
    %33 = vector.load %arg27[%c0_12, %c0_13] : memref<32x6xf32, #tpu.memory_space<vmem>>, vector<32x6xf32>
    tpu.vector_store %arg27[%c0_12, %c0_13], %32 {strides = array<i32>} : memref<32x6xf32, #tpu.memory_space<vmem>>, vector<32x6xf32>,
    %c0_14 = arith.constant 0 : index
    %c0_15 = arith.constant 0 : index
    %34 = vector.load %arg2[%c0_14, %c0_15] : memref<32x24xf32, #tpu.memory_space<vmem>>, vector<32x24xf32>
    %35 = tpu.concatenate %32, %34 in 1 : vector<32x6xf32>, vector<32x24xf32> -> vector<32x30xf32>
    %c0_16 = arith.constant 0 : index
    %c0_17 = arith.constant 0 : index
    %36 = vector.load %arg6[%c0_16, %c0_17] : memref<30x32xf32, #tpu.memory_space<vmem>>, vector<30x32xf32>
    %cst_18 = arith.constant dense<0.000000e+00> : vector<32x32xf32>
    %37 = tpu.matmul %35, %36, %cst_18 {dimension_numbers = #tpu.dot_dimension_numbers<[1], [0], [0], [1], [0, 0, 1, 1], [], []>} : vector<32x30xf32>, vector<30x32xf32>, vector<32x32xf32> -> vector<32x32xf32>
    %c0_19 = arith.constant 0 : index
    %c0_20 = arith.constant 0 : index
    %38 = vector.load %arg7[%c0_19, %c0_20] : memref<32x32xf32, #tpu.memory_space<vmem>>, vector<32x32xf32>
    %39 = arith.addf %37, %38 : vector<32x32xf32>
    %c0_21 = arith.constant 0 : index
    %c0_22 = arith.constant 0 : index
    %40 = vector.load %arg8[%c0_21, %c0_22] : memref<32x128xf32, #tpu.memory_space<vmem>>, vector<32x128xf32>
    %c0_23 = arith.constant 0 : index
    %c0_24 = arith.constant 0 : index
    %41 = vector.load %arg9[%c0_23, %c0_24] : memref<128x32xf32, #tpu.memory_space<vmem>>, vector<128x32xf32>
    %c0_25 = arith.constant 0 : index
    %c0_26 = arith.constant 0 : index
    %42 = vector.load %arg10[%c0_25, %c0_26] : memref<128x128xf32, #tpu.memory_space<vmem>>, vector<128x128xf32>
    %c0_27 = arith.constant 0 : index
    %c0_28 = arith.constant 0 : index
    %c0_29 = arith.constant 0 : index
    %43 = vector.load %arg11[%c0_27, %c0_28, %c0_29] : memref<2x1x32xf32, #tpu.memory_space<vmem>>, vector<1x1x32xf32>
    %44 = vector.shape_cast %43 : vector<1x1x32xf32> to vector<1x32xf32>
    %c0_30 = arith.constant 0 : index
    %c0_31 = arith.constant 0 : index
    %c0_32 = arith.constant 0 : index
    %45 = vector.load %arg12[%c0_30, %c0_31, %c0_32] : memref<2x1x32xf32, #tpu.memory_space<vmem>>, vector<1x1x32xf32>
    %46 = vector.shape_cast %45 : vector<1x1x32xf32> to vector<1x32xf32>
    %cst_33 = arith.constant dense<0.000000e+00> : vector<32xf32>
    %47 = vector.multi_reduction <add>, %39, %cst_33 [1] : vector<32x32xf32> to vector<32xf32>
    %48 = vector.shape_cast %47 : vector<32xf32> to vector<32x1xf32>
    %cst_34 = arith.constant 3.200000e+01 : f32
    %49 = vector.broadcast %cst_34 : f32 to vector<32x1xf32>
    %50 = arith.divf %48, %49 : vector<32x1xf32>
    %51 = vector.broadcast %50 : vector<32x1xf32> to vector<32x32xf32>
    %52 = arith.subf %39, %51 : vector<32x32xf32>
    %53 = arith.mulf %52, %52 : vector<32x32xf32>
    %cst_35 = arith.constant dense<0.000000e+00> : vector<32xf32>
    %54 = vector.multi_reduction <add>, %53, %cst_35 [1] : vector<32x32xf32> to vector<32xf32>
    %55 = vector.shape_cast %54 : vector<32xf32> to vector<32x1xf32>
    %cst_36 = arith.constant 3.200000e+01 : f32
    %56 = vector.broadcast %cst_36 : f32 to vector<32x1xf32>
    %57 = arith.divf %55, %56 : vector<32x1xf32>
    %58 = vector.broadcast %50 : vector<32x1xf32> to vector<32x32xf32>
    %59 = arith.subf %39, %58 : vector<32x32xf32>
    %cst_37 = arith.constant 9.99999974E-6 : f32
    %60 = vector.broadcast %cst_37 : f32 to vector<32x1xf32>
    %61 = arith.addf %57, %60 : vector<32x1xf32>
    %62 = math.rsqrt %61 : vector<32x1xf32>
    %63 = vector.broadcast %62 : vector<32x1xf32> to vector<32x32xf32>
    %64 = arith.mulf %59, %63 : vector<32x32xf32>
    %65 = vector.broadcast %44 : vector<1x32xf32> to vector<32x32xf32>
    %66 = arith.mulf %64, %65 : vector<32x32xf32>
    %67 = vector.broadcast %46 : vector<1x32xf32> to vector<32x32xf32>
    %68 = arith.addf %66, %67 : vector<32x32xf32>
    %c0_38 = arith.constant 0 : index
    %c0_39 = arith.constant 0 : index
    %c0_40 = arith.constant 0 : index
    %69 = vector.load %arg13[%c0_38, %c0_39, %c0_40] : memref<2x32x96xf32, #tpu.memory_space<vmem>>, vector<1x32x96xf32>
    %70 = vector.shape_cast %69 : vector<1x32x96xf32> to vector<32x96xf32>
    %cst_41 = arith.constant dense<0.000000e+00> : vector<32x96xf32>
    %71 = tpu.matmul %68, %70, %cst_41 {dimension_numbers = #tpu.dot_dimension_numbers<[1], [0], [0], [1], [0, 0, 1, 1], [], []>} : vector<32x32xf32>, vector<32x96xf32>, vector<32x96xf32> -> vector<32x96xf32>
    %c0_42 = arith.constant 0 : index
    %c0_43 = arith.constant 0 : index
    %c0_44 = arith.constant 0 : index
    %72 = vector.load %arg14[%c0_42, %c0_43, %c0_44] : memref<2x1x96xf32, #tpu.memory_space<vmem>>, vector<1x1x96xf32>
    %73 = vector.shape_cast %72 : vector<1x1x96xf32> to vector<1x96xf32>
    %74 = vector.broadcast %73 : vector<1x96xf32> to vector<32x96xf32>
    %75 = arith.addf %71, %74 : vector<32x96xf32>
    %76 = vector.extract_strided_slice %75 {offsets = [0, 0], sizes = [32, 32], strides = [1, 1]} : vector<32x96xf32> to vector<32x32xf32>
    %77 = vector.extract_strided_slice %75 {offsets = [0, 32], sizes = [32, 32], strides = [1, 1]} : vector<32x96xf32> to vector<32x32xf32>
    %78 = vector.extract_strided_slice %75 {offsets = [0, 64], sizes = [32, 32], strides = [1, 1]} : vector<32x96xf32> to vector<32x32xf32>
    %79 = tpu.concatenate %77, %77, %77, %77 in 0 : vector<32x32xf32>, vector<32x32xf32>, vector<32x32xf32>, vector<32x32xf32> -> vector<128x32xf32>
    %80 = arith.mulf %79, %41 : vector<128x32xf32>
    %81 = tpu.concatenate %78, %78, %78, %78 in 0 : vector<32x32xf32>, vector<32x32xf32>, vector<32x32xf32>, vector<32x32xf32> -> vector<128x32xf32>
    %82 = arith.mulf %81, %41 : vector<128x32xf32>
    %cst_45 = arith.constant dense<0.000000e+00> : vector<32x128xf32>
    %83 = tpu.matmul %76, %80, %cst_45 {dimension_numbers = #tpu.dot_dimension_numbers<[1], [1], [0], [0], [0, 0, 1, 0], [], []>} : vector<32x32xf32>, vector<128x32xf32>, vector<32x128xf32> -> vector<32x128xf32>
    %84 = arith.addf %83, %40 : vector<32x128xf32>
    %cst_46 = arith.constant dense<0xFF800000> : vector<32xf32>
    %85 = vector.multi_reduction <maximumf>, %84, %cst_46 [1] : vector<32x128xf32> to vector<32xf32>
    %86 = vector.shape_cast %85 : vector<32xf32> to vector<32x1xf32>
    %87 = vector.broadcast %86 : vector<32x1xf32> to vector<32x128xf32>
    %88 = arith.subf %84, %87 : vector<32x128xf32>
    %89 = math.exp %88 : vector<32x128xf32>
    %cst_47 = arith.constant dense<0.000000e+00> : vector<32x128xf32>
    %90 = tpu.matmul %89, %42, %cst_47 {dimension_numbers = #tpu.dot_dimension_numbers<[1], [0], [0], [1], [0, 0, 1, 1], [], []>} : vector<32x128xf32>, vector<128x128xf32>, vector<32x128xf32> -> vector<32x128xf32>
    %91 = arith.divf %89, %90 : vector<32x128xf32>
    %cst_48 = arith.constant dense<0.000000e+00> : vector<32x32xf32>
    %92 = tpu.matmul %91, %82, %cst_48 {dimension_numbers = #tpu.dot_dimension_numbers<[1], [0], [0], [1], [0, 0, 1, 1], [], []>} : vector<32x128xf32>, vector<128x32xf32>, vector<32x32xf32> -> vector<32x32xf32>
    %c0_49 = arith.constant 0 : index
    %c0_50 = arith.constant 0 : index
    %c0_51 = arith.constant 0 : index
    %93 = vector.load %arg15[%c0_49, %c0_50, %c0_51] : memref<2x32x32xf32, #tpu.memory_space<vmem>>, vector<1x32x32xf32>
    %94 = vector.shape_cast %93 : vector<1x32x32xf32> to vector<32x32xf32>
    %cst_52 = arith.constant dense<0.000000e+00> : vector<32x32xf32>
    %95 = tpu.matmul %92, %94, %cst_52 {dimension_numbers = #tpu.dot_dimension_numbers<[1], [0], [0], [1], [0, 0, 1, 1], [], []>} : vector<32x32xf32>, vector<32x32xf32>, vector<32x32xf32> -> vector<32x32xf32>
    %c0_53 = arith.constant 0 : index
    %c0_54 = arith.constant 0 : index
    %c0_55 = arith.constant 0 : index
    %96 = vector.load %arg16[%c0_53, %c0_54, %c0_55] : memref<2x1x32xf32, #tpu.memory_space<vmem>>, vector<1x1x32xf32>
    %97 = vector.shape_cast %96 : vector<1x1x32xf32> to vector<1x32xf32>
    %98 = vector.broadcast %97 : vector<1x32xf32> to vector<32x32xf32>
    %99 = arith.addf %95, %98 : vector<32x32xf32>
    %100 = arith.addf %39, %99 : vector<32x32xf32>
    %c0_56 = arith.constant 0 : index
    %c0_57 = arith.constant 0 : index
    %c0_58 = arith.constant 0 : index
    %101 = vector.load %arg17[%c0_56, %c0_57, %c0_58] : memref<2x1x32xf32, #tpu.memory_space<vmem>>, vector<1x1x32xf32>
    %102 = vector.shape_cast %101 : vector<1x1x32xf32> to vector<1x32xf32>
    %c0_59 = arith.constant 0 : index
    %c0_60 = arith.constant 0 : index
    %c0_61 = arith.constant 0 : index
    %103 = vector.load %arg18[%c0_59, %c0_60, %c0_61] : memref<2x1x32xf32, #tpu.memory_space<vmem>>, vector<1x1x32xf32>
    %104 = vector.shape_cast %103 : vector<1x1x32xf32> to vector<1x32xf32>
    %cst_62 = arith.constant dense<0.000000e+00> : vector<32xf32>
    %105 = vector.multi_reduction <add>, %100, %cst_62 [1] : vector<32x32xf32> to vector<32xf32>
    %106 = vector.shape_cast %105 : vector<32xf32> to vector<32x1xf32>
    %cst_63 = arith.constant 3.200000e+01 : f32
    %107 = vector.broadcast %cst_63 : f32 to vector<32x1xf32>
    %108 = arith.divf %106, %107 : vector<32x1xf32>
    %109 = vector.broadcast %108 : vector<32x1xf32> to vector<32x32xf32>
    %110 = arith.subf %100, %109 : vector<32x32xf32>
    %111 = arith.mulf %110, %110 : vector<32x32xf32>
    %cst_64 = arith.constant dense<0.000000e+00> : vector<32xf32>
    %112 = vector.multi_reduction <add>, %111, %cst_64 [1] : vector<32x32xf32> to vector<32xf32>
    %113 = vector.shape_cast %112 : vector<32xf32> to vector<32x1xf32>
    %cst_65 = arith.constant 3.200000e+01 : f32
    %114 = vector.broadcast %cst_65 : f32 to vector<32x1xf32>
    %115 = arith.divf %113, %114 : vector<32x1xf32>
    %116 = vector.broadcast %108 : vector<32x1xf32> to vector<32x32xf32>
    %117 = arith.subf %100, %116 : vector<32x32xf32>
    %cst_66 = arith.constant 9.99999974E-6 : f32
    %118 = vector.broadcast %cst_66 : f32 to vector<32x1xf32>
    %119 = arith.addf %115, %118 : vector<32x1xf32>
    %120 = math.rsqrt %119 : vector<32x1xf32>
    %121 = vector.broadcast %120 : vector<32x1xf32> to vector<32x32xf32>
    %122 = arith.mulf %117, %121 : vector<32x32xf32>
    %123 = vector.broadcast %102 : vector<1x32xf32> to vector<32x32xf32>
    %124 = arith.mulf %122, %123 : vector<32x32xf32>
    %125 = vector.broadcast %104 : vector<1x32xf32> to vector<32x32xf32>
    %126 = arith.addf %124, %125 : vector<32x32xf32>
    %c0_67 = arith.constant 0 : index
    %c0_68 = arith.constant 0 : index
    %c0_69 = arith.constant 0 : index
    %127 = vector.load %arg19[%c0_67, %c0_68, %c0_69] : memref<2x32x64xf32, #tpu.memory_space<vmem>>, vector<1x32x64xf32>
    %128 = vector.shape_cast %127 : vector<1x32x64xf32> to vector<32x64xf32>
    %cst_70 = arith.constant dense<0.000000e+00> : vector<32x64xf32>
    %129 = tpu.matmul %126, %128, %cst_70 {dimension_numbers = #tpu.dot_dimension_numbers<[1], [0], [0], [1], [0, 0, 1, 1], [], []>} : vector<32x32xf32>, vector<32x64xf32>, vector<32x64xf32> -> vector<32x64xf32>
    %c0_71 = arith.constant 0 : index
    %c0_72 = arith.constant 0 : index
    %c0_73 = arith.constant 0 : index
    %130 = vector.load %arg20[%c0_71, %c0_72, %c0_73] : memref<2x1x64xf32, #tpu.memory_space<vmem>>, vector<1x1x64xf32>
    %131 = vector.shape_cast %130 : vector<1x1x64xf32> to vector<1x64xf32>
    %132 = vector.broadcast %131 : vector<1x64xf32> to vector<32x64xf32>
    %133 = arith.addf %129, %132 : vector<32x64xf32>
    %134 = arith.mulf %133, %133 : vector<32x64xf32>
    %135 = arith.mulf %133, %134 : vector<32x64xf32>
    %cst_74 = arith.constant 4.471500e-02 : f32
    %136 = vector.broadcast %cst_74 : f32 to vector<32x64xf32>
    %137 = arith.mulf %136, %135 : vector<32x64xf32>
    %138 = arith.addf %133, %137 : vector<32x64xf32>
    %cst_75 = arith.constant 0.797884583 : f32
    %139 = vector.broadcast %cst_75 : f32 to vector<32x64xf32>
    %140 = arith.mulf %139, %138 : vector<32x64xf32>
    %141 = math.tanh %140 : vector<32x64xf32>
    %cst_76 = arith.constant 1.000000e+00 : f32
    %142 = vector.broadcast %cst_76 : f32 to vector<32x64xf32>
    %143 = arith.addf %142, %141 : vector<32x64xf32>
    %cst_77 = arith.constant 5.000000e-01 : f32
    %144 = vector.broadcast %cst_77 : f32 to vector<32x64xf32>
    %145 = arith.mulf %144, %143 : vector<32x64xf32>
    %146 = arith.mulf %133, %145 : vector<32x64xf32>
    %c0_78 = arith.constant 0 : index
    %c0_79 = arith.constant 0 : index
    %c0_80 = arith.constant 0 : index
    %147 = vector.load %arg21[%c0_78, %c0_79, %c0_80] : memref<2x64x32xf32, #tpu.memory_space<vmem>>, vector<1x64x32xf32>
    %148 = vector.shape_cast %147 : vector<1x64x32xf32> to vector<64x32xf32>
    %cst_81 = arith.constant dense<0.000000e+00> : vector<32x32xf32>
    %149 = tpu.matmul %146, %148, %cst_81 {dimension_numbers = #tpu.dot_dimension_numbers<[1], [0], [0], [1], [0, 0, 1, 1], [], []>} : vector<32x64xf32>, vector<64x32xf32>, vector<32x32xf32> -> vector<32x32xf32>
    %c0_82 = arith.constant 0 : index
    %c0_83 = arith.constant 0 : index
    %c0_84 = arith.constant 0 : index
    %150 = vector.load %arg22[%c0_82, %c0_83, %c0_84] : memref<2x1x32xf32, #tpu.memory_space<vmem>>, vector<1x1x32xf32>
    %151 = vector.shape_cast %150 : vector<1x1x32xf32> to vector<1x32xf32>
    %152 = vector.broadcast %151 : vector<1x32xf32> to vector<32x32xf32>
    %153 = arith.addf %149, %152 : vector<32x32xf32>
    %154 = arith.addf %100, %153 : vector<32x32xf32>
    %c1 = arith.constant 1 : index
    %c0_85 = arith.constant 0 : index
    %c0_86 = arith.constant 0 : index
    %155 = vector.load %arg11[%c1, %c0_85, %c0_86] : memref<2x1x32xf32, #tpu.memory_space<vmem>>, vector<1x1x32xf32>
    %156 = vector.shape_cast %155 : vector<1x1x32xf32> to vector<1x32xf32>
    %c1_87 = arith.constant 1 : index
    %c0_88 = arith.constant 0 : index
    %c0_89 = arith.constant 0 : index
    %157 = vector.load %arg12[%c1_87, %c0_88, %c0_89] : memref<2x1x32xf32, #tpu.memory_space<vmem>>, vector<1x1x32xf32>
    %158 = vector.shape_cast %157 : vector<1x1x32xf32> to vector<1x32xf32>
    %cst_90 = arith.constant dense<0.000000e+00> : vector<32xf32>
    %159 = vector.multi_reduction <add>, %154, %cst_90 [1] : vector<32x32xf32> to vector<32xf32>
    %160 = vector.shape_cast %159 : vector<32xf32> to vector<32x1xf32>
    %cst_91 = arith.constant 3.200000e+01 : f32
    %161 = vector.broadcast %cst_91 : f32 to vector<32x1xf32>
    %162 = arith.divf %160, %161 : vector<32x1xf32>
    %163 = vector.broadcast %162 : vector<32x1xf32> to vector<32x32xf32>
    %164 = arith.subf %154, %163 : vector<32x32xf32>
    %165 = arith.mulf %164, %164 : vector<32x32xf32>
    %cst_92 = arith.constant dense<0.000000e+00> : vector<32xf32>
    %166 = vector.multi_reduction <add>, %165, %cst_92 [1] : vector<32x32xf32> to vector<32xf32>
    %167 = vector.shape_cast %166 : vector<32xf32> to vector<32x1xf32>
    %cst_93 = arith.constant 3.200000e+01 : f32
    %168 = vector.broadcast %cst_93 : f32 to vector<32x1xf32>
    %169 = arith.divf %167, %168 : vector<32x1xf32>
    %170 = vector.broadcast %162 : vector<32x1xf32> to vector<32x32xf32>
    %171 = arith.subf %154, %170 : vector<32x32xf32>
    %cst_94 = arith.constant 9.99999974E-6 : f32
    %172 = vector.broadcast %cst_94 : f32 to vector<32x1xf32>
    %173 = arith.addf %169, %172 : vector<32x1xf32>
    %174 = math.rsqrt %173 : vector<32x1xf32>
    %175 = vector.broadcast %174 : vector<32x1xf32> to vector<32x32xf32>
    %176 = arith.mulf %171, %175 : vector<32x32xf32>
    %177 = vector.broadcast %156 : vector<1x32xf32> to vector<32x32xf32>
    %178 = arith.mulf %176, %177 : vector<32x32xf32>
    %179 = vector.broadcast %158 : vector<1x32xf32> to vector<32x32xf32>
    %180 = arith.addf %178, %179 : vector<32x32xf32>
    %c1_95 = arith.constant 1 : index
    %c0_96 = arith.constant 0 : index
    %c0_97 = arith.constant 0 : index
    %181 = vector.load %arg13[%c1_95, %c0_96, %c0_97] : memref<2x32x96xf32, #tpu.memory_space<vmem>>, vector<1x32x96xf32>
    %182 = vector.shape_cast %181 : vector<1x32x96xf32> to vector<32x96xf32>
    %cst_98 = arith.constant dense<0.000000e+00> : vector<32x96xf32>
    %183 = tpu.matmul %180, %182, %cst_98 {dimension_numbers = #tpu.dot_dimension_numbers<[1], [0], [0], [1], [0, 0, 1, 1], [], []>} : vector<32x32xf32>, vector<32x96xf32>, vector<32x96xf32> -> vector<32x96xf32>
    %c1_99 = arith.constant 1 : index
    %c0_100 = arith.constant 0 : index
    %c0_101 = arith.constant 0 : index
    %184 = vector.load %arg14[%c1_99, %c0_100, %c0_101] : memref<2x1x96xf32, #tpu.memory_space<vmem>>, vector<1x1x96xf32>
    %185 = vector.shape_cast %184 : vector<1x1x96xf32> to vector<1x96xf32>
    %186 = vector.broadcast %185 : vector<1x96xf32> to vector<32x96xf32>
    %187 = arith.addf %183, %186 : vector<32x96xf32>
    %188 = vector.extract_strided_slice %187 {offsets = [0, 0], sizes = [32, 32], strides = [1, 1]} : vector<32x96xf32> to vector<32x32xf32>
    %189 = vector.extract_strided_slice %187 {offsets = [0, 32], sizes = [32, 32], strides = [1, 1]} : vector<32x96xf32> to vector<32x32xf32>
    %190 = vector.extract_strided_slice %187 {offsets = [0, 64], sizes = [32, 32], strides = [1, 1]} : vector<32x96xf32> to vector<32x32xf32>
    %191 = tpu.concatenate %189, %189, %189, %189 in 0 : vector<32x32xf32>, vector<32x32xf32>, vector<32x32xf32>, vector<32x32xf32> -> vector<128x32xf32>
    %192 = arith.mulf %191, %41 : vector<128x32xf32>
    %193 = tpu.concatenate %190, %190, %190, %190 in 0 : vector<32x32xf32>, vector<32x32xf32>, vector<32x32xf32>, vector<32x32xf32> -> vector<128x32xf32>
    %194 = arith.mulf %193, %41 : vector<128x32xf32>
    %cst_102 = arith.constant dense<0.000000e+00> : vector<32x128xf32>
    %195 = tpu.matmul %188, %192, %cst_102 {dimension_numbers = #tpu.dot_dimension_numbers<[1], [1], [0], [0], [0, 0, 1, 0], [], []>} : vector<32x32xf32>, vector<128x32xf32>, vector<32x128xf32> -> vector<32x128xf32>
    %196 = arith.addf %195, %40 : vector<32x128xf32>
    %cst_103 = arith.constant dense<0xFF800000> : vector<32xf32>
    %197 = vector.multi_reduction <maximumf>, %196, %cst_103 [1] : vector<32x128xf32> to vector<32xf32>
    %198 = vector.shape_cast %197 : vector<32xf32> to vector<32x1xf32>
    %199 = vector.broadcast %198 : vector<32x1xf32> to vector<32x128xf32>
    %200 = arith.subf %196, %199 : vector<32x128xf32>
    %201 = math.exp %200 : vector<32x128xf32>
    %cst_104 = arith.constant dense<0.000000e+00> : vector<32x128xf32>
    %202 = tpu.matmul %201, %42, %cst_104 {dimension_numbers = #tpu.dot_dimension_numbers<[1], [0], [0], [1], [0, 0, 1, 1], [], []>} : vector<32x128xf32>, vector<128x128xf32>, vector<32x128xf32> -> vector<32x128xf32>
    %203 = arith.divf %201, %202 : vector<32x128xf32>
    %cst_105 = arith.constant dense<0.000000e+00> : vector<32x32xf32>
    %204 = tpu.matmul %203, %194, %cst_105 {dimension_numbers = #tpu.dot_dimension_numbers<[1], [0], [0], [1], [0, 0, 1, 1], [], []>} : vector<32x128xf32>, vector<128x32xf32>, vector<32x32xf32> -> vector<32x32xf32>
    %c1_106 = arith.constant 1 : index
    %c0_107 = arith.constant 0 : index
    %c0_108 = arith.constant 0 : index
    %205 = vector.load %arg15[%c1_106, %c0_107, %c0_108] : memref<2x32x32xf32, #tpu.memory_space<vmem>>, vector<1x32x32xf32>
    %206 = vector.shape_cast %205 : vector<1x32x32xf32> to vector<32x32xf32>
    %cst_109 = arith.constant dense<0.000000e+00> : vector<32x32xf32>
    %207 = tpu.matmul %204, %206, %cst_109 {dimension_numbers = #tpu.dot_dimension_numbers<[1], [0], [0], [1], [0, 0, 1, 1], [], []>} : vector<32x32xf32>, vector<32x32xf32>, vector<32x32xf32> -> vector<32x32xf32>
    %c1_110 = arith.constant 1 : index
    %c0_111 = arith.constant 0 : index
    %c0_112 = arith.constant 0 : index
    %208 = vector.load %arg16[%c1_110, %c0_111, %c0_112] : memref<2x1x32xf32, #tpu.memory_space<vmem>>, vector<1x1x32xf32>
    %209 = vector.shape_cast %208 : vector<1x1x32xf32> to vector<1x32xf32>
    %210 = vector.broadcast %209 : vector<1x32xf32> to vector<32x32xf32>
    %211 = arith.addf %207, %210 : vector<32x32xf32>
    %212 = arith.addf %154, %211 : vector<32x32xf32>
    %c1_113 = arith.constant 1 : index
    %c0_114 = arith.constant 0 : index
    %c0_115 = arith.constant 0 : index
    %213 = vector.load %arg17[%c1_113, %c0_114, %c0_115] : memref<2x1x32xf32, #tpu.memory_space<vmem>>, vector<1x1x32xf32>
    %214 = vector.shape_cast %213 : vector<1x1x32xf32> to vector<1x32xf32>
    %c1_116 = arith.constant 1 : index
    %c0_117 = arith.constant 0 : index
    %c0_118 = arith.constant 0 : index
    %215 = vector.load %arg18[%c1_116, %c0_117, %c0_118] : memref<2x1x32xf32, #tpu.memory_space<vmem>>, vector<1x1x32xf32>
    %216 = vector.shape_cast %215 : vector<1x1x32xf32> to vector<1x32xf32>
    %cst_119 = arith.constant dense<0.000000e+00> : vector<32xf32>
    %217 = vector.multi_reduction <add>, %212, %cst_119 [1] : vector<32x32xf32> to vector<32xf32>
    %218 = vector.shape_cast %217 : vector<32xf32> to vector<32x1xf32>
    %cst_120 = arith.constant 3.200000e+01 : f32
    %219 = vector.broadcast %cst_120 : f32 to vector<32x1xf32>
    %220 = arith.divf %218, %219 : vector<32x1xf32>
    %221 = vector.broadcast %220 : vector<32x1xf32> to vector<32x32xf32>
    %222 = arith.subf %212, %221 : vector<32x32xf32>
    %223 = arith.mulf %222, %222 : vector<32x32xf32>
    %cst_121 = arith.constant dense<0.000000e+00> : vector<32xf32>
    %224 = vector.multi_reduction <add>, %223, %cst_121 [1] : vector<32x32xf32> to vector<32xf32>
    %225 = vector.shape_cast %224 : vector<32xf32> to vector<32x1xf32>
    %cst_122 = arith.constant 3.200000e+01 : f32
    %226 = vector.broadcast %cst_122 : f32 to vector<32x1xf32>
    %227 = arith.divf %225, %226 : vector<32x1xf32>
    %228 = vector.broadcast %220 : vector<32x1xf32> to vector<32x32xf32>
    %229 = arith.subf %212, %228 : vector<32x32xf32>
    %cst_123 = arith.constant 9.99999974E-6 : f32
    %230 = vector.broadcast %cst_123 : f32 to vector<32x1xf32>
    %231 = arith.addf %227, %230 : vector<32x1xf32>
    %232 = math.rsqrt %231 : vector<32x1xf32>
    %233 = vector.broadcast %232 : vector<32x1xf32> to vector<32x32xf32>
    %234 = arith.mulf %229, %233 : vector<32x32xf32>
    %235 = vector.broadcast %214 : vector<1x32xf32> to vector<32x32xf32>
    %236 = arith.mulf %234, %235 : vector<32x32xf32>
    %237 = vector.broadcast %216 : vector<1x32xf32> to vector<32x32xf32>
    %238 = arith.addf %236, %237 : vector<32x32xf32>
    %c1_124 = arith.constant 1 : index
    %c0_125 = arith.constant 0 : index
    %c0_126 = arith.constant 0 : index
    %239 = vector.load %arg19[%c1_124, %c0_125, %c0_126] : memref<2x32x64xf32, #tpu.memory_space<vmem>>, vector<1x32x64xf32>
    %240 = vector.shape_cast %239 : vector<1x32x64xf32> to vector<32x64xf32>
    %cst_127 = arith.constant dense<0.000000e+00> : vector<32x64xf32>
    %241 = tpu.matmul %238, %240, %cst_127 {dimension_numbers = #tpu.dot_dimension_numbers<[1], [0], [0], [1], [0, 0, 1, 1], [], []>} : vector<32x32xf32>, vector<32x64xf32>, vector<32x64xf32> -> vector<32x64xf32>
    %c1_128 = arith.constant 1 : index
    %c0_129 = arith.constant 0 : index
    %c0_130 = arith.constant 0 : index
    %242 = vector.load %arg20[%c1_128, %c0_129, %c0_130] : memref<2x1x64xf32, #tpu.memory_space<vmem>>, vector<1x1x64xf32>
    %243 = vector.shape_cast %242 : vector<1x1x64xf32> to vector<1x64xf32>
    %244 = vector.broadcast %243 : vector<1x64xf32> to vector<32x64xf32>
    %245 = arith.addf %241, %244 : vector<32x64xf32>
    %246 = arith.mulf %245, %245 : vector<32x64xf32>
    %247 = arith.mulf %245, %246 : vector<32x64xf32>
    %cst_131 = arith.constant 4.471500e-02 : f32
    %248 = vector.broadcast %cst_131 : f32 to vector<32x64xf32>
    %249 = arith.mulf %248, %247 : vector<32x64xf32>
    %250 = arith.addf %245, %249 : vector<32x64xf32>
    %cst_132 = arith.constant 0.797884583 : f32
    %251 = vector.broadcast %cst_132 : f32 to vector<32x64xf32>
    %252 = arith.mulf %251, %250 : vector<32x64xf32>
    %253 = math.tanh %252 : vector<32x64xf32>
    %cst_133 = arith.constant 1.000000e+00 : f32
    %254 = vector.broadcast %cst_133 : f32 to vector<32x64xf32>
    %255 = arith.addf %254, %253 : vector<32x64xf32>
    %cst_134 = arith.constant 5.000000e-01 : f32
    %256 = vector.broadcast %cst_134 : f32 to vector<32x64xf32>
    %257 = arith.mulf %256, %255 : vector<32x64xf32>
    %258 = arith.mulf %245, %257 : vector<32x64xf32>
    %c1_135 = arith.constant 1 : index
    %c0_136 = arith.constant 0 : index
    %c0_137 = arith.constant 0 : index
    %259 = vector.load %arg21[%c1_135, %c0_136, %c0_137] : memref<2x64x32xf32, #tpu.memory_space<vmem>>, vector<1x64x32xf32>
    %260 = vector.shape_cast %259 : vector<1x64x32xf32> to vector<64x32xf32>
    %cst_138 = arith.constant dense<0.000000e+00> : vector<32x32xf32>
    %261 = tpu.matmul %258, %260, %cst_138 {dimension_numbers = #tpu.dot_dimension_numbers<[1], [0], [0], [1], [0, 0, 1, 1], [], []>} : vector<32x64xf32>, vector<64x32xf32>, vector<32x32xf32> -> vector<32x32xf32>
    %c1_139 = arith.constant 1 : index
    %c0_140 = arith.constant 0 : index
    %c0_141 = arith.constant 0 : index
    %262 = vector.load %arg22[%c1_139, %c0_140, %c0_141] : memref<2x1x32xf32, #tpu.memory_space<vmem>>, vector<1x1x32xf32>
    %263 = vector.shape_cast %262 : vector<1x1x32xf32> to vector<1x32xf32>
    %264 = vector.broadcast %263 : vector<1x32xf32> to vector<32x32xf32>
    %265 = arith.addf %261, %264 : vector<32x32xf32>
    %266 = arith.addf %212, %265 : vector<32x32xf32>
    %c0_142 = arith.constant 0 : index
    %c0_143 = arith.constant 0 : index
    %267 = vector.load %arg23[%c0_142, %c0_143] : memref<1x32xf32, #tpu.memory_space<vmem>>, vector<1x32xf32>
    %c0_144 = arith.constant 0 : index
    %c0_145 = arith.constant 0 : index
    %268 = vector.load %arg24[%c0_144, %c0_145] : memref<1x32xf32, #tpu.memory_space<vmem>>, vector<1x32xf32>
    %cst_146 = arith.constant dense<0.000000e+00> : vector<32xf32>
    %269 = vector.multi_reduction <add>, %266, %cst_146 [1] : vector<32x32xf32> to vector<32xf32>
    %270 = vector.shape_cast %269 : vector<32xf32> to vector<32x1xf32>
    %cst_147 = arith.constant 3.200000e+01 : f32
    %271 = vector.broadcast %cst_147 : f32 to vector<32x1xf32>
    %272 = arith.divf %270, %271 : vector<32x1xf32>
    %273 = vector.broadcast %272 : vector<32x1xf32> to vector<32x32xf32>
    %274 = arith.subf %266, %273 : vector<32x32xf32>
    %275 = arith.mulf %274, %274 : vector<32x32xf32>
    %cst_148 = arith.constant dense<0.000000e+00> : vector<32xf32>
    %276 = vector.multi_reduction <add>, %275, %cst_148 [1] : vector<32x32xf32> to vector<32xf32>
    %277 = vector.shape_cast %276 : vector<32xf32> to vector<32x1xf32>
    %cst_149 = arith.constant 3.200000e+01 : f32
    %278 = vector.broadcast %cst_149 : f32 to vector<32x1xf32>
    %279 = arith.divf %277, %278 : vector<32x1xf32>
    %280 = vector.broadcast %272 : vector<32x1xf32> to vector<32x32xf32>
    %281 = arith.subf %266, %280 : vector<32x32xf32>
    %cst_150 = arith.constant 9.99999974E-6 : f32
    %282 = vector.broadcast %cst_150 : f32 to vector<32x1xf32>
    %283 = arith.addf %279, %282 : vector<32x1xf32>
    %284 = math.rsqrt %283 : vector<32x1xf32>
    %285 = vector.broadcast %284 : vector<32x1xf32> to vector<32x32xf32>
    %286 = arith.mulf %281, %285 : vector<32x32xf32>
    %287 = vector.broadcast %267 : vector<1x32xf32> to vector<32x32xf32>
    %288 = arith.mulf %286, %287 : vector<32x32xf32>
    %289 = vector.broadcast %268 : vector<1x32xf32> to vector<32x32xf32>
    %290 = arith.addf %288, %289 : vector<32x32xf32>
    %291 = vector.extract_strided_slice %290 {offsets = [0, 0], sizes = [8, 32], strides = [1, 1]} : vector<32x32xf32> to vector<8x32xf32>
    %292 = vector.extract_strided_slice %290 {offsets = [8, 0], sizes = [8, 32], strides = [1, 1]} : vector<32x32xf32> to vector<8x32xf32>
    %293 = vector.extract_strided_slice %290 {offsets = [16, 0], sizes = [8, 32], strides = [1, 1]} : vector<32x32xf32> to vector<8x32xf32>
    %294 = vector.extract_strided_slice %290 {offsets = [24, 0], sizes = [8, 32], strides = [1, 1]} : vector<32x32xf32> to vector<8x32xf32>
    %295 = tpu.concatenate %291, %292, %293, %294 in 1 : vector<8x32xf32>, vector<8x32xf32>, vector<8x32xf32>, vector<8x32xf32> -> vector<8x128xf32>
    %c0_151 = arith.constant 0 : index
    %c0_152 = arith.constant 0 : index
    %296 = vector.load %arg25[%c0_151, %c0_152] : memref<128x8xf32, #tpu.memory_space<vmem>>, vector<128x8xf32>
    %cst_153 = arith.constant dense<0.000000e+00> : vector<8x8xf32>
    %297 = tpu.matmul %295, %296, %cst_153 {dimension_numbers = #tpu.dot_dimension_numbers<[1], [0], [0], [1], [0, 0, 1, 1], [], []>} : vector<8x128xf32>, vector<128x8xf32>, vector<8x8xf32> -> vector<8x8xf32>
    %c0_154 = arith.constant 0 : index
    %c0_155 = arith.constant 0 : index
    %298 = vector.load %arg26[%c0_154, %c0_155] : memref<1x8xf32, #tpu.memory_space<vmem>>, vector<1x8xf32>
    %299 = vector.broadcast %298 : vector<1x8xf32> to vector<8x8xf32>
    %300 = arith.addf %297, %299 : vector<8x8xf32>
    %301 = vector.broadcast %19 : vector<8x1xf32> to vector<8x8xf32>
    %302 = arith.subf %300, %301 : vector<8x8xf32>
    %c0_156 = arith.constant 0 : index
    %c0_157 = arith.constant 0 : index
    %303 = vector.load %arg5[%c0_156, %c0_157] : memref<8x1xf32, #tpu.memory_space<vmem>>, vector<8x1xf32>
    %304 = vector.broadcast %303 : vector<8x1xf32> to vector<8x8xf32>
    %305 = arith.mulf %302, %304 : vector<8x8xf32>
    %306 = vector.broadcast %14 : vector<8x1xf32> to vector<8x8xf32>
    %307 = arith.mulf %305, %306 : vector<8x8xf32>
    %308 = vector.broadcast %4 : vector<8x1xf32> to vector<8x8xf32>
    %309 = arith.addf %307, %308 : vector<8x8xf32>
    %c0_158 = arith.constant 0 : index
    %c0_159 = arith.constant 0 : index
    %310 = vector.load %arg28[%c0_158, %c0_159] : memref<8x8xf32, #tpu.memory_space<vmem>>, vector<8x8xf32>
    tpu.vector_store %arg28[%c0_158, %c0_159], %309 {strides = array<i32>} : memref<8x8xf32, #tpu.memory_space<vmem>>, vector<8x8xf32>,
    return
  }
}

</mosaic_0001>

<llo_original>
// kernel: tile.9
$region0: #{tile.9}
  %s0 = inlined_call_operand.vmem [shape: f32[32,4,32], index: 0, kind: input, shape index: {}]
  %s1 = inlined_call_operand.vmem [shape: f32[32,128], index: 1, kind: output, shape index: {}]
  $region1: #{tile.9} parent=0
    #allocation0 [shape = 'u8[131072]{0}', space=vmem, size = 0x20000, scoped, tag = 'scoped mem for input reshape']
    %s3 = sshllo.u32 0, 4
    %s4 = smul.addr 4, 31
    %s5 = scalar_lea.vmem %s0, %s4
    %v6 = vld [vmem:[%s5] sm:%s3]
    %s7 = scalar_lea.vmem [#allocation0], 248
    %8 = vst [vmem:[%s7] sm:%s3] %v6
    %s9 = smul.addr 4, 30
    %s10 = scalar_lea.vmem %s0, %s9
    %v11 = vld [vmem:[%s10] sm:%s3]
    %s12 = scalar_lea.vmem [#allocation0], 240
    %13 = vst [vmem:[%s12] sm:%s3] %v11
    %s14 = smul.addr 4, 29
    %s15 = scalar_lea.vmem %s0, %s14
    %v16 = vld [vmem:[%s15] sm:%s3]
    %s17 = scalar_lea.vmem [#allocation0], 232
    %18 = vst [vmem:[%s17] sm:%s3] %v16
    %s19 = smul.addr 4, 28
    %s20 = scalar_lea.vmem %s0, %s19
    %v21 = vld [vmem:[%s20] sm:%s3]
    %s22 = scalar_lea.vmem [#allocation0], 224
    %23 = vst [vmem:[%s22] sm:%s3] %v21
    %s24 = smul.addr 4, 27
    %s25 = scalar_lea.vmem %s0, %s24
    %v26 = vld [vmem:[%s25] sm:%s3]
    %s27 = scalar_lea.vmem [#allocation0], 216
    %28 = vst [vmem:[%s27] sm:%s3] %v26
    %s29 = smul.addr 4, 26
    %s30 = scalar_lea.vmem %s0, %s29
    %v31 = vld [vmem:[%s30] sm:%s3]
    %s32 = scalar_lea.vmem [#allocation0], 208
    %33 = vst [vmem:[%s32] sm:%s3] %v31
    %s34 = smul.addr 4, 25
    %s35 = scalar_lea.vmem %s0, %s34
    %v36 = vld [vmem:[%s35] sm:%s3]
    %s37 = scalar_lea.vmem [#allocation0], 200
    %38 = vst [vmem:[%s37] sm:%s3] %v36
    %s39 = smul.addr 4, 24
    %s40 = scalar_lea.vmem %s0, %s39
    %v41 = vld [vmem:[%s40] sm:%s3]
    %s42 = scalar_lea.vmem [#allocation0], 192
    %43 = vst [vmem:[%s42] sm:%s3] %v41
    %s44 = smul.addr 4, 23
    %s45 = scalar_lea.vmem %s0, %s44
    %v46 = vld [vmem:[%s45] sm:%s3]
    %s47 = scalar_lea.vmem [#allocation0], 184
    %48 = vst [vmem:[%s47] sm:%s3] %v46
    %s49 = smul.addr 4, 22
    %s50 = scalar_lea.vmem %s0, %s49
    %v51 = vld [vmem:[%s50] sm:%s3]
    %s52 = scalar_lea.vmem [#allocation0], 176
    %53 = vst [vmem:[%s52] sm:%s3] %v51
    %s54 = smul.addr 4, 21
    %s55 = scalar_lea.vmem %s0, %s54
    %v56 = vld [vmem:[%s55] sm:%s3]
    %s57 = scalar_lea.vmem [#allocation0], 168
    %58 = vst [vmem:[%s57] sm:%s3] %v56
    %s59 = smul.addr 4, 20
    %s60 = scalar_lea.vmem %s0, %s59
    %v61 = vld [vmem:[%s60] sm:%s3]
    %s62 = scalar_lea.vmem [#allocation0], 160
    %63 = vst [vmem:[%s62] sm:%s3] %v61
    %s64 = smul.addr 4, 19
    %s65 = scalar_lea.vmem %s0, %s64
    %v66 = vld [vmem:[%s65] sm:%s3]
    %s67 = scalar_lea.vmem [#allocation0], 152
    %68 = vst [vmem:[%s67] sm:%s3] %v66
    %s69 = smul.addr 4, 18
    %s70 = scalar_lea.vmem %s0, %s69
    %v71 = vld [vmem:[%s70] sm:%s3]
    %s72 = scalar_lea.vmem [#allocation0], 144
    %73 = vst [vmem:[%s72] sm:%s3] %v71
    %s74 = smul.addr 4, 17
    %s75 = scalar_lea.vmem %s0, %s74
    %v76 = vld [vmem:[%s75] sm:%s3]
    %s77 = scalar_lea.vmem [#allocation0], 136
    %78 = vst [vmem:[%s77] sm:%s3] %v76
    %s79 = smul.addr 4, 16
    %s80 = scalar_lea.vmem %s0, %s79
    %v81 = vld [vmem:[%s80] sm:%s3]
    %s82 = scalar_lea.vmem [#allocation0], 128
    %83 = vst [vmem:[%s82] sm:%s3] %v81
    %s84 = smul.addr 4, 15
    %s85 = scalar_lea.vmem %s0, %s84
    %v86 = vld [vmem:[%s85] sm:%s3]
    %s87 = scalar_lea.vmem [#allocation0], 120
    %88 = vst [vmem:[%s87] sm:%s3] %v86
    %s89 = smul.addr 4, 14
    %s90 = scalar_lea.vmem %s0, %s89
    %v91 = vld [vmem:[%s90] sm:%s3]
    %s92 = scalar_lea.vmem [#allocation0], 112
    %93 = vst [vmem:[%s92] sm:%s3] %v91
    %s94 = smul.addr 4, 13
    %s95 = scalar_lea.vmem %s0, %s94
    %v96 = vld [vmem:[%s95] sm:%s3]
    %s97 = scalar_lea.vmem [#allocation0], 104
    %98 = vst [vmem:[%s97] sm:%s3] %v96
    %s99 = smul.addr 4, 12
    %s100 = scalar_lea.vmem %s0, %s99
    %v101 = vld [vmem:[%s100] sm:%s3]
    %s102 = scalar_lea.vmem [#allocation0], 96
    %103 = vst [vmem:[%s102] sm:%s3] %v101
    %s104 = smul.addr 4, 11
    %s105 = scalar_lea.vmem %s0, %s104
    %v106 = vld [vmem:[%s105] sm:%s3]
    %s107 = scalar_lea.vmem [#allocation0], 88
    %108 = vst [vmem:[%s107] sm:%s3] %v106
    %s109 = smul.addr 4, 10
    %s110 = scalar_lea.vmem %s0, %s109
    %v111 = vld [vmem:[%s110] sm:%s3]
    %s112 = scalar_lea.vmem [#allocation0], 80
    %113 = vst [vmem:[%s112] sm:%s3] %v111
    %s114 = smul.addr 4, 9
    %s115 = scalar_lea.vmem %s0, %s114
    %v116 = vld [vmem:[%s115] sm:%s3]
    %s117 = scalar_lea.vmem [#allocation0], 72
    %118 = vst [vmem:[%s117] sm:%s3] %v116
    %s119 = smul.addr 4, 8
    %s120 = scalar_lea.vmem %s0, %s119
    %v121 = vld [vmem:[%s120] sm:%s3]
    %s122 = scalar_lea.vmem [#allocation0], 64
    %123 = vst [vmem:[%s122] sm:%s3] %v121
    %s124 = smul.addr 4, 7
    %s125 = scalar_lea.vmem %s0, %s124
    %v126 = vld [vmem:[%s125] sm:%s3]
    %s127 = scalar_lea.vmem [#allocation0], 56
    %128 = vst [vmem:[%s127] sm:%s3] %v126
    %s129 = smul.addr 4, 6
    %s130 = scalar_lea.vmem %s0, %s129
    %v131 = vld [vmem:[%s130] sm:%s3]
    %s132 = scalar_lea.vmem [#allocation0], 48
    %133 = vst [vmem:[%s132] sm:%s3] %v131
    %s134 = smul.addr 4, 5
    %s135 = scalar_lea.vmem %s0, %s134
    %v136 = vld [vmem:[%s135] sm:%s3]
    %s137 = scalar_lea.vmem [#allocation0], 40
    %138 = vst [vmem:[%s137] sm:%s3] %v136
    %s139 = smul.addr 4, 4
    %s140 = scalar_lea.vmem %s0, %s139
    %v141 = vld [vmem:[%s140] sm:%s3]
    %s142 = scalar_lea.vmem [#allocation0], 32
    %143 = vst [vmem:[%s142] sm:%s3] %v141
    %s144 = smul.addr 4, 3
    %s145 = scalar_lea.vmem %s0, %s144
    %v146 = vld [vmem:[%s145] sm:%s3]
    %s147 = scalar_lea.vmem [#allocation0], 24
    %148 = vst [vmem:[%s147] sm:%s3] %v146
    %s149 = smul.addr 4, 2
    %s150 = scalar_lea.vmem %s0, %s149
    %v151 = vld [vmem:[%s150] sm:%s3]
    %s152 = scalar_lea.vmem [#allocation0], 16
    %153 = vst [vmem:[%s152] sm:%s3] %v151
    %s154 = scalar_lea.vmem %s0, 4
    %v155 = vld [vmem:[%s154] sm:%s3]
    %s156 = scalar_lea.vmem [#allocation0], 8
    %157 = vst [vmem:[%s156] sm:%s3] %v155
    %v158 = vld [vmem:[%s0] sm:%s3]
    %159 = vst [vmem:[#allocation0] sm:%s3] %v158
    %v160 = vld [vmem:[#allocation0] ss:$8 sm:$0xf]
    %v161 = vld [vmem:[#allocation0] ss:$8 sm:$0xf0]
    %vm162 = vcmask 1047556
    %v163 = vsel %vm162, %v161, %v160
    %vm164 = vcmask 261120
    %165 = vst.msk [vmem:[%s1] sm:$0xff] %vm164, %v163
    %s166 = scalar_lea.vmem [#allocation0], 64
    %v167 = vld [vmem:[%s166] ss:$8 sm:$0xf]
    %s168 = scalar_lea.vmem [#allocation0], 64
    %v169 = vld [vmem:[%s168] ss:$8 sm:$0xf0]
    %vm170 = vcmask 1047556
    %v171 = vsel %vm170, %v169, %v167
    %vm172 = vcmask 261120
    %s173 = scalar_lea.vmem %s1, 8
    %174 = vst.msk [vmem:[%s173] sm:$0xff] %vm172, %v171
    %s175 = scalar_lea.vmem [#allocation0], 128
    %v176 = vld [vmem:[%s175] ss:$8 sm:$0xf]
    %s177 = scalar_lea.vmem [#allocation0], 128
    %v178 = vld [vmem:[%s177] ss:$8 sm:$0xf0]
    %vm179 = vcmask 1047556
    %v180 = vsel %vm179, %v178, %v176
    %vm181 = vcmask 261120
    %s182 = scalar_lea.vmem %s1, 16
    %183 = vst.msk [vmem:[%s182] sm:$0xff] %vm181, %v180
    %s184 = scalar_lea.vmem [#allocation0], 192
    %v185 = vld [vmem:[%s184] ss:$8 sm:$0xf]
    %s186 = scalar_lea.vmem [#allocation0], 192
    %v187 = vld [vmem:[%s186] ss:$8 sm:$0xf0]
    %vm188 = vcmask 1047556
    %v189 = vsel %vm188, %v187, %v185
    %vm190 = vcmask 261120
    %s191 = scalar_lea.vmem %s1, 24
    %192 = vst.msk [vmem:[%s191] sm:$0xff] %vm190, %v189
    %s193 = scalar_lea.vmem [#allocation0], 3
    %v194 = vld [vmem:[%s193] ss:$8 sm:$0xf]
    %s195 = scalar_lea.vmem [#allocation0], 3
    %v196 = vld [vmem:[%s195] ss:$8 sm:$0xf0]
    %vm197 = vcmask 1047556
    %v198 = vsel %vm197, %v196, %v194
    %199 = vrot.lane.b32.xlu0 %v198, 96
    %v200 = vpop.permute.xlu0 %199
    %vm201 = vcmask 1048320
    %202 = vst.msk [vmem:[%s1] sm:$0xff] %vm201, %v200
    %s203 = scalar_lea.vmem [#allocation0], 67
    %v204 = vld [vmem:[%s203] ss:$8 sm:$0xf]
    %s205 = scalar_lea.vmem [#allocation0], 67
    %v206 = vld [vmem:[%s205] ss:$8 sm:$0xf0]
    %vm207 = vcmask 1047556
    %v208 = vsel %vm207, %v206, %v204
    %209 = vrot.lane.b32.xlu0 %v208, 96
    %v210 = vpop.permute.xlu0 %209
    %vm211 = vcmask 1048320
    %s212 = scalar_lea.vmem %s1, 8
    %213 = vst.msk [vmem:[%s212] sm:$0xff] %vm211, %v210
    %s214 = scalar_lea.vmem [#allocation0], 131
    %v215 = vld [vmem:[%s214] ss:$8 sm:$0xf]
    %s216 = scalar_lea.vmem [#allocation0], 131
    %v217 = vld [vmem:[%s216] ss:$8 sm:$0xf0]
    %vm218 = vcmask 1047556
    %v219 = vsel %vm218, %v217, %v215
    %220 = vrot.lane.b32.xlu0 %v219, 96
    %v221 = vpop.permute.xlu0 %220
    %vm222 = vcmask 1048320
    %s223 = scalar_lea.vmem %s1, 16
    %224 = vst.msk [vmem:[%s223] sm:$0xff] %vm222, %v221
    %s225 = scalar_lea.vmem [#allocation0], 195
    %v226 = vld [vmem:[%s225] ss:$8 sm:$0xf]
    %s227 = scalar_lea.vmem [#allocation0], 195
    %v228 = vld [vmem:[%s227] ss:$8 sm:$0xf0]
    %vm229 = vcmask 1047556
    %v230 = vsel %vm229, %v228, %v226
    %231 = vrot.lane.b32.xlu0 %v230, 96
    %v232 = vpop.permute.xlu0 %231
    %vm233 = vcmask 1048320
    %s234 = scalar_lea.vmem %s1, 24
    %235 = vst.msk [vmem:[%s234] sm:$0xff] %vm233, %v232
    %s236 = scalar_lea.vmem [#allocation0], 2
    %v237 = vld [vmem:[%s236] ss:$8 sm:$0xf]
    %s238 = scalar_lea.vmem [#allocation0], 2
    %v239 = vld [vmem:[%s238] ss:$8 sm:$0xf0]
    %vm240 = vcmask 1047556
    %v241 = vsel %vm240, %v239, %v237
    %242 = vrot.lane.b32.xlu0 %v241, 64
    %v243 = vpop.permute.xlu0 %242
    %vm244 = vcmask 785920
    %245 = vst.msk [vmem:[%s1] sm:$0xff] %vm244, %v243
    %s246 = scalar_lea.vmem [#allocation0], 66
    %v247 = vld [vmem:[%s246] ss:$8 sm:$0xf]
    %s248 = scalar_lea.vmem [#allocation0], 66
    %v249 = vld [vmem:[%s248] ss:$8 sm:$0xf0]
    %vm250 = vcmask 1047556
    %v251 = vsel %vm250, %v249, %v247
    %252 = vrot.lane.b32.xlu0 %v251, 64
    %v253 = vpop.permute.xlu0 %252
    %vm254 = vcmask 785920
    %s255 = scalar_lea.vmem %s1, 8
    %256 = vst.msk [vmem:[%s255] sm:$0xff] %vm254, %v253
    %s257 = scalar_lea.vmem [#allocation0], 130
    %v258 = vld [vmem:[%s257] ss:$8 sm:$0xf]
    %s259 = scalar_lea.vmem [#allocation0], 130
    %v260 = vld [vmem:[%s259] ss:$8 sm:$0xf0]
    %vm261 = vcmask 1047556
    %v262 = vsel %vm261, %v260, %v258
    %263 = vrot.lane.b32.xlu0 %v262, 64
    %v264 = vpop.permute.xlu0 %263
    %vm265 = vcmask 785920
    %s266 = scalar_lea.vmem %s1, 16
    %267 = vst.msk [vmem:[%s266] sm:$0xff] %vm265, %v264
    %s268 = scalar_lea.vmem [#allocation0], 194
    %v269 = vld [vmem:[%s268] ss:$8 sm:$0xf]
    %s270 = scalar_lea.vmem [#allocation0], 194
    %v271 = vld [vmem:[%s270] ss:$8 sm:$0xf0]
    %vm272 = vcmask 1047556
    %v273 = vsel %vm272, %v271, %v269
    %274 = vrot.lane.b32.xlu0 %v273, 64
    %v275 = vpop.permute.xlu0 %274
    %vm276 = vcmask 785920
    %s277 = scalar_lea.vmem %s1, 24
    %278 = vst.msk [vmem:[%s277] sm:$0xff] %vm276, %v275
    %s279 = scalar_lea.vmem [#allocation0], 1
    %v280 = vld [vmem:[%s279] ss:$8 sm:$0xf]
    %s281 = scalar_lea.vmem [#allocation0], 1
    %v282 = vld [vmem:[%s281] ss:$8 sm:$0xf0]
    %vm283 = vcmask 1047556
    %v284 = vsel %vm283, %v282, %v280
    %285 = vrot.lane.b32.xlu0 %v284, 32
    %v286 = vpop.permute.xlu0 %285
    %vm287 = vcmask 523520
    %288 = vst.msk [vmem:[%s1] sm:$0xff] %vm287, %v286
    %s289 = scalar_lea.vmem [#allocation0], 65
    %v290 = vld [vmem:[%s289] ss:$8 sm:$0xf]
    %s291 = scalar_lea.vmem [#allocation0], 65
    %v292 = vld [vmem:[%s291] ss:$8 sm:$0xf0]
    %vm293 = vcmask 1047556
    %v294 = vsel %vm293, %v292, %v290
    %295 = vrot.lane.b32.xlu0 %v294, 32
    %v296 = vpop.permute.xlu0 %295
    %vm297 = vcmask 523520
    %s298 = scalar_lea.vmem %s1, 8
    %299 = vst.msk [vmem:[%s298] sm:$0xff] %vm297, %v296
    %s300 = scalar_lea.vmem [#allocation0], 129
    %v301 = vld [vmem:[%s300] ss:$8 sm:$0xf]
    %s302 = scalar_lea.vmem [#allocation0], 129
    %v303 = vld [vmem:[%s302] ss:$8 sm:$0xf0]
    %vm304 = vcmask 1047556
    %v305 = vsel %vm304, %v303, %v301
    %306 = vrot.lane.b32.xlu0 %v305, 32
    %v307 = vpop.permute.xlu0 %306
    %vm308 = vcmask 523520
    %s309 = scalar_lea.vmem %s1, 16
    %310 = vst.msk [vmem:[%s309] sm:$0xff] %vm308, %v307
    %s311 = scalar_lea.vmem [#allocation0], 193
    %v312 = vld [vmem:[%s311] ss:$8 sm:$0xf]
    %s313 = scalar_lea.vmem [#allocation0], 193
    %v314 = vld [vmem:[%s313] ss:$8 sm:$0xf0]
    %vm315 = vcmask 1047556
    %v316 = vsel %vm315, %v314, %v312
    %317 = vrot.lane.b32.xlu0 %v316, 32
    %v318 = vpop.permute.xlu0 %317
    %vm319 = vcmask 523520
    %s320 = scalar_lea.vmem %s1, 24
    %321 = vst.msk [vmem:[%s320] sm:$0xff] %vm319, %v318

// kernel: llm4ts_forward.1
$region0: #{llm4ts_forward.1}
  #allocation0 [shape = 'u32[]', space=smem, size = 0x4, offset = 0x4, fixed_abs, tag = 'smem constant byte address 0x4 - core index']
  #allocation1 [shape = 'u32[144,128]{1,0:T(1,128)}', space=vmem, size = 0x12000, scoped, tag = 'internal scratch']
  %s0 = inlined_call_operand.vmem [shape: f32[8,16], index: 0, kind: input, shape index: {}]
  %s1 = inlined_call_operand.vmem [shape: f32[32,6], index: 1, kind: input, shape index: {}]
  %s2 = inlined_call_operand.vmem [shape: f32[32,24], index: 2, kind: input, shape index: {}]
  %s3 = inlined_call_operand.vmem [shape: f32[8,1], index: 3, kind: input, shape index: {}, may-alias: {3,5}]
  %s4 = inlined_call_operand.vmem [shape: f32[8,1], index: 4, kind: input, shape index: {}]
  %s5 = inlined_call_operand.vmem [shape: f32[8,1], index: 5, kind: input, shape index: {}, may-alias: {3,5}]
  %s6 = inlined_call_operand.vmem [shape: f32[30,32], index: 6, kind: input, shape index: {}]
  %s7 = inlined_call_operand.vmem [shape: f32[32,32], index: 7, kind: input, shape index: {}]
  %s8 = inlined_call_operand.vmem [shape: f32[32,128], index: 8, kind: input, shape index: {}]
  %s9 = inlined_call_operand.vmem [shape: f32[128,32], index: 9, kind: input, shape index: {}]
  %s10 = inlined_call_operand.vmem [shape: f32[128,128], index: 10, kind: input, shape index: {}]
  %s11 = inlined_call_operand.vmem [shape: f32[2,1,32], index: 11, kind: input, shape index: {}, may-alias: {11,17}]
  %s12 = inlined_call_operand.vmem [shape: f32[2,1,32], index: 12, kind: input, shape index: {}, may-alias: {12,16,18,22}]
  %s13 = inlined_call_operand.vmem [shape: f32[2,32,96], index: 13, kind: input, shape index: {}]
  %s14 = inlined_call_operand.vmem [shape: f32[2,1,96], index: 14, kind: input, shape index: {}]
  %s15 = inlined_call_operand.vmem [shape: f32[2,32,32], index: 15, kind: input, shape index: {}]
  %s16 = inlined_call_operand.vmem [shape: f32[2,1,32], index: 16, kind: input, shape index: {}, may-alias: {12,16,18,22}]
  %s17 = inlined_call_operand.vmem [shape: f32[2,1,32], index: 17, kind: input, shape index: {}, may-alias: {11,17}]
  %s18 = inlined_call_operand.vmem [shape: f32[2,1,32], index: 18, kind: input, shape index: {}, may-alias: {12,16,18,22}]
  %s19 = inlined_call_operand.vmem [shape: f32[2,32,64], index: 19, kind: input, shape index: {}]
  %s20 = inlined_call_operand.vmem [shape: f32[2,1,64], index: 20, kind: input, shape index: {}]
  %s21 = inlined_call_operand.vmem [shape: f32[2,64,32], index: 21, kind: input, shape index: {}]
  %s22 = inlined_call_operand.vmem [shape: f32[2,1,32], index: 22, kind: input, shape index: {}, may-alias: {12,16,18,22}]
  %s23 = inlined_call_operand.vmem [shape: f32[1,32], index: 23, kind: input, shape index: {}]
  %s24 = inlined_call_operand.vmem [shape: f32[1,32], index: 24, kind: input, shape index: {}]
  %s25 = inlined_call_operand.vmem [shape: f32[128,8], index: 25, kind: input, shape index: {}]
  %s26 = inlined_call_operand.vmem [shape: f32[1,8], index: 26, kind: input, shape index: {}]
  %s27 = inlined_call_operand.vmem [shape: f32[32,6], index: 27, kind: output, shape index: {0}]
  %s28 = inlined_call_operand.hbm [shape: f32[8,8], index: 28, kind: output, shape index: {1}]
  %29 = xla_tuple %s27, %s28
  %s30 = sld [smem:[#allocation0]]
  $region126: #{llm4ts_forward.1} parent=0
    _
  %s32 = ssub.s32 1, %s30
  %s33 = scalar_select 0, %s32, %s30
  $region1: #{llm4ts_forward.1} parent=0
    #allocation2 [shape = 'u8[4096]{0}', space=vmem, size = 0x1000, scoped, tag = 'output window, operand 1, single buffered']
    #allocation3 [shape = 's32[1]{0}', space=sflag, size = 0x4, scoped, tag = 'scoped memory for llm4ts_forward.1']
    %34 = vsyncpa [#allocation3], 0
    // Predicated region
    $region2: #{llm4ts_forward.1} parent=1 // pred_check
      _
    $region3: #{llm4ts_forward.1} parent=1 // pred_check_branch
      %36 = sbr.rel (0) target = $region5
    $region4: #{llm4ts_forward.1} parent=1 // pred_region
      _
    $region5: #{llm4ts_forward.1} parent=1 // pred_fallthru
      _
    // Predicated region
    $region6: #{llm4ts_forward.1} parent=1 // pred_check
      _
    $region7: #{llm4ts_forward.1} parent=1 // pred_check_branch
      %38 = sbr.rel (0) target = $region9
    $region8: #{llm4ts_forward.1} parent=1 // pred_region
      _
    $region9: #{llm4ts_forward.1} parent=1 // pred_fallthru
      _
    // Predicated region
    $region10: #{llm4ts_forward.1} parent=1 // pred_check
      _
    $region11: #{llm4ts_forward.1} parent=1 // pred_check_branch
      %40 = sbr.rel (0) target = $region13
    $region12: #{llm4ts_forward.1} parent=1 // pred_region
      _
    $region13: #{llm4ts_forward.1} parent=1 // pred_fallthru
      _
    // Predicated region
    $region14: #{llm4ts_forward.1} parent=1 // pred_check
      _
    $region15: #{llm4ts_forward.1} parent=1 // pred_check_branch
      %42 = sbr.rel (0) target = $region17
    $region16: #{llm4ts_forward.1} parent=1 // pred_region
      _
    $region17: #{llm4ts_forward.1} parent=1 // pred_fallthru
      _
    // Predicated region
    $region18: #{llm4ts_forward.1} parent=1 // pred_check
      _
    $region19: #{llm4ts_forward.1} parent=1 // pred_check_branch
      %44 = sbr.rel (0) target = $region21
    $region20: #{llm4ts_forward.1} parent=1 // pred_region
      _
    $region21: #{llm4ts_forward.1} parent=1 // pred_fallthru
      _
    // Predicated region
    $region22: #{llm4ts_forward.1} parent=1 // pred_check
      _
    $region23: #{llm4ts_forward.1} parent=1 // pred_check_branch
      %46 = sbr.rel (0) target = $region25
    $region24: #{llm4ts_forward.1} parent=1 // pred_region
      _
    $region25: #{llm4ts_forward.1} parent=1 // pred_fallthru
      _
    // Predicated region
    $region26: #{llm4ts_forward.1} parent=1 // pred_check
      _
    $region27: #{llm4ts_forward.1} parent=1 // pred_check_branch
      %48 = sbr.rel (0) target = $region29
    $region28: #{llm4ts_forward.1} parent=1 // pred_region
      _
    $region29: #{llm4ts_forward.1} parent=1 // pred_fallthru
      _
    // Predicated region
    $region30: #{llm4ts_forward.1} parent=1 // pred_check
      _
    $region31: #{llm4ts_forward.1} parent=1 // pred_check_branch
      %50 = sbr.rel (0) target = $region33
    $region32: #{llm4ts_forward.1} parent=1 // pred_region
      _
    $region33: #{llm4ts_forward.1} parent=1 // pred_fallthru
      _
    // Predicated region
    $region34: #{llm4ts_forward.1} parent=1 // pred_check
      _
    $region35: #{llm4ts_forward.1} parent=1 // pred_check_branch
      %52 = sbr.rel (0) target = $region37
    $region36: #{llm4ts_forward.1} parent=1 // pred_region
      _
    $region37: #{llm4ts_forward.1} parent=1 // pred_fallthru
      _
    // Predicated region
    $region38: #{llm4ts_forward.1} parent=1 // pred_check
      _
    $region39: #{llm4ts_forward.1} parent=1 // pred_check_branch
      %54 = sbr.rel (0) target = $region41
    $region40: #{llm4ts_forward.1} parent=1 // pred_region
      _
    $region41: #{llm4ts_forward.1} parent=1 // pred_fallthru
      _
    // Predicated region
    $region42: #{llm4ts_forward.1} parent=1 // pred_check
      _
    $region43: #{llm4ts_forward.1} parent=1 // pred_check_branch
      %56 = sbr.rel (0) target = $region45
    $region44: #{llm4ts_forward.1} parent=1 // pred_region
      _
    $region45: #{llm4ts_forward.1} parent=1 // pred_fallthru
      _
    // Predicated region
    $region46: #{llm4ts_forward.1} parent=1 // pred_check
      _
    $region47: #{llm4ts_forward.1} parent=1 // pred_check_branch
      %58 = sbr.rel (0) target = $region49
    $region48: #{llm4ts_forward.1} parent=1 // pred_region
      _
    $region49: #{llm4ts_forward.1} parent=1 // pred_fallthru
      _
    // Predicated region
    $region50: #{llm4ts_forward.1} parent=1 // pred_check
      _
    $region51: #{llm4ts_forward.1} parent=1 // pred_check_branch
      %60 = sbr.rel (0) target = $region53
    $region52: #{llm4ts_forward.1} parent=1 // pred_region
      _
    $region53: #{llm4ts_forward.1} parent=1 // pred_fallthru
      _
    // Predicated region
    $region54: #{llm4ts_forward.1} parent=1 // pred_check
      _
    $region55: #{llm4ts_forward.1} parent=1 // pred_check_branch
      %62 = sbr.rel (0) target = $region57
    $region56: #{llm4ts_forward.1} parent=1 // pred_region
      _
    $region57: #{llm4ts_forward.1} parent=1 // pred_fallthru
      _
    // Predicated region
    $region58: #{llm4ts_forward.1} parent=1 // pred_check
      _
    $region59: #{llm4ts_forward.1} parent=1 // pred_check_branch
      %64 = sbr.rel (0) target = $region61
    $region60: #{llm4ts_forward.1} parent=1 // pred_region
      _
    $region61: #{llm4ts_forward.1} parent=1 // pred_fallthru
      _
    // Predicated region
    $region62: #{llm4ts_forward.1} parent=1 // pred_check
      _
    $region63: #{llm4ts_forward.1} parent=1 // pred_check_branch
      %66 = sbr.rel (0) target = $region65
    $region64: #{llm4ts_forward.1} parent=1 // pred_region
      _
    $region65: #{llm4ts_forward.1} parent=1 // pred_fallthru
      _
    // Predicated region
    $region66: #{llm4ts_forward.1} parent=1 // pred_check
      _
    $region67: #{llm4ts_forward.1} parent=1 // pred_check_branch
      %68 = sbr.rel (0) target = $region69
    $region68: #{llm4ts_forward.1} parent=1 // pred_region
      _
    $region69: #{llm4ts_forward.1} parent=1 // pred_fallthru
      _
    // Predicated region
    $region70: #{llm4ts_forward.1} parent=1 // pred_check
      _
    $region71: #{llm4ts_forward.1} parent=1 // pred_check_branch
      %70 = sbr.rel (0) target = $region73
    $region72: #{llm4ts_forward.1} parent=1 // pred_region
      _
    $region73: #{llm4ts_forward.1} parent=1 // pred_fallthru
      _
    // Predicated region
    $region74: #{llm4ts_forward.1} parent=1 // pred_check
      _
    $region75: #{llm4ts_forward.1} parent=1 // pred_check_branch
      %72 = sbr.rel (0) target = $region77
    $region76: #{llm4ts_forward.1} parent=1 // pred_region
      _
    $region77: #{llm4ts_forward.1} parent=1 // pred_fallthru
      _
    // Predicated region
    $region78: #{llm4ts_forward.1} parent=1 // pred_check
      _
    $region79: #{llm4ts_forward.1} parent=1 // pred_check_branch
      %74 = sbr.rel (0) target = $region81
    $region80: #{llm4ts_forward.1} parent=1 // pred_region
      _
    $region81: #{llm4ts_forward.1} parent=1 // pred_fallthru
      _
    // Predicated region
    $region82: #{llm4ts_forward.1} parent=1 // pred_check
      _
    $region83: #{llm4ts_forward.1} parent=1 // pred_check_branch
      %76 = sbr.rel (0) target = $region85
    $region84: #{llm4ts_forward.1} parent=1 // pred_region
      _
    $region85: #{llm4ts_forward.1} parent=1 // pred_fallthru
      _
    // Predicated region
    $region86: #{llm4ts_forward.1} parent=1 // pred_check
      _
    $region87: #{llm4ts_forward.1} parent=1 // pred_check_branch
      %78 = sbr.rel (0) target = $region89
    $region88: #{llm4ts_forward.1} parent=1 // pred_region
      _
    $region89: #{llm4ts_forward.1} parent=1 // pred_fallthru
      _
    // Predicated region
    $region90: #{llm4ts_forward.1} parent=1 // pred_check
      _
    $region91: #{llm4ts_forward.1} parent=1 // pred_check_branch
      %80 = sbr.rel (0) target = $region93
    $region92: #{llm4ts_forward.1} parent=1 // pred_region
      _
    $region93: #{llm4ts_forward.1} parent=1 // pred_fallthru
      _
    // Predicated region
    $region94: #{llm4ts_forward.1} parent=1 // pred_check
      _
    $region95: #{llm4ts_forward.1} parent=1 // pred_check_branch
      %82 = sbr.rel (0) target = $region97
    $region96: #{llm4ts_forward.1} parent=1 // pred_region
      _
    $region97: #{llm4ts_forward.1} parent=1 // pred_fallthru
      _
    // Predicated region
    $region98: #{llm4ts_forward.1} parent=1 // pred_check
      _
    $region99: #{llm4ts_forward.1} parent=1 // pred_check_branch
      %84 = sbr.rel (0) target = $region101
    $region100: #{llm4ts_forward.1} parent=1 // pred_region
      _
    $region101: #{llm4ts_forward.1} parent=1 // pred_fallthru
      _
    // Predicated region
    $region102: #{llm4ts_forward.1} parent=1 // pred_check
      _
    $region103: #{llm4ts_forward.1} parent=1 // pred_check_branch
      %86 = sbr.rel (0) target = $region105
    $region104: #{llm4ts_forward.1} parent=1 // pred_region
      _
    $region105: #{llm4ts_forward.1} parent=1 // pred_fallthru
      _
    // Predicated region
    $region106: #{llm4ts_forward.1} parent=1 // pred_check
      _
    $region107: #{llm4ts_forward.1} parent=1 // pred_check_branch
      %88 = sbr.rel (0) target = $region109
    $region108: #{llm4ts_forward.1} parent=1 // pred_region
      _
    $region109: #{llm4ts_forward.1} parent=1 // pred_fallthru
      _
    %v89 = vld [vmem:[%s0] sm:$0xff]
    %vm90 = vcmask 130048
    %v91 = vsel %vm90, %v89, 0.0
    %92 = vadd.xlane.f32.xlu0 %v91
    %v93 = vpop.xlane.xlu0 %92
    %v94 = vrcp.pop 16.0
    %v95 = vmul.f32 %v93, %v94
    %v96 = vsub.f32 %v89, %v95
    %v97 = vmul.f32 %v96, %v96
    %v98 = vsel %vm90, %v97, 0.0
    %99 = vadd.xlane.f32.xlu0 %v98
    %v100 = vpop.xlane.xlu0 %99
    %v101 = vmul.f32 %v100, %v94
    %v102 = vadd.f32 %v101, 1e-05
    %v103 = vrsqrt.pop %v102
    %v104 = vmul.f32 %v102, %v103
    %vm105 = vcmp.eq.f32.partialorder %v102, inf
    %v106 = vsel %vm105, %v102, %v104
    %vm107 = vcmp.eq.f32.partialorder %v102, 0.0
    %v108 = vand.u32 %v102, 2147483648
    %v109 = vsel %vm107, %v108, %v106
    %v110 = vrsqrt.pop %v102
    %v111 = vld [vmem:[%s3] sm:$0xff]
    %v112 = vld [vmem:[%s4] sm:$0xff]
    %v113 = vld [vmem:[%s1] sm:$0xff]
    %v114 = vld [vmem:[%s1 + $0x8] sm:$0xff]
    %v115 = vld [vmem:[%s1 + $0x10] sm:$0xff]
    %v116 = vld [vmem:[%s1 + $0x18] sm:$0xff]
    %118 = vset.pattern.permute.xlu0 0
    %119 = vperm.xlu0 %118, %v95
    %v120 = vpop.permute.xlu0 %119
    %v122 = vsub.f32 %v113, %v120
    %v123 = vsub.f32 %v114, %v120
    %v124 = vsub.f32 %v115, %v120
    %v125 = vsub.f32 %v116, %v120
    %127 = vset.pattern.permute.xlu0 0
    %128 = vperm.xlu0 %127, %v110
    %v129 = vpop.permute.xlu0 %128
    %v131 = vmul.f32 %v122, %v129
    %v132 = vmul.f32 %v123, %v129
    %v133 = vmul.f32 %v124, %v129
    %v134 = vmul.f32 %v125, %v129
    %136 = vset.pattern.permute.xlu0 0
    %137 = vperm.xlu0 %136, %v111
    %v138 = vpop.permute.xlu0 %137
    %v140 = vmul.f32 %v131, %v138
    %v141 = vmul.f32 %v132, %v138
    %v142 = vmul.f32 %v133, %v138
    %v143 = vmul.f32 %v134, %v138
    %145 = vset.pattern.permute.xlu0 0
    %146 = vperm.xlu0 %145, %v112
    %v147 = vpop.permute.xlu0 %146
    %v149 = vadd.f32 %v140, %v147
    %v150 = vadd.f32 %v141, %v147
    %v151 = vadd.f32 %v142, %v147
    %v152 = vadd.f32 %v143, %v147
    %vm153 = vcmask 48128
    %154 = vst.msk [vmem:[%s27] sm:$0xff] %vm153, %v149
    %155 = vst.msk [vmem:[%s27 + $0x8] sm:$0xff] %vm153, %v150
    %156 = vst.msk [vmem:[%s27 + $0x10] sm:$0xff] %vm153, %v151
    %157 = vst.msk [vmem:[%s27 + $0x18] sm:$0xff] %vm153, %v152
    %v158 = vld [vmem:[%s2] sm:$0xff]
    %v159 = vld [vmem:[%s2 + $0x8] sm:$0xff]
    %v160 = vld [vmem:[%s2 + $0x10] sm:$0xff]
    %v161 = vld [vmem:[%s2 + $0x18] sm:$0xff]
    %166 = vrot.lane.b32.xlu0 %v158, 6
    %v167 = vpop.permute.xlu0 %166
    %168 = vrot.lane.b32.xlu0 %v159, 6
    %v169 = vpop.permute.xlu0 %168
    %170 = vrot.lane.b32.xlu0 %v160, 6
    %v171 = vpop.permute.xlu0 %170
    %172 = vrot.lane.b32.xlu0 %v161, 6
    %v173 = vpop.permute.xlu0 %172
    %v178 = vsel %vm153, %v149, %v167
    %v179 = vsel %vm153, %v150, %v169
    %v180 = vsel %vm153, %v151, %v171
    %v181 = vsel %vm153, %v152, %v173
    %v182 = vld [vmem:[%s6] sm:$0xff]
    %v183 = vld [vmem:[%s6 + $0x8] sm:$0xff]
    %v184 = vld [vmem:[%s6 + $0x10] sm:$0xff]
    %v185 = vld [vmem:[%s6 + $0x18] sm:$0x3f]
    %v186 = vld [vmem:[%s7] sm:$0xff]
    %v187 = vld [vmem:[%s7 + $0x8] sm:$0xff]
    %v188 = vld [vmem:[%s7 + $0x10] sm:$0xff]
    %v189 = vld [vmem:[%s7 + $0x18] sm:$0xff]
    %vm190 = vcmask 244736
    %v192 = vsel %vm190, %v178, 0
    %v195 = vsel %vm190, %v179, 0
    %v198 = vsel %vm190, %v180, 0
    %v201 = vsel %vm190, %v181, 0
    %vm203 = vcmask 1045504
    %v205 = vsel %vm203, %v185, 0
    %207 = vmatprep.subr.mxu0 0.0
    %208 = vmatpush1.msra.mxu0 %v182
    %209 = vmatprep.subr.mxu0 0.0
    %210 = vmatpush1.msra.mxu0 %v183
    %211 = vmatprep.subr.mxu0 0.0
    %212 = vmatpush1.msra.mxu0 %v184
    %213 = vmatprep.subr.mxu0 0.0
    %214 = vmatpush1.msra.mxu0 %v205
    %215 = vmatprep.subr.mxu0 0.0
    %216 = vmatpush1.msra.mxu0 0.0
    %217 = vmatprep.subr.mxu0 0.0
    %218 = vmatpush1.msra.mxu0 0.0
    %219 = vmatprep.subr.mxu0 0.0
    %220 = vmatpush1.msra.mxu0 0.0
    %221 = vmatprep.subr.mxu0 0.0
    %222 = vmatpush1.msra.mxu0 0.0
    %223 = vmatprep.subr.mxu0 0.0
    %224 = vmatpush1.msra.mxu0 0.0
    %225 = vmatprep.subr.mxu0 0.0
    %226 = vmatpush1.msra.mxu0 0.0
    %227 = vmatprep.subr.mxu0 0.0
    %228 = vmatpush1.msra.mxu0 0.0
    %229 = vmatprep.subr.mxu0 0.0
    %230 = vmatpush1.msra.mxu0 0.0
    %231 = vmatprep.subr.mxu0 0.0
    %232 = vmatpush1.msra.mxu0 0.0
    %233 = vmatprep.subr.mxu0 0.0
    %234 = vmatpush1.msra.mxu0 0.0
    %235 = vmatprep.subr.mxu0 0.0
    %236 = vmatpush1.msra.mxu0 0.0
    %237 = vmatprep.subr.mxu0 0.0
    %238 = vmatpush1.msra.mxu0 0.0
    %239 = vmatprep.subr.mxu0 0.0
    %240 = vmatpush1.msra.mxu0 0.0
    %241 = vmatprep.subr.mxu0 0.0
    %242 = vmatpush1.msra.mxu0 0.0
    %243 = vmatprep.subr.mxu0 0.0
    %244 = vmatpush1.msra.mxu0 0.0
    %245 = vmatprep.subr.mxu0 0.0
    %246 = vmatpush1.msra.mxu0 0.0
    %247 = vmatprep.subr.mxu0 0.0
    %248 = vmatpush1.msra.mxu0 0.0
    %249 = vmatprep.subr.mxu0 0.0
    %250 = vmatpush1.msra.mxu0 0.0
    %251 = vmatprep.subr.mxu0 0.0
    %252 = vmatpush1.msra.mxu0 0.0
    %253 = vmatprep.subr.mxu0 0.0
    %254 = vmatpush1.msra.mxu0 0.0
    %255 = vmatprep.subr.mxu0 0.0
    %256 = vmatpush1.msra.mxu0 0.0
    %257 = vmatprep.subr.mxu0 0.0
    %258 = vmatpush1.msra.mxu0 0.0
    %259 = vmatprep.subr.mxu0 0.0
    %260 = vmatpush1.msra.mxu0 0.0
    %261 = vmatprep.subr.mxu0 0.0
    %262 = vmatpush1.msra.mxu0 0.0
    %263 = vmatprep.subr.mxu0 0.0
    %264 = vmatpush1.msra.mxu0 0.0
    %265 = vmatprep.subr.mxu0 0.0
    %266 = vmatpush1.msra.mxu0 0.0
    %267 = vmatprep.subr.mxu0 0.0
    %268 = vmatpush1.msra.mxu0 0.0
    %269 = vmatprep.subr.mxu0 0.0
    %270 = vmatpush1.msra.mxu0 0.0
    %271 = vmatprep.mubr.f32.mxu0 0.0
    %272 = vmatmul.mubr.f32.gmra.mrb[0].mxu0 %v192
    %v273 = vpop.f32.mrb[0].mxu0
    %v274 = vadd.f32 %v186, %v273
    %v275 = vpop.f32.mrb[0].mxu0
    %276 = vmatprep.mubr.f32.mxu0 0.0
    %277 = vmatmul.mubr.f32.gmra.mrb[0].mxu0 %v195
    %v278 = vpop.f32.mrb[0].mxu0
    %v279 = vadd.f32 %v187, %v278
    %v280 = vpop.f32.mrb[0].mxu0
    %281 = vmatprep.mubr.f32.mxu0 0.0
    %282 = vmatmul.mubr.f32.gmra.mrb[0].mxu0 %v198
    %v283 = vpop.f32.mrb[0].mxu0
    %v284 = vadd.f32 %v188, %v283
    %v285 = vpop.f32.mrb[0].mxu0
    %286 = vmatprep.mubr.f32.mxu0 0.0
    %287 = vmatmul.mubr.f32.gmra.mrb[0].mxu0 %v201
    %v288 = vpop.f32.mrb[0].mxu0
    %v289 = vadd.f32 %v189, %v288
    %v290 = vpop.f32.mrb[0].mxu0
    %291 = vdwg.mxu0
    %v292 = vld [vmem:[%s8] sm:$0xff]
    %v293 = vld [vmem:[%s8 + $0x8] sm:$0xff]
    %v294 = vld [vmem:[%s8 + $0x10] sm:$0xff]
    %v295 = vld [vmem:[%s8 + $0x18] sm:$0xff]
    %v296 = vld [vmem:[%s9] sm:$0xff]
    %v297 = vld [vmem:[%s9 + $0x8] sm:$0xff]
    %v298 = vld [vmem:[%s9 + $0x10] sm:$0xff]
    %v299 = vld [vmem:[%s9 + $0x18] sm:$0xff]
    %v300 = vld [vmem:[%s9 + $0x20] sm:$0xff]
    %v301 = vld [vmem:[%s9 + $0x28] sm:$0xff]
    %v302 = vld [vmem:[%s9 + $0x30] sm:$0xff]
    %v303 = vld [vmem:[%s9 + $0x38] sm:$0xff]
    %v304 = vld [vmem:[%s9 + $0x40] sm:$0xff]
    %v305 = vld [vmem:[%s9 + $0x48] sm:$0xff]
    %v306 = vld [vmem:[%s9 + $0x50] sm:$0xff]
    %v307 = vld [vmem:[%s9 + $0x58] sm:$0xff]
    %v308 = vld [vmem:[%s9 + $0x60] sm:$0xff]
    %v309 = vld [vmem:[%s9 + $0x68] sm:$0xff]
    %v310 = vld [vmem:[%s9 + $0x70] sm:$0xff]
    %v311 = vld [vmem:[%s9 + $0x78] sm:$0xff]
    %v312 = vld [vmem:[%s10] sm:$0xff]
    %v313 = vld [vmem:[%s10 + $0x8] sm:$0xff]
    %v314 = vld [vmem:[%s10 + $0x10] sm:$0xff]
    %v315 = vld [vmem:[%s10 + $0x18] sm:$0xff]
    %v316 = vld [vmem:[%s10 + $0x20] sm:$0xff]
    %v317 = vld [vmem:[%s10 + $0x28] sm:$0xff]
    %v318 = vld [vmem:[%s10 + $0x30] sm:$0xff]
    %v319 = vld [vmem:[%s10 + $0x38] sm:$0xff]
    %v320 = vld [vmem:[%s10 + $0x40] sm:$0xff]
    %v321 = vld [vmem:[%s10 + $0x48] sm:$0xff]
    %v322 = vld [vmem:[%s10 + $0x50] sm:$0xff]
    %v323 = vld [vmem:[%s10 + $0x58] sm:$0xff]
    %v324 = vld [vmem:[%s10 + $0x60] sm:$0xff]
    %v325 = vld [vmem:[%s10 + $0x68] sm:$0xff]
    %v326 = vld [vmem:[%s10 + $0x70] sm:$0xff]
    %v327 = vld [vmem:[%s10 + $0x78] sm:$0xff]
    %v328 = vld [vmem:[%s11] sm:$0x1]
    %v329 = vld [vmem:[%s12] sm:$0x1]
    %vm330 = vcmask 261120
    %v331 = vsel %vm330, %v274, 0.0
    %332 = vadd.xlane.f32.xlu0 %v331
    %v333 = vpop.xlane.xlu0 %332
    %v334 = vsel %vm330, %v279, 0.0
    %335 = vadd.xlane.f32.xlu0 %v334
    %v336 = vpop.xlane.xlu0 %335
    %v337 = vsel %vm330, %v284, 0.0
    %338 = vadd.xlane.f32.xlu0 %v337
    %v339 = vpop.xlane.xlu0 %338
    %v340 = vsel %vm330, %v289, 0.0
    %341 = vadd.xlane.f32.xlu0 %v340
    %v342 = vpop.xlane.xlu0 %341
    %v343 = vrcp.pop 32.0
    %v344 = vmul.f32 %v333, %v343
    %v345 = vmul.f32 %v336, %v343
    %v346 = vmul.f32 %v339, %v343
    %v347 = vmul.f32 %v342, %v343
    %v348 = vsub.f32 %v274, %v344
    %v349 = vsub.f32 %v279, %v345
    %v350 = vsub.f32 %v284, %v346
    %v351 = vsub.f32 %v289, %v347
    %v352 = vmul.f32 %v348, %v348
    %v353 = vmul.f32 %v349, %v349
    %v354 = vmul.f32 %v350, %v350
    %v355 = vmul.f32 %v351, %v351
    %v356 = vsel %vm330, %v352, 0.0
    %357 = vadd.xlane.f32.xlu0 %v356
    %v358 = vpop.xlane.xlu0 %357
    %v359 = vsel %vm330, %v353, 0.0
    %360 = vadd.xlane.f32.xlu0 %v359
    %v361 = vpop.xlane.xlu0 %360
    %v362 = vsel %vm330, %v354, 0.0
    %363 = vadd.xlane.f32.xlu0 %v362
    %v364 = vpop.xlane.xlu0 %363
    %v365 = vsel %vm330, %v355, 0.0
    %366 = vadd.xlane.f32.xlu0 %v365
    %v367 = vpop.xlane.xlu0 %366
    %v368 = vmul.f32 %v358, %v343
    %v369 = vmul.f32 %v361, %v343
    %v370 = vmul.f32 %v364, %v343
    %v371 = vmul.f32 %v367, %v343
    %v372 = vadd.f32 %v368, 1e-05
    %v373 = vadd.f32 %v369, 1e-05
    %v374 = vadd.f32 %v370, 1e-05
    %v375 = vadd.f32 %v371, 1e-05
    %v376 = vrsqrt.pop %v372
    %v377 = vrsqrt.pop %v373
    %v378 = vrsqrt.pop %v374
    %v379 = vrsqrt.pop %v375
    %v380 = vmul.f32 %v348, %v376
    %v381 = vmul.f32 %v349, %v377
    %v382 = vmul.f32 %v350, %v378
    %v383 = vmul.f32 %v351, %v379
    %v385 = vlaneseq
    %v386 = vshrl.u32 %v385, 7
    %v387 = vsub.s32 0, %v386
    %v388 = vrot.slane %v328, %v387
    %v390 = vmul.f32 %v380, %v388
    %v391 = vmul.f32 %v381, %v388
    %v392 = vmul.f32 %v382, %v388
    %v393 = vmul.f32 %v383, %v388
    %v395 = vlaneseq
    %v396 = vshrl.u32 %v395, 7
    %v397 = vsub.s32 0, %v396
    %v398 = vrot.slane %v329, %v397
    %v400 = vadd.f32 %v390, %v398
    %v401 = vadd.f32 %v391, %v398
    %v402 = vadd.f32 %v392, %v398
    %v403 = vadd.f32 %v393, %v398
    %v404 = vld [vmem:[%s13] sm:$0xff]
    %v405 = vld [vmem:[%s13 + $0x8] sm:$0xff]
    %v406 = vld [vmem:[%s13 + $0x10] sm:$0xff]
    %v407 = vld [vmem:[%s13 + $0x18] sm:$0xff]
    %v408 = vld [vmem:[%s14] sm:$0x1]
    %v410 = vlaneseq
    %v411 = vshrl.u32 %v410, 7
    %v412 = vsub.s32 0, %v411
    %v413 = vrot.slane %v408, %v412
    %v416 = vsel %vm330, %v400, 0
    %v419 = vsel %vm330, %v401, 0
    %v422 = vsel %vm330, %v402, 0
    %v425 = vsel %vm330, %v403, 0
    %427 = vmatprep.subr.mxu0 0.0
    %428 = vmatpush1.msra.mxu0 %v404
    %429 = vmatprep.subr.mxu0 0.0
    %430 = vmatpush1.msra.mxu0 %v405
    %431 = vmatprep.subr.mxu0 0.0
    %432 = vmatpush1.msra.mxu0 %v406
    %433 = vmatprep.subr.mxu0 0.0
    %434 = vmatpush1.msra.mxu0 %v407
    %435 = vmatprep.subr.mxu0 0.0
    %436 = vmatpush1.msra.mxu0 0.0
    %437 = vmatprep.subr.mxu0 0.0
    %438 = vmatpush1.msra.mxu0 0.0
    %439 = vmatprep.subr.mxu0 0.0
    %440 = vmatpush1.msra.mxu0 0.0
    %441 = vmatprep.subr.mxu0 0.0
    %442 = vmatpush1.msra.mxu0 0.0
    %443 = vmatprep.subr.mxu0 0.0
    %444 = vmatpush1.msra.mxu0 0.0
    %445 = vmatprep.subr.mxu0 0.0
    %446 = vmatpush1.msra.mxu0 0.0
    %447 = vmatprep.subr.mxu0 0.0
    %448 = vmatpush1.msra.mxu0 0.0
    %449 = vmatprep.subr.mxu0 0.0
    %450 = vmatpush1.msra.mxu0 0.0
    %451 = vmatprep.subr.mxu0 0.0
    %452 = vmatpush1.msra.mxu0 0.0
    %453 = vmatprep.subr.mxu0 0.0
    %454 = vmatpush1.msra.mxu0 0.0
    %455 = vmatprep.subr.mxu0 0.0
    %456 = vmatpush1.msra.mxu0 0.0
    %457 = vmatprep.subr.mxu0 0.0
    %458 = vmatpush1.msra.mxu0 0.0
    %459 = vmatprep.subr.mxu0 0.0
    %460 = vmatpush1.msra.mxu0 0.0
    %461 = vmatprep.subr.mxu0 0.0
    %462 = vmatpush1.msra.mxu0 0.0
    %463 = vmatprep.subr.mxu0 0.0
    %464 = vmatpush1.msra.mxu0 0.0
    %465 = vmatprep.subr.mxu0 0.0
    %466 = vmatpush1.msra.mxu0 0.0
    %467 = vmatprep.subr.mxu0 0.0
    %468 = vmatpush1.msra.mxu0 0.0
    %469 = vmatprep.subr.mxu0 0.0
    %470 = vmatpush1.msra.mxu0 0.0
    %471 = vmatprep.subr.mxu0 0.0
    %472 = vmatpush1.msra.mxu0 0.0
    %473 = vmatprep.subr.mxu0 0.0
    %474 = vmatpush1.msra.mxu0 0.0
    %475 = vmatprep.subr.mxu0 0.0
    %476 = vmatpush1.msra.mxu0 0.0
    %477 = vmatprep.subr.mxu0 0.0
    %478 = vmatpush1.msra.mxu0 0.0
    %479 = vmatprep.subr.mxu0 0.0
    %480 = vmatpush1.msra.mxu0 0.0
    %481 = vmatprep.subr.mxu0 0.0
    %482 = vmatpush1.msra.mxu0 0.0
    %483 = vmatprep.subr.mxu0 0.0
    %484 = vmatpush1.msra.mxu0 0.0
    %485 = vmatprep.subr.mxu0 0.0
    %486 = vmatpush1.msra.mxu0 0.0
    %487 = vmatprep.subr.mxu0 0.0
    %488 = vmatpush1.msra.mxu0 0.0
    %489 = vmatprep.subr.mxu0 0.0
    %490 = vmatpush1.msra.mxu0 0.0
    %491 = vmatprep.mubr.f32.mxu0 0.0
    %492 = vmatmul.mubr.f32.gmra.mrb[0].mxu0 %v416
    %v493 = vpop.f32.mrb[0].mxu0
    %v494 = vadd.f32 %v413, %v493
    %v495 = vpop.f32.mrb[0].mxu0
    %496 = vmatprep.mubr.f32.mxu0 0.0
    %497 = vmatmul.mubr.f32.gmra.mrb[0].mxu0 %v419
    %v498 = vpop.f32.mrb[0].mxu0
    %v499 = vadd.f32 %v413, %v498
    %v500 = vpop.f32.mrb[0].mxu0
    %501 = vmatprep.mubr.f32.mxu0 0.0
    %502 = vmatmul.mubr.f32.gmra.mrb[0].mxu0 %v422
    %v503 = vpop.f32.mrb[0].mxu0
    %v504 = vadd.f32 %v413, %v503
    %v505 = vpop.f32.mrb[0].mxu0
    %506 = vmatprep.mubr.f32.mxu0 0.0
    %507 = vmatmul.mubr.f32.gmra.mrb[0].mxu0 %v425
    %v508 = vpop.f32.mrb[0].mxu0
    %v509 = vadd.f32 %v413, %v508
    %v510 = vpop.f32.mrb[0].mxu0
    %511 = vdwg.mxu0
    %528 = vrot.lane.b32.xlu0 %v296, 32
    %v529 = vpop.permute.xlu0 %528
    %530 = vrot.lane.b32.xlu0 %v297, 32
    %v531 = vpop.permute.xlu0 %530
    %532 = vrot.lane.b32.xlu0 %v298, 32
    %v533 = vpop.permute.xlu0 %532
    %534 = vrot.lane.b32.xlu0 %v299, 32
    %v535 = vpop.permute.xlu0 %534
    %536 = vrot.lane.b32.xlu0 %v300, 32
    %v537 = vpop.permute.xlu0 %536
    %538 = vrot.lane.b32.xlu0 %v301, 32
    %v539 = vpop.permute.xlu0 %538
    %540 = vrot.lane.b32.xlu0 %v302, 32
    %v541 = vpop.permute.xlu0 %540
    %542 = vrot.lane.b32.xlu0 %v303, 32
    %v543 = vpop.permute.xlu0 %542
    %544 = vrot.lane.b32.xlu0 %v304, 32
    %v545 = vpop.permute.xlu0 %544
    %546 = vrot.lane.b32.xlu0 %v305, 32
    %v547 = vpop.permute.xlu0 %546
    %548 = vrot.lane.b32.xlu0 %v306, 32
    %v549 = vpop.permute.xlu0 %548
    %550 = vrot.lane.b32.xlu0 %v307, 32
    %v551 = vpop.permute.xlu0 %550
    %552 = vrot.lane.b32.xlu0 %v308, 32
    %v553 = vpop.permute.xlu0 %552
    %554 = vrot.lane.b32.xlu0 %v309, 32
    %v555 = vpop.permute.xlu0 %554
    %556 = vrot.lane.b32.xlu0 %v310, 32
    %v557 = vpop.permute.xlu0 %556
    %558 = vrot.lane.b32.xlu0 %v311, 32
    %v559 = vpop.permute.xlu0 %558
    %v576 = vmul.f32 %v494, %v529
    %v577 = vmul.f32 %v499, %v531
    %v578 = vmul.f32 %v504, %v533
    %v579 = vmul.f32 %v509, %v535
    %v580 = vmul.f32 %v494, %v537
    %v581 = vmul.f32 %v499, %v539
    %v582 = vmul.f32 %v504, %v541
    %v583 = vmul.f32 %v509, %v543
    %v584 = vmul.f32 %v494, %v545
    %v585 = vmul.f32 %v499, %v547
    %v586 = vmul.f32 %v504, %v549
    %v587 = vmul.f32 %v509, %v551
    %v588 = vmul.f32 %v494, %v553
    %v589 = vmul.f32 %v499, %v555
    %v590 = vmul.f32 %v504, %v557
    %v591 = vmul.f32 %v509, %v559
    %592 = vrot.lane.b32.xlu0 %v296, 64
    %v593 = vpop.permute.xlu0 %592
    %594 = vrot.lane.b32.xlu0 %v297, 64
    %v595 = vpop.permute.xlu0 %594
    %596 = vrot.lane.b32.xlu0 %v298, 64
    %v597 = vpop.permute.xlu0 %596
    %598 = vrot.lane.b32.xlu0 %v299, 64
    %v599 = vpop.permute.xlu0 %598
    %600 = vrot.lane.b32.xlu0 %v300, 64
    %v601 = vpop.permute.xlu0 %600
    %602 = vrot.lane.b32.xlu0 %v301, 64
    %v603 = vpop.permute.xlu0 %602
    %604 = vrot.lane.b32.xlu0 %v302, 64
    %v605 = vpop.permute.xlu0 %604
    %606 = vrot.lane.b32.xlu0 %v303, 64
    %v607 = vpop.permute.xlu0 %606
    %608 = vrot.lane.b32.xlu0 %v304, 64
    %v609 = vpop.permute.xlu0 %608
    %610 = vrot.lane.b32.xlu0 %v305, 64
    %v611 = vpop.permute.xlu0 %610
    %612 = vrot.lane.b32.xlu0 %v306, 64
    %v613 = vpop.permute.xlu0 %612
    %614 = vrot.lane.b32.xlu0 %v307, 64
    %v615 = vpop.permute.xlu0 %614
    %616 = vrot.lane.b32.xlu0 %v308, 64
    %v617 = vpop.permute.xlu0 %616
    %618 = vrot.lane.b32.xlu0 %v309, 64
    %v619 = vpop.permute.xlu0 %618
    %620 = vrot.lane.b32.xlu0 %v310, 64
    %v621 = vpop.permute.xlu0 %620
    %622 = vrot.lane.b32.xlu0 %v311, 64
    %v623 = vpop.permute.xlu0 %622
    %v640 = vmul.f32 %v494, %v593
    %v641 = vmul.f32 %v499, %v595
    %v642 = vmul.f32 %v504, %v597
    %v643 = vmul.f32 %v509, %v599
    %v644 = vmul.f32 %v494, %v601
    %v645 = vmul.f32 %v499, %v603
    %v646 = vmul.f32 %v504, %v605
    %v647 = vmul.f32 %v509, %v607
    %v648 = vmul.f32 %v494, %v609
    %v649 = vmul.f32 %v499, %v611
    %v650 = vmul.f32 %v504, %v613
    %v651 = vmul.f32 %v509, %v615
    %v652 = vmul.f32 %v494, %v617
    %v653 = vmul.f32 %v499, %v619
    %v654 = vmul.f32 %v504, %v621
    %v655 = vmul.f32 %v509, %v623
    %672 = vrot.lane.b32.xlu0 %v576, 96
    %v673 = vpop.permute.xlu0 %672
    %674 = vrot.lane.b32.xlu0 %v577, 96
    %v675 = vpop.permute.xlu0 %674
    %676 = vrot.lane.b32.xlu0 %v578, 96
    %v677 = vpop.permute.xlu0 %676
    %678 = vrot.lane.b32.xlu0 %v579, 96
    %v679 = vpop.permute.xlu0 %678
    %680 = vrot.lane.b32.xlu0 %v580, 96
    %v681 = vpop.permute.xlu0 %680
    %682 = vrot.lane.b32.xlu0 %v581, 96
    %v683 = vpop.permute.xlu0 %682
    %684 = vrot.lane.b32.xlu0 %v582, 96
    %v685 = vpop.permute.xlu0 %684
    %686 = vrot.lane.b32.xlu0 %v583, 96
    %v687 = vpop.permute.xlu0 %686
    %688 = vrot.lane.b32.xlu0 %v584, 96
    %v689 = vpop.permute.xlu0 %688
    %690 = vrot.lane.b32.xlu0 %v585, 96
    %v691 = vpop.permute.xlu0 %690
    %692 = vrot.lane.b32.xlu0 %v586, 96
    %v693 = vpop.permute.xlu0 %692
    %694 = vrot.lane.b32.xlu0 %v587, 96
    %v695 = vpop.permute.xlu0 %694
    %696 = vrot.lane.b32.xlu0 %v588, 96
    %v697 = vpop.permute.xlu0 %696
    %698 = vrot.lane.b32.xlu0 %v589, 96
    %v699 = vpop.permute.xlu0 %698
    %700 = vrot.lane.b32.xlu0 %v590, 96
    %v701 = vpop.permute.xlu0 %700
    %702 = vrot.lane.b32.xlu0 %v591, 96
    %v703 = vpop.permute.xlu0 %702
    %v705 = vsel %vm330, %v494, 0
    %v708 = vsel %vm330, %v499, 0
    %v711 = vsel %vm330, %v504, 0
    %v714 = vsel %vm330, %v509, 0
    %v716 = vsel %vm330, %v673, 0
    %v718 = vsel %vm330, %v675, 0
    %v720 = vsel %vm330, %v677, 0
    %v722 = vsel %vm330, %v679, 0
    %v724 = vsel %vm330, %v681, 0
    %v726 = vsel %vm330, %v683, 0
    %v728 = vsel %vm330, %v685, 0
    %v730 = vsel %vm330, %v687, 0
    %v732 = vsel %vm330, %v689, 0
    %v734 = vsel %vm330, %v691, 0
    %v736 = vsel %vm330, %v693, 0
    %v738 = vsel %vm330, %v695, 0
    %v740 = vsel %vm330, %v697, 0
    %v742 = vsel %vm330, %v699, 0
    %v744 = vsel %vm330, %v701, 0
    %v746 = vsel %vm330, %v703, 0
    %748 = vmatprep.subr.mxu0 0.0
    %749 = vmatpush1.xpose.msra.mxu0 %v716
    %750 = vmatprep.subr.mxu0 0.0
    %751 = vmatpush1.xpose.msra.mxu0 %v718
    %752 = vmatprep.subr.mxu0 0.0
    %753 = vmatpush1.xpose.msra.mxu0 %v720
    %754 = vmatprep.subr.mxu0 0.0
    %755 = vmatpush1.xpose.msra.mxu0 %v722
    %756 = vmatprep.subr.mxu0 0.0
    %757 = vmatpush1.xpose.msra.mxu0 %v724
    %758 = vmatprep.subr.mxu0 0.0
    %759 = vmatpush1.xpose.msra.mxu0 %v726
    %760 = vmatprep.subr.mxu0 0.0
    %761 = vmatpush1.xpose.msra.mxu0 %v728
    %762 = vmatprep.subr.mxu0 0.0
    %763 = vmatpush1.xpose.msra.mxu0 %v730
    %764 = vmatprep.subr.mxu0 0.0
    %765 = vmatpush1.xpose.msra.mxu0 %v732
    %766 = vmatprep.subr.mxu0 0.0
    %767 = vmatpush1.xpose.msra.mxu0 %v734
    %768 = vmatprep.subr.mxu0 0.0
    %769 = vmatpush1.xpose.msra.mxu0 %v736
    %770 = vmatprep.subr.mxu0 0.0
    %771 = vmatpush1.xpose.msra.mxu0 %v738
    %772 = vmatprep.subr.mxu0 0.0
    %773 = vmatpush1.xpose.msra.mxu0 %v740
    %774 = vmatprep.subr.mxu0 0.0
    %775 = vmatpush1.xpose.msra.mxu0 %v742
    %776 = vmatprep.subr.mxu0 0.0
    %777 = vmatpush1.xpose.msra.mxu0 %v744
    %778 = vmatprep.subr.mxu0 0.0
    %779 = vmatpush1.xpose.msra.mxu0 %v746
    %780 = vmatprep.subr.mxu0 0.0
    %781 = vmatpush1.xpose.msra.mxu0 0.0
    %782 = vmatprep.subr.mxu0 0.0
    %783 = vmatpush1.xpose.msra.mxu0 0.0
    %784 = vmatprep.subr.mxu0 0.0
    %785 = vmatpush1.xpose.msra.mxu0 0.0
    %786 = vmatprep.subr.mxu0 0.0
    %787 = vmatpush1.xpose.msra.mxu0 0.0
    %788 = vmatprep.subr.mxu0 0.0
    %789 = vmatpush1.xpose.msra.mxu0 0.0
    %790 = vmatprep.subr.mxu0 0.0
    %791 = vmatpush1.xpose.msra.mxu0 0.0
    %792 = vmatprep.subr.mxu0 0.0
    %793 = vmatpush1.xpose.msra.mxu0 0.0
    %794 = vmatprep.subr.mxu0 0.0
    %795 = vmatpush1.xpose.msra.mxu0 0.0
    %796 = vmatprep.subr.mxu0 0.0
    %797 = vmatpush1.xpose.msra.mxu0 0.0
    %798 = vmatprep.subr.mxu0 0.0
    %799 = vmatpush1.xpose.msra.mxu0 0.0
    %800 = vmatprep.subr.mxu0 0.0
    %801 = vmatpush1.xpose.msra.mxu0 0.0
    %802 = vmatprep.subr.mxu0 0.0
    %803 = vmatpush1.xpose.msra.mxu0 0.0
    %804 = vmatprep.subr.mxu0 0.0
    %805 = vmatpush1.xpose.msra.mxu0 0.0
    %806 = vmatprep.subr.mxu0 0.0
    %807 = vmatpush1.xpose.msra.mxu0 0.0
    %808 = vmatprep.subr.mxu0 0.0
    %809 = vmatpush1.xpose.msra.mxu0 0.0
    %810 = vmatprep.subr.mxu0 0.0
    %811 = vmatpush1.xpose.msra.mxu0 0.0
    %812 = vmatprep.mubr.f32.mxu0 0.0
    %813 = vmatmul.mubr.f32.gmra.mrb[0].mxu0 %v705
    %v814 = vpop.f32.mrb[0].mxu0
    %v815 = vadd.f32 %v292, %v814
    %v816 = vpop.f32.mrb[0].mxu0
    %817 = vmatprep.mubr.f32.mxu0 0.0
    %818 = vmatmul.mubr.f32.gmra.mrb[0].mxu0 %v708
    %v819 = vpop.f32.mrb[0].mxu0
    %v820 = vadd.f32 %v293, %v819
    %v821 = vpop.f32.mrb[0].mxu0
    %822 = vmatprep.mubr.f32.mxu0 0.0
    %823 = vmatmul.mubr.f32.gmra.mrb[0].mxu0 %v711
    %v824 = vpop.f32.mrb[0].mxu0
    %v825 = vadd.f32 %v294, %v824
    %v826 = vpop.f32.mrb[0].mxu0
    %827 = vmatprep.mubr.f32.mxu0 0.0
    %828 = vmatmul.mubr.f32.gmra.mrb[0].mxu0 %v714
    %v829 = vpop.f32.mrb[0].mxu0
    %v830 = vadd.f32 %v295, %v829
    %v831 = vpop.f32.mrb[0].mxu0
    %832 = vdwg.mxu0
    %833 = vmax.xlane.f32.xlu0 %v815
    %v834 = vpop.xlane.xlu0 %833
    %835 = vmax.xlane.f32.xlu0 %v820
    %v836 = vpop.xlane.xlu0 %835
    %837 = vmax.xlane.f32.xlu0 %v825
    %v838 = vpop.xlane.xlu0 %837
    %839 = vmax.xlane.f32.xlu0 %v830
    %v840 = vpop.xlane.xlu0 %839
    %v841 = vsub.f32 %v815, %v834
    %v842 = vsub.f32 %v820, %v836
    %v843 = vsub.f32 %v825, %v838
    %v844 = vsub.f32 %v830, %v840
    %v845 = vmul.f32 %v841, 1.442695
    %v846 = vpow.pop %v845
    %v847 = vmul.f32 %v842, 1.442695
    %v848 = vpow.pop %v847
    %v849 = vmul.f32 %v843, 1.442695
    %v850 = vpow.pop %v849
    %v851 = vmul.f32 %v844, 1.442695
    %v852 = vpow.pop %v851
    %853 = vmatprep.subr.mxu0 0.0
    %854 = vmatpush1.msra.mxu0 %v312
    %855 = vmatprep.subr.mxu0 0.0
    %856 = vmatpush1.msra.mxu0 %v313
    %857 = vmatprep.subr.mxu0 0.0
    %858 = vmatpush1.msra.mxu0 %v314
    %859 = vmatprep.subr.mxu0 0.0
    %860 = vmatpush1.msra.mxu0 %v315
    %861 = vmatprep.subr.mxu0 0.0
    %862 = vmatpush1.msra.mxu0 %v316
    %863 = vmatprep.subr.mxu0 0.0
    %864 = vmatpush1.msra.mxu0 %v317
    %865 = vmatprep.subr.mxu0 0.0
    %866 = vmatpush1.msra.mxu0 %v318
    %867 = vmatprep.subr.mxu0 0.0
    %868 = vmatpush1.msra.mxu0 %v319
    %869 = vmatprep.subr.mxu0 0.0
    %870 = vmatpush1.msra.mxu0 %v320
    %871 = vmatprep.subr.mxu0 0.0
    %872 = vmatpush1.msra.mxu0 %v321
    %873 = vmatprep.subr.mxu0 0.0
    %874 = vmatpush1.msra.mxu0 %v322
    %875 = vmatprep.subr.mxu0 0.0
    %876 = vmatpush1.msra.mxu0 %v323
    %877 = vmatprep.subr.mxu0 0.0
    %878 = vmatpush1.msra.mxu0 %v324
    %879 = vmatprep.subr.mxu0 0.0
    %880 = vmatpush1.msra.mxu0 %v325
    %881 = vmatprep.subr.mxu0 0.0
    %882 = vmatpush1.msra.mxu0 %v326
    %883 = vmatprep.subr.mxu0 0.0
    %884 = vmatpush1.msra.mxu0 %v327
    %885 = vmatprep.subr.mxu0 0.0
    %886 = vmatpush1.msra.mxu0 0.0
    %887 = vmatprep.subr.mxu0 0.0
    %888 = vmatpush1.msra.mxu0 0.0
    %889 = vmatprep.subr.mxu0 0.0
    %890 = vmatpush1.msra.mxu0 0.0
    %891 = vmatprep.subr.mxu0 0.0
    %892 = vmatpush1.msra.mxu0 0.0
    %893 = vmatprep.subr.mxu0 0.0
    %894 = vmatpush1.msra.mxu0 0.0
    %895 = vmatprep.subr.mxu0 0.0
    %896 = vmatpush1.msra.mxu0 0.0
    %897 = vmatprep.subr.mxu0 0.0
    %898 = vmatpush1.msra.mxu0 0.0
    %899 = vmatprep.subr.mxu0 0.0
    %900 = vmatpush1.msra.mxu0 0.0
    %901 = vmatprep.subr.mxu0 0.0
    %902 = vmatpush1.msra.mxu0 0.0
    %903 = vmatprep.subr.mxu0 0.0
    %904 = vmatpush1.msra.mxu0 0.0
    %905 = vmatprep.subr.mxu0 0.0
    %906 = vmatpush1.msra.mxu0 0.0
    %907 = vmatprep.subr.mxu0 0.0
    %908 = vmatpush1.msra.mxu0 0.0
    %909 = vmatprep.subr.mxu0 0.0
    %910 = vmatpush1.msra.mxu0 0.0
    %911 = vmatprep.subr.mxu0 0.0
    %912 = vmatpush1.msra.mxu0 0.0
    %913 = vmatprep.subr.mxu0 0.0
    %914 = vmatpush1.msra.mxu0 0.0
    %915 = vmatprep.subr.mxu0 0.0
    %916 = vmatpush1.msra.mxu0 0.0
    %917 = vmatprep.mubr.f32.mxu0 0.0
    %918 = vmatmul.mubr.f32.gmra.mrb[0].mxu0 %v846
    %v919 = vpop.f32.mrb[0].mxu0
    %v920 = vadd.f32 0.0, %v919
    %v921 = vpop.f32.mrb[0].mxu0
    %922 = vmatprep.mubr.f32.mxu0 0.0
    %923 = vmatmul.mubr.f32.gmra.mrb[0].mxu0 %v848
    %v924 = vpop.f32.mrb[0].mxu0
    %v925 = vadd.f32 0.0, %v924
    %v926 = vpop.f32.mrb[0].mxu0
    %927 = vmatprep.mubr.f32.mxu0 0.0
    %928 = vmatmul.mubr.f32.gmra.mrb[0].mxu0 %v850
    %v929 = vpop.f32.mrb[0].mxu0
    %v930 = vadd.f32 0.0, %v929
    %v931 = vpop.f32.mrb[0].mxu0
    %932 = vmatprep.mubr.f32.mxu0 0.0
    %933 = vmatmul.mubr.f32.gmra.mrb[0].mxu0 %v852
    %v934 = vpop.f32.mrb[0].mxu0
    %v935 = vadd.f32 0.0, %v934
    %v936 = vpop.f32.mrb[0].mxu0
    %937 = vdwg.mxu0
    %v938 = vrcp.pop %v920
    %v939 = vmul.f32 %v846, %v938
    %v940 = vrcp.pop %v925
    %v941 = vmul.f32 %v848, %v940
    %v942 = vrcp.pop %v930
    %v943 = vmul.f32 %v850, %v942
    %v944 = vrcp.pop %v935
    %v945 = vmul.f32 %v852, %v944
    %962 = vrot.lane.b32.xlu0 %v640, 64
    %v963 = vpop.permute.xlu0 %962
    %964 = vrot.lane.b32.xlu0 %v641, 64
    %v965 = vpop.permute.xlu0 %964
    %966 = vrot.lane.b32.xlu0 %v642, 64
    %v967 = vpop.permute.xlu0 %966
    %968 = vrot.lane.b32.xlu0 %v643, 64
    %v969 = vpop.permute.xlu0 %968
    %970 = vrot.lane.b32.xlu0 %v644, 64
    %v971 = vpop.permute.xlu0 %970
    %972 = vrot.lane.b32.xlu0 %v645, 64
    %v973 = vpop.permute.xlu0 %972
    %974 = vrot.lane.b32.xlu0 %v646, 64
    %v975 = vpop.permute.xlu0 %974
    %976 = vrot.lane.b32.xlu0 %v647, 64
    %v977 = vpop.permute.xlu0 %976
    %978 = vrot.lane.b32.xlu0 %v648, 64
    %v979 = vpop.permute.xlu0 %978
    %980 = vrot.lane.b32.xlu0 %v649, 64
    %v981 = vpop.permute.xlu0 %980
    %982 = vrot.lane.b32.xlu0 %v650, 64
    %v983 = vpop.permute.xlu0 %982
    %984 = vrot.lane.b32.xlu0 %v651, 64
    %v985 = vpop.permute.xlu0 %984
    %986 = vrot.lane.b32.xlu0 %v652, 64
    %v987 = vpop.permute.xlu0 %986
    %988 = vrot.lane.b32.xlu0 %v653, 64
    %v989 = vpop.permute.xlu0 %988
    %990 = vrot.lane.b32.xlu0 %v654, 64
    %v991 = vpop.permute.xlu0 %990
    %992 = vrot.lane.b32.xlu0 %v655, 64
    %v993 = vpop.permute.xlu0 %992
    %1010 = vmatprep.subr.mxu0 0.0
    %1011 = vmatpush1.msra.mxu0 %v963
    %1012 = vmatprep.subr.mxu0 0.0
    %1013 = vmatpush1.msra.mxu0 %v965
    %1014 = vmatprep.subr.mxu0 0.0
    %1015 = vmatpush1.msra.mxu0 %v967
    %1016 = vmatprep.subr.mxu0 0.0
    %1017 = vmatpush1.msra.mxu0 %v969
    %1018 = vmatprep.subr.mxu0 0.0
    %1019 = vmatpush1.msra.mxu0 %v971
    %1020 = vmatprep.subr.mxu0 0.0
    %1021 = vmatpush1.msra.mxu0 %v973
    %1022 = vmatprep.subr.mxu0 0.0
    %1023 = vmatpush1.msra.mxu0 %v975
    %1024 = vmatprep.subr.mxu0 0.0
    %1025 = vmatpush1.msra.mxu0 %v977
    %1026 = vmatprep.subr.mxu0 0.0
    %1027 = vmatpush1.msra.mxu0 %v979
    %1028 = vmatprep.subr.mxu0 0.0
    %1029 = vmatpush1.msra.mxu0 %v981
    %1030 = vmatprep.subr.mxu0 0.0
    %1031 = vmatpush1.msra.mxu0 %v983
    %1032 = vmatprep.subr.mxu0 0.0
    %1033 = vmatpush1.msra.mxu0 %v985
    %1034 = vmatprep.subr.mxu0 0.0
    %1035 = vmatpush1.msra.mxu0 %v987
    %1036 = vmatprep.subr.mxu0 0.0
    %1037 = vmatpush1.msra.mxu0 %v989
    %1038 = vmatprep.subr.mxu0 0.0
    %1039 = vmatpush1.msra.mxu0 %v991
    %1040 = vmatprep.subr.mxu0 0.0
    %1041 = vmatpush1.msra.mxu0 %v993
    %1042 = vmatprep.subr.mxu0 0.0
    %1043 = vmatpush1.msra.mxu0 0.0
    %1044 = vmatprep.subr.mxu0 0.0
    %1045 = vmatpush1.msra.mxu0 0.0
    %1046 = vmatprep.subr.mxu0 0.0
    %1047 = vmatpush1.msra.mxu0 0.0
    %1048 = vmatprep.subr.mxu0 0.0
    %1049 = vmatpush1.msra.mxu0 0.0
    %1050 = vmatprep.subr.mxu0 0.0
    %1051 = vmatpush1.msra.mxu0 0.0
    %1052 = vmatprep.subr.mxu0 0.0
    %1053 = vmatpush1.msra.mxu0 0.0
    %1054 = vmatprep.subr.mxu0 0.0
    %1055 = vmatpush1.msra.mxu0 0.0
    %1056 = vmatprep.subr.mxu0 0.0
    %1057 = vmatpush1.msra.mxu0 0.0
    %1058 = vmatprep.subr.mxu0 0.0
    %1059 = vmatpush1.msra.mxu0 0.0
    %1060 = vmatprep.subr.mxu0 0.0
    %1061 = vmatpush1.msra.mxu0 0.0
    %1062 = vmatprep.subr.mxu0 0.0
    %1063 = vmatpush1.msra.mxu0 0.0
    %1064 = vmatprep.subr.mxu0 0.0
    %1065 = vmatpush1.msra.mxu0 0.0
    %1066 = vmatprep.subr.mxu0 0.0
    %1067 = vmatpush1.msra.mxu0 0.0
    %1068 = vmatprep.subr.mxu0 0.0
    %1069 = vmatpush1.msra.mxu0 0.0
    %1070 = vmatprep.subr.mxu0 0.0
    %1071 = vmatpush1.msra.mxu0 0.0
    %1072 = vmatprep.subr.mxu0 0.0
    %1073 = vmatpush1.msra.mxu0 0.0
    %1074 = vmatprep.mubr.f32.mxu0 0.0
    %1075 = vmatmul.mubr.f32.gmra.mrb[0].mxu0 %v939
    %v1076 = vpop.f32.mrb[0].mxu0
    %v1077 = vadd.f32 0.0, %v1076
    %v1078 = vpop.f32.mrb[0].mxu0
    %1079 = vmatprep.mubr.f32.mxu0 0.0
    %1080 = vmatmul.mubr.f32.gmra.mrb[0].mxu0 %v941
    %v1081 = vpop.f32.mrb[0].mxu0
    %v1082 = vadd.f32 0.0, %v1081
    %v1083 = vpop.f32.mrb[0].mxu0
    %1084 = vmatprep.mubr.f32.mxu0 0.0
    %1085 = vmatmul.mubr.f32.gmra.mrb[0].mxu0 %v943
    %v1086 = vpop.f32.mrb[0].mxu0
    %v1087 = vadd.f32 0.0, %v1086
    %v1088 = vpop.f32.mrb[0].mxu0
    %1089 = vmatprep.mubr.f32.mxu0 0.0
    %1090 = vmatmul.mubr.f32.gmra.mrb[0].mxu0 %v945
    %v1091 = vpop.f32.mrb[0].mxu0
    %v1092 = vadd.f32 0.0, %v1091
    %v1093 = vpop.f32.mrb[0].mxu0
    %1094 = vdwg.mxu0
    %v1095 = vld [vmem:[%s15] sm:$0xff]
    %v1096 = vld [vmem:[%s15 + $0x8] sm:$0xff]
    %v1097 = vld [vmem:[%s15 + $0x10] sm:$0xff]
    %v1098 = vld [vmem:[%s15 + $0x18] sm:$0xff]
    %v1099 = vld [vmem:[%s16] sm:$0x1]
    %v1101 = vlaneseq
    %v1102 = vshrl.u32 %v1101, 7
    %v1103 = vsub.s32 0, %v1102
    %v1104 = vrot.slane %v1099, %v1103
    %v1107 = vsel %vm330, %v1077, 0
    %v1110 = vsel %vm330, %v1082, 0
    %v1113 = vsel %vm330, %v1087, 0
    %v1116 = vsel %vm330, %v1092, 0
    %1118 = vmatprep.subr.mxu0 0.0
    %1119 = vmatpush1.msra.mxu0 %v1095
    %1120 = vmatprep.subr.mxu0 0.0
    %1121 = vmatpush1.msra.mxu0 %v1096
    %1122 = vmatprep.subr.mxu0 0.0
    %1123 = vmatpush1.msra.mxu0 %v1097
    %1124 = vmatprep.subr.mxu0 0.0
    %1125 = vmatpush1.msra.mxu0 %v1098
    %1126 = vmatprep.subr.mxu0 0.0
    %1127 = vmatpush1.msra.mxu0 0.0
    %1128 = vmatprep.subr.mxu0 0.0
    %1129 = vmatpush1.msra.mxu0 0.0
    %1130 = vmatprep.subr.mxu0 0.0
    %1131 = vmatpush1.msra.mxu0 0.0
    %1132 = vmatprep.subr.mxu0 0.0
    %1133 = vmatpush1.msra.mxu0 0.0
    %1134 = vmatprep.subr.mxu0 0.0
    %1135 = vmatpush1.msra.mxu0 0.0
    %1136 = vmatprep.subr.mxu0 0.0
    %1137 = vmatpush1.msra.mxu0 0.0
    %1138 = vmatprep.subr.mxu0 0.0
    %1139 = vmatpush1.msra.mxu0 0.0
    %1140 = vmatprep.subr.mxu0 0.0
    %1141 = vmatpush1.msra.mxu0 0.0
    %1142 = vmatprep.subr.mxu0 0.0
    %1143 = vmatpush1.msra.mxu0 0.0
    %1144 = vmatprep.subr.mxu0 0.0
    %1145 = vmatpush1.msra.mxu0 0.0
    %1146 = vmatprep.subr.mxu0 0.0
    %1147 = vmatpush1.msra.mxu0 0.0
    %1148 = vmatprep.subr.mxu0 0.0
    %1149 = vmatpush1.msra.mxu0 0.0
    %1150 = vmatprep.subr.mxu0 0.0
    %1151 = vmatpush1.msra.mxu0 0.0
    %1152 = vmatprep.subr.mxu0 0.0
    %1153 = vmatpush1.msra.mxu0 0.0
    %1154 = vmatprep.subr.mxu0 0.0
    %1155 = vmatpush1.msra.mxu0 0.0
    %1156 = vmatprep.subr.mxu0 0.0
    %1157 = vmatpush1.msra.mxu0 0.0
    %1158 = vmatprep.subr.mxu0 0.0
    %1159 = vmatpush1.msra.mxu0 0.0
    %1160 = vmatprep.subr.mxu0 0.0
    %1161 = vmatpush1.msra.mxu0 0.0
    %1162 = vmatprep.subr.mxu0 0.0
    %1163 = vmatpush1.msra.mxu0 0.0
    %1164 = vmatprep.subr.mxu0 0.0
    %1165 = vmatpush1.msra.mxu0 0.0
    %1166 = vmatprep.subr.mxu0 0.0
    %1167 = vmatpush1.msra.mxu0 0.0
    %1168 = vmatprep.subr.mxu0 0.0
    %1169 = vmatpush1.msra.mxu0 0.0
    %1170 = vmatprep.subr.mxu0 0.0
    %1171 = vmatpush1.msra.mxu0 0.0
    %1172 = vmatprep.subr.mxu0 0.0
    %1173 = vmatpush1.msra.mxu0 0.0
    %1174 = vmatprep.subr.mxu0 0.0
    %1175 = vmatpush1.msra.mxu0 0.0
    %1176 = vmatprep.subr.mxu0 0.0
    %1177 = vmatpush1.msra.mxu0 0.0
    %1178 = vmatprep.subr.mxu0 0.0
    %1179 = vmatpush1.msra.mxu0 0.0
    %1180 = vmatprep.subr.mxu0 0.0
    %1181 = vmatpush1.msra.mxu0 0.0
    %1182 = vmatprep.mubr.f32.mxu0 0.0
    %1183 = vmatmul.mubr.f32.gmra.mrb[0].mxu0 %v1107
    %v1184 = vpop.f32.mrb[0].mxu0
    %v1185 = vadd.f32 %v1104, %v1184
    %v1186 = vpop.f32.mrb[0].mxu0
    %1187 = vmatprep.mubr.f32.mxu0 0.0
    %1188 = vmatmul.mubr.f32.gmra.mrb[0].mxu0 %v1110
    %v1189 = vpop.f32.mrb[0].mxu0
    %v1190 = vadd.f32 %v1104, %v1189
    %v1191 = vpop.f32.mrb[0].mxu0
    %1192 = vmatprep.mubr.f32.mxu0 0.0
    %1193 = vmatmul.mubr.f32.gmra.mrb[0].mxu0 %v1113
    %v1194 = vpop.f32.mrb[0].mxu0
    %v1195 = vadd.f32 %v1104, %v1194
    %v1196 = vpop.f32.mrb[0].mxu0
    %1197 = vmatprep.mubr.f32.mxu0 0.0
    %1198 = vmatmul.mubr.f32.gmra.mrb[0].mxu0 %v1116
    %v1199 = vpop.f32.mrb[0].mxu0
    %v1200 = vadd.f32 %v1104, %v1199
    %v1201 = vpop.f32.mrb[0].mxu0
    %1202 = vdwg.mxu0
    %v1203 = vadd.f32 %v274, %v1185
    %v1204 = vadd.f32 %v279, %v1190
    %v1205 = vadd.f32 %v284, %v1195
    %v1206 = vadd.f32 %v289, %v1200
    %v1207 = vld [vmem:[%s17] sm:$0x1]
    %v1208 = vld [vmem:[%s18] sm:$0x1]
    %v1209 = vsel %vm330, %v1203, 0.0
    %1210 = vadd.xlane.f32.xlu0 %v1209
    %v1211 = vpop.xlane.xlu0 %1210
    %v1212 = vsel %vm330, %v1204, 0.0
    %1213 = vadd.xlane.f32.xlu0 %v1212
    %v1214 = vpop.xlane.xlu0 %1213
    %v1215 = vsel %vm330, %v1205, 0.0
    %1216 = vadd.xlane.f32.xlu0 %v1215
    %v1217 = vpop.xlane.xlu0 %1216
    %v1218 = vsel %vm330, %v1206, 0.0
    %1219 = vadd.xlane.f32.xlu0 %v1218
    %v1220 = vpop.xlane.xlu0 %1219
    %v1221 = vmul.f32 %v1211, %v343
    %v1222 = vmul.f32 %v1214, %v343
    %v1223 = vmul.f32 %v1217, %v343
    %v1224 = vmul.f32 %v1220, %v343
    %v1225 = vsub.f32 %v1203, %v1221
    %v1226 = vsub.f32 %v1204, %v1222
    %v1227 = vsub.f32 %v1205, %v1223
    %v1228 = vsub.f32 %v1206, %v1224
    %v1229 = vmul.f32 %v1225, %v1225
    %v1230 = vmul.f32 %v1226, %v1226
    %v1231 = vmul.f32 %v1227, %v1227
    %v1232 = vmul.f32 %v1228, %v1228
    %v1233 = vsel %vm330, %v1229, 0.0
    %1234 = vadd.xlane.f32.xlu0 %v1233
    %v1235 = vpop.xlane.xlu0 %1234
    %v1236 = vsel %vm330, %v1230, 0.0
    %1237 = vadd.xlane.f32.xlu0 %v1236
    %v1238 = vpop.xlane.xlu0 %1237
    %v1239 = vsel %vm330, %v1231, 0.0
    %1240 = vadd.xlane.f32.xlu0 %v1239
    %v1241 = vpop.xlane.xlu0 %1240
    %v1242 = vsel %vm330, %v1232, 0.0
    %1243 = vadd.xlane.f32.xlu0 %v1242
    %v1244 = vpop.xlane.xlu0 %1243
    %v1245 = vmul.f32 %v1235, %v343
    %v1246 = vmul.f32 %v1238, %v343
    %v1247 = vmul.f32 %v1241, %v343
    %v1248 = vmul.f32 %v1244, %v343
    %v1249 = vadd.f32 %v1245, 1e-05
    %v1250 = vadd.f32 %v1246, 1e-05
    %v1251 = vadd.f32 %v1247, 1e-05
    %v1252 = vadd.f32 %v1248, 1e-05
    %v1253 = vrsqrt.pop %v1249
    %v1254 = vrsqrt.pop %v1250
    %v1255 = vrsqrt.pop %v1251
    %v1256 = vrsqrt.pop %v1252
    %v1257 = vmul.f32 %v1225, %v1253
    %v1258 = vmul.f32 %v1226, %v1254
    %v1259 = vmul.f32 %v1227, %v1255
    %v1260 = vmul.f32 %v1228, %v1256
    %v1262 = vlaneseq
    %v1263 = vshrl.u32 %v1262, 7
    %v1264 = vsub.s32 0, %v1263
    %v1265 = vrot.slane %v1207, %v1264
    %v1267 = vmul.f32 %v1257, %v1265
    %v1268 = vmul.f32 %v1258, %v1265
    %v1269 = vmul.f32 %v1259, %v1265
    %v1270 = vmul.f32 %v1260, %v1265
    %v1272 = vlaneseq
    %v1273 = vshrl.u32 %v1272, 7
    %v1274 = vsub.s32 0, %v1273
    %v1275 = vrot.slane %v1208, %v1274
    %v1277 = vadd.f32 %v1267, %v1275
    %v1278 = vadd.f32 %v1268, %v1275
    %v1279 = vadd.f32 %v1269, %v1275
    %v1280 = vadd.f32 %v1270, %v1275
    %v1281 = vld [vmem:[%s19] sm:$0xff]
    %v1282 = vld [vmem:[%s19 + $0x8] sm:$0xff]
    %v1283 = vld [vmem:[%s19 + $0x10] sm:$0xff]
    %v1284 = vld [vmem:[%s19 + $0x18] sm:$0xff]
    %v1285 = vld [vmem:[%s20] sm:$0x1]
    %v1287 = vlaneseq
    %v1288 = vshrl.u32 %v1287, 7
    %v1289 = vsub.s32 0, %v1288
    %v1290 = vrot.slane %v1285, %v1289
    %v1293 = vsel %vm330, %v1277, 0
    %v1296 = vsel %vm330, %v1278, 0
    %v1299 = vsel %vm330, %v1279, 0
    %v1302 = vsel %vm330, %v1280, 0
    %1304 = vmatprep.subr.mxu0 0.0
    %1305 = vmatpush1.msra.mxu0 %v1281
    %1306 = vmatprep.subr.mxu0 0.0
    %1307 = vmatpush1.msra.mxu0 %v1282
    %1308 = vmatprep.subr.mxu0 0.0
    %1309 = vmatpush1.msra.mxu0 %v1283
    %1310 = vmatprep.subr.mxu0 0.0
    %1311 = vmatpush1.msra.mxu0 %v1284
    %1312 = vmatprep.subr.mxu0 0.0
    %1313 = vmatpush1.msra.mxu0 0.0
    %1314 = vmatprep.subr.mxu0 0.0
    %1315 = vmatpush1.msra.mxu0 0.0
    %1316 = vmatprep.subr.mxu0 0.0
    %1317 = vmatpush1.msra.mxu0 0.0
    %1318 = vmatprep.subr.mxu0 0.0
    %1319 = vmatpush1.msra.mxu0 0.0
    %1320 = vmatprep.subr.mxu0 0.0
    %1321 = vmatpush1.msra.mxu0 0.0
    %1322 = vmatprep.subr.mxu0 0.0
    %1323 = vmatpush1.msra.mxu0 0.0
    %1324 = vmatprep.subr.mxu0 0.0
    %1325 = vmatpush1.msra.mxu0 0.0
    %1326 = vmatprep.subr.mxu0 0.0
    %1327 = vmatpush1.msra.mxu0 0.0
    %1328 = vmatprep.subr.mxu0 0.0
    %1329 = vmatpush1.msra.mxu0 0.0
    %1330 = vmatprep.subr.mxu0 0.0
    %1331 = vmatpush1.msra.mxu0 0.0
    %1332 = vmatprep.subr.mxu0 0.0
    %1333 = vmatpush1.msra.mxu0 0.0
    %1334 = vmatprep.subr.mxu0 0.0
    %1335 = vmatpush1.msra.mxu0 0.0
    %1336 = vmatprep.subr.mxu0 0.0
    %1337 = vmatpush1.msra.mxu0 0.0
    %1338 = vmatprep.subr.mxu0 0.0
    %1339 = vmatpush1.msra.mxu0 0.0
    %1340 = vmatprep.subr.mxu0 0.0
    %1341 = vmatpush1.msra.mxu0 0.0
    %1342 = vmatprep.subr.mxu0 0.0
    %1343 = vmatpush1.msra.mxu0 0.0
    %1344 = vmatprep.subr.mxu0 0.0
    %1345 = vmatpush1.msra.mxu0 0.0
    %1346 = vmatprep.subr.mxu0 0.0
    %1347 = vmatpush1.msra.mxu0 0.0
    %1348 = vmatprep.subr.mxu0 0.0
    %1349 = vmatpush1.msra.mxu0 0.0
    %1350 = vmatprep.subr.mxu0 0.0
    %1351 = vmatpush1.msra.mxu0 0.0
    %1352 = vmatprep.subr.mxu0 0.0
    %1353 = vmatpush1.msra.mxu0 0.0
    %1354 = vmatprep.subr.mxu0 0.0
    %1355 = vmatpush1.msra.mxu0 0.0
    %1356 = vmatprep.subr.mxu0 0.0
    %1357 = vmatpush1.msra.mxu0 0.0
    %1358 = vmatprep.subr.mxu0 0.0
    %1359 = vmatpush1.msra.mxu0 0.0
    %1360 = vmatprep.subr.mxu0 0.0
    %1361 = vmatpush1.msra.mxu0 0.0
    %1362 = vmatprep.subr.mxu0 0.0
    %1363 = vmatpush1.msra.mxu0 0.0
    %1364 = vmatprep.subr.mxu0 0.0
    %1365 = vmatpush1.msra.mxu0 0.0
    %1366 = vmatprep.subr.mxu0 0.0
    %1367 = vmatpush1.msra.mxu0 0.0
    %1368 = vmatprep.mubr.f32.mxu0 0.0
    %1369 = vmatmul.mubr.f32.gmra.mrb[0].mxu0 %v1293
    %v1370 = vpop.f32.mrb[0].mxu0
    %v1371 = vadd.f32 %v1290, %v1370
    %v1372 = vpop.f32.mrb[0].mxu0
    %1373 = vmatprep.mubr.f32.mxu0 0.0
    %1374 = vmatmul.mubr.f32.gmra.mrb[0].mxu0 %v1296
    %v1375 = vpop.f32.mrb[0].mxu0
    %v1376 = vadd.f32 %v1290, %v1375
    %v1377 = vpop.f32.mrb[0].mxu0
    %1378 = vmatprep.mubr.f32.mxu0 0.0
    %1379 = vmatmul.mubr.f32.gmra.mrb[0].mxu0 %v1299
    %v1380 = vpop.f32.mrb[0].mxu0
    %v1381 = vadd.f32 %v1290, %v1380
    %v1382 = vpop.f32.mrb[0].mxu0
    %1383 = vmatprep.mubr.f32.mxu0 0.0
    %1384 = vmatmul.mubr.f32.gmra.mrb[0].mxu0 %v1302
    %v1385 = vpop.f32.mrb[0].mxu0
    %v1386 = vadd.f32 %v1290, %v1385
    %v1387 = vpop.f32.mrb[0].mxu0
    %1388 = vdwg.mxu0
    %v1389 = vmul.f32 %v1371, %v1371
    %v1390 = vmul.f32 %v1376, %v1376
    %v1391 = vmul.f32 %v1381, %v1381
    %v1392 = vmul.f32 %v1386, %v1386
    %v1393 = vmul.f32 %v1371, %v1389
    %v1394 = vmul.f32 %v1376, %v1390
    %v1395 = vmul.f32 %v1381, %v1391
    %v1396 = vmul.f32 %v1386, %v1392
    %v1397 = vmul.f32 %v1393, 0.044715
    %v1398 = vmul.f32 %v1394, 0.044715
    %v1399 = vmul.f32 %v1395, 0.044715
    %v1400 = vmul.f32 %v1396, 0.044715
    %v1401 = vadd.f32 %v1371, %v1397
    %v1402 = vadd.f32 %v1376, %v1398
    %v1403 = vadd.f32 %v1381, %v1399
    %v1404 = vadd.f32 %v1386, %v1400
    %v1405 = vmul.f32 %v1401, 0.7978846
    %v1406 = vmul.f32 %v1402, 0.7978846
    %v1407 = vmul.f32 %v1403, 0.7978846
    %v1408 = vmul.f32 %v1404, 0.7978846
    %v1409 = vtanh.pop %v1405
    %v1410 = vtanh.pop %v1406
    %v1411 = vtanh.pop %v1407
    %v1412 = vtanh.pop %v1408
    %v1413 = vadd.f32 %v1409, 1.0
    %v1414 = vadd.f32 %v1410, 1.0
    %v1415 = vadd.f32 %v1411, 1.0
    %v1416 = vadd.f32 %v1412, 1.0
    %v1417 = vmul.f32 %v1413, 0.5
    %v1418 = vmul.f32 %v1414, 0.5
    %v1419 = vmul.f32 %v1415, 0.5
    %v1420 = vmul.f32 %v1416, 0.5
    %v1421 = vmul.f32 %v1371, %v1417
    %v1422 = vmul.f32 %v1376, %v1418
    %v1423 = vmul.f32 %v1381, %v1419
    %v1424 = vmul.f32 %v1386, %v1420
    %v1425 = vld [vmem:[%s21] sm:$0xff]
    %v1426 = vld [vmem:[%s21 + $0x8] sm:$0xff]
    %v1427 = vld [vmem:[%s21 + $0x10] sm:$0xff]
    %v1428 = vld [vmem:[%s21 + $0x18] sm:$0xff]
    %v1429 = vld [vmem:[%s21 + $0x20] sm:$0xff]
    %v1430 = vld [vmem:[%s21 + $0x28] sm:$0xff]
    %v1431 = vld [vmem:[%s21 + $0x30] sm:$0xff]
    %v1432 = vld [vmem:[%s21 + $0x38] sm:$0xff]
    %v1433 = vld [vmem:[%s22] sm:$0x1]
    %v1435 = vlaneseq
    %v1436 = vshrl.u32 %v1435, 7
    %v1437 = vsub.s32 0, %v1436
    %v1438 = vrot.slane %v1433, %v1437
    %vm1440 = vcmask 523264
    %v1442 = vsel %vm1440, %v1421, 0
    %v1445 = vsel %vm1440, %v1422, 0
    %v1448 = vsel %vm1440, %v1423, 0
    %v1451 = vsel %vm1440, %v1424, 0
    %1453 = vmatprep.subr.mxu0 0.0
    %1454 = vmatpush1.msra.mxu0 %v1425
    %1455 = vmatprep.subr.mxu0 0.0
    %1456 = vmatpush1.msra.mxu0 %v1426
    %1457 = vmatprep.subr.mxu0 0.0
    %1458 = vmatpush1.msra.mxu0 %v1427
    %1459 = vmatprep.subr.mxu0 0.0
    %1460 = vmatpush1.msra.mxu0 %v1428
    %1461 = vmatprep.subr.mxu0 0.0
    %1462 = vmatpush1.msra.mxu0 %v1429
    %1463 = vmatprep.subr.mxu0 0.0
    %1464 = vmatpush1.msra.mxu0 %v1430
    %1465 = vmatprep.subr.mxu0 0.0
    %1466 = vmatpush1.msra.mxu0 %v1431
    %1467 = vmatprep.subr.mxu0 0.0
    %1468 = vmatpush1.msra.mxu0 %v1432
    %1469 = vmatprep.subr.mxu0 0.0
    %1470 = vmatpush1.msra.mxu0 0.0
    %1471 = vmatprep.subr.mxu0 0.0
    %1472 = vmatpush1.msra.mxu0 0.0
    %1473 = vmatprep.subr.mxu0 0.0
    %1474 = vmatpush1.msra.mxu0 0.0
    %1475 = vmatprep.subr.mxu0 0.0
    %1476 = vmatpush1.msra.mxu0 0.0
    %1477 = vmatprep.subr.mxu0 0.0
    %1478 = vmatpush1.msra.mxu0 0.0
    %1479 = vmatprep.subr.mxu0 0.0
    %1480 = vmatpush1.msra.mxu0 0.0
    %1481 = vmatprep.subr.mxu0 0.0
    %1482 = vmatpush1.msra.mxu0 0.0
    %1483 = vmatprep.subr.mxu0 0.0
    %1484 = vmatpush1.msra.mxu0 0.0
    %1485 = vmatprep.subr.mxu0 0.0
    %1486 = vmatpush1.msra.mxu0 0.0
    %1487 = vmatprep.subr.mxu0 0.0
    %1488 = vmatpush1.msra.mxu0 0.0
    %1489 = vmatprep.subr.mxu0 0.0
    %1490 = vmatpush1.msra.mxu0 0.0
    %1491 = vmatprep.subr.mxu0 0.0
    %1492 = vmatpush1.msra.mxu0 0.0
    %1493 = vmatprep.subr.mxu0 0.0
    %1494 = vmatpush1.msra.mxu0 0.0
    %1495 = vmatprep.subr.mxu0 0.0
    %1496 = vmatpush1.msra.mxu0 0.0
    %1497 = vmatprep.subr.mxu0 0.0
    %1498 = vmatpush1.msra.mxu0 0.0
    %1499 = vmatprep.subr.mxu0 0.0
    %1500 = vmatpush1.msra.mxu0 0.0
    %1501 = vmatprep.subr.mxu0 0.0
    %1502 = vmatpush1.msra.mxu0 0.0
    %1503 = vmatprep.subr.mxu0 0.0
    %1504 = vmatpush1.msra.mxu0 0.0
    %1505 = vmatprep.subr.mxu0 0.0
    %1506 = vmatpush1.msra.mxu0 0.0
    %1507 = vmatprep.subr.mxu0 0.0
    %1508 = vmatpush1.msra.mxu0 0.0
    %1509 = vmatprep.subr.mxu0 0.0
    %1510 = vmatpush1.msra.mxu0 0.0
    %1511 = vmatprep.subr.mxu0 0.0
    %1512 = vmatpush1.msra.mxu0 0.0
    %1513 = vmatprep.subr.mxu0 0.0
    %1514 = vmatpush1.msra.mxu0 0.0
    %1515 = vmatprep.subr.mxu0 0.0
    %1516 = vmatpush1.msra.mxu0 0.0
    %1517 = vmatprep.mubr.f32.mxu0 0.0
    %1518 = vmatmul.mubr.f32.gmra.mrb[0].mxu0 %v1442
    %v1519 = vpop.f32.mrb[0].mxu0
    %v1520 = vadd.f32 %v1438, %v1519
    %v1521 = vpop.f32.mrb[0].mxu0
    %1522 = vmatprep.mubr.f32.mxu0 0.0
    %1523 = vmatmul.mubr.f32.gmra.mrb[0].mxu0 %v1445
    %v1524 = vpop.f32.mrb[0].mxu0
    %v1525 = vadd.f32 %v1438, %v1524
    %v1526 = vpop.f32.mrb[0].mxu0
    %1527 = vmatprep.mubr.f32.mxu0 0.0
    %1528 = vmatmul.mubr.f32.gmra.mrb[0].mxu0 %v1448
    %v1529 = vpop.f32.mrb[0].mxu0
    %v1530 = vadd.f32 %v1438, %v1529
    %v1531 = vpop.f32.mrb[0].mxu0
    %1532 = vmatprep.mubr.f32.mxu0 0.0
    %1533 = vmatmul.mubr.f32.gmra.mrb[0].mxu0 %v1451
    %v1534 = vpop.f32.mrb[0].mxu0
    %v1535 = vadd.f32 %v1438, %v1534
    %v1536 = vpop.f32.mrb[0].mxu0
    %1537 = vdwg.mxu0
    %v1538 = vadd.f32 %v1203, %v1520
    %v1539 = vadd.f32 %v1204, %v1525
    %v1540 = vadd.f32 %v1205, %v1530
    %v1541 = vadd.f32 %v1206, %v1535
    %s1542 = scalar_lea.vmem %s11, 1
    %v1543 = vld [vmem:[%s1542] sm:$0x1]
    %s1544 = scalar_lea.vmem %s12, 1
    %v1545 = vld [vmem:[%s1544] sm:$0x1]
    %v1546 = vsel %vm330, %v1538, 0.0
    %1547 = vadd.xlane.f32.xlu0 %v1546
    %v1548 = vpop.xlane.xlu0 %1547
    %v1549 = vsel %vm330, %v1539, 0.0
    %1550 = vadd.xlane.f32.xlu0 %v1549
    %v1551 = vpop.xlane.xlu0 %1550
    %v1552 = vsel %vm330, %v1540, 0.0
    %1553 = vadd.xlane.f32.xlu0 %v1552
    %v1554 = vpop.xlane.xlu0 %1553
    %v1555 = vsel %vm330, %v1541, 0.0
    %1556 = vadd.xlane.f32.xlu0 %v1555
    %v1557 = vpop.xlane.xlu0 %1556
    %v1558 = vmul.f32 %v1548, %v343
    %v1559 = vmul.f32 %v1551, %v343
    %v1560 = vmul.f32 %v1554, %v343
    %v1561 = vmul.f32 %v1557, %v343
    %v1562 = vsub.f32 %v1538, %v1558
    %v1563 = vsub.f32 %v1539, %v1559
    %v1564 = vsub.f32 %v1540, %v1560
    %v1565 = vsub.f32 %v1541, %v1561
    %v1566 = vmul.f32 %v1562, %v1562
    %v1567 = vmul.f32 %v1563, %v1563
    %v1568 = vmul.f32 %v1564, %v1564
    %v1569 = vmul.f32 %v1565, %v1565
    %v1570 = vsel %vm330, %v1566, 0.0
    %1571 = vadd.xlane.f32.xlu0 %v1570
    %v1572 = vpop.xlane.xlu0 %1571
    %v1573 = vsel %vm330, %v1567, 0.0
    %1574 = vadd.xlane.f32.xlu0 %v1573
    %v1575 = vpop.xlane.xlu0 %1574
    %v1576 = vsel %vm330, %v1568, 0.0
    %1577 = vadd.xlane.f32.xlu0 %v1576
    %v1578 = vpop.xlane.xlu0 %1577
    %v1579 = vsel %vm330, %v1569, 0.0
    %1580 = vadd.xlane.f32.xlu0 %v1579
    %v1581 = vpop.xlane.xlu0 %1580
    %v1582 = vmul.f32 %v1572, %v343
    %v1583 = vmul.f32 %v1575, %v343
    %v1584 = vmul.f32 %v1578, %v343
    %v1585 = vmul.f32 %v1581, %v343
    %v1586 = vadd.f32 %v1582, 1e-05
    %v1587 = vadd.f32 %v1583, 1e-05
    %v1588 = vadd.f32 %v1584, 1e-05
    %v1589 = vadd.f32 %v1585, 1e-05
    %v1590 = vrsqrt.pop %v1586
    %v1591 = vrsqrt.pop %v1587
    %v1592 = vrsqrt.pop %v1588
    %v1593 = vrsqrt.pop %v1589
    %v1594 = vmul.f32 %v1562, %v1590
    %v1595 = vmul.f32 %v1563, %v1591
    %v1596 = vmul.f32 %v1564, %v1592
    %v1597 = vmul.f32 %v1565, %v1593
    %v1599 = vlaneseq
    %v1600 = vshrl.u32 %v1599, 7
    %v1601 = vsub.s32 0, %v1600
    %v1602 = vrot.slane %v1543, %v1601
    %v1604 = vmul.f32 %v1594, %v1602
    %v1605 = vmul.f32 %v1595, %v1602
    %v1606 = vmul.f32 %v1596, %v1602
    %v1607 = vmul.f32 %v1597, %v1602
    %v1609 = vlaneseq
    %v1610 = vshrl.u32 %v1609, 7
    %v1611 = vsub.s32 0, %v1610
    %v1612 = vrot.slane %v1545, %v1611
    %v1614 = vadd.f32 %v1604, %v1612
    %v1615 = vadd.f32 %v1605, %v1612
    %v1616 = vadd.f32 %v1606, %v1612
    %v1617 = vadd.f32 %v1607, %v1612
    %s1618 = scalar_lea.vmem %s13, 32
    %v1619 = vld [vmem:[%s1618] sm:$0xff]
    %v1620 = vld [vmem:[%s1618 + $0x8] sm:$0xff]
    %v1621 = vld [vmem:[%s1618 + $0x10] sm:$0xff]
    %v1622 = vld [vmem:[%s1618 + $0x18] sm:$0xff]
    %s1623 = scalar_lea.vmem %s14, 1
    %v1624 = vld [vmem:[%s1623] sm:$0x1]
    %v1626 = vlaneseq
    %v1627 = vshrl.u32 %v1626, 7
    %v1628 = vsub.s32 0, %v1627
    %v1629 = vrot.slane %v1624, %v1628
    %v1632 = vsel %vm330, %v1614, 0
    %v1635 = vsel %vm330, %v1615, 0
    %v1638 = vsel %vm330, %v1616, 0
    %v1641 = vsel %vm330, %v1617, 0
    %1643 = vmatprep.subr.mxu0 0.0
    %1644 = vmatpush1.msra.mxu0 %v1619
    %1645 = vmatprep.subr.mxu0 0.0
    %1646 = vmatpush1.msra.mxu0 %v1620
    %1647 = vmatprep.subr.mxu0 0.0
    %1648 = vmatpush1.msra.mxu0 %v1621
    %1649 = vmatprep.subr.mxu0 0.0
    %1650 = vmatpush1.msra.mxu0 %v1622
    %1651 = vmatprep.subr.mxu0 0.0
    %1652 = vmatpush1.msra.mxu0 0.0
    %1653 = vmatprep.subr.mxu0 0.0
    %1654 = vmatpush1.msra.mxu0 0.0
    %1655 = vmatprep.subr.mxu0 0.0
    %1656 = vmatpush1.msra.mxu0 0.0
    %1657 = vmatprep.subr.mxu0 0.0
    %1658 = vmatpush1.msra.mxu0 0.0
    %1659 = vmatprep.subr.mxu0 0.0
    %1660 = vmatpush1.msra.mxu0 0.0
    %1661 = vmatprep.subr.mxu0 0.0
    %1662 = vmatpush1.msra.mxu0 0.0
    %1663 = vmatprep.subr.mxu0 0.0
    %1664 = vmatpush1.msra.mxu0 0.0
    %1665 = vmatprep.subr.mxu0 0.0
    %1666 = vmatpush1.msra.mxu0 0.0
    %1667 = vmatprep.subr.mxu0 0.0
    %1668 = vmatpush1.msra.mxu0 0.0
    %1669 = vmatprep.subr.mxu0 0.0
    %1670 = vmatpush1.msra.mxu0 0.0
    %1671 = vmatprep.subr.mxu0 0.0
    %1672 = vmatpush1.msra.mxu0 0.0
    %1673 = vmatprep.subr.mxu0 0.0
    %1674 = vmatpush1.msra.mxu0 0.0
    %1675 = vmatprep.subr.mxu0 0.0
    %1676 = vmatpush1.msra.mxu0 0.0
    %1677 = vmatprep.subr.mxu0 0.0
    %1678 = vmatpush1.msra.mxu0 0.0
    %1679 = vmatprep.subr.mxu0 0.0
    %1680 = vmatpush1.msra.mxu0 0.0
    %1681 = vmatprep.subr.mxu0 0.0
    %1682 = vmatpush1.msra.mxu0 0.0
    %1683 = vmatprep.subr.mxu0 0.0
    %1684 = vmatpush1.msra.mxu0 0.0
    %1685 = vmatprep.subr.mxu0 0.0
    %1686 = vmatpush1.msra.mxu0 0.0
    %1687 = vmatprep.subr.mxu0 0.0
    %1688 = vmatpush1.msra.mxu0 0.0
    %1689 = vmatprep.subr.mxu0 0.0
    %1690 = vmatpush1.msra.mxu0 0.0
    %1691 = vmatprep.subr.mxu0 0.0
    %1692 = vmatpush1.msra.mxu0 0.0
    %1693 = vmatprep.subr.mxu0 0.0
    %1694 = vmatpush1.msra.mxu0 0.0
    %1695 = vmatprep.subr.mxu0 0.0
    %1696 = vmatpush1.msra.mxu0 0.0
    %1697 = vmatprep.subr.mxu0 0.0
    %1698 = vmatpush1.msra.mxu0 0.0
    %1699 = vmatprep.subr.mxu0 0.0
    %1700 = vmatpush1.msra.mxu0 0.0
    %1701 = vmatprep.subr.mxu0 0.0
    %1702 = vmatpush1.msra.mxu0 0.0
    %1703 = vmatprep.subr.mxu0 0.0
    %1704 = vmatpush1.msra.mxu0 0.0
    %1705 = vmatprep.subr.mxu0 0.0
    %1706 = vmatpush1.msra.mxu0 0.0
    %1707 = vmatprep.mubr.f32.mxu0 0.0
    %1708 = vmatmul.mubr.f32.gmra.mrb[0].mxu0 %v1632
    %v1709 = vpop.f32.mrb[0].mxu0
    %v1710 = vadd.f32 %v1629, %v1709
    %v1711 = vpop.f32.mrb[0].mxu0
    %1712 = vmatprep.mubr.f32.mxu0 0.0
    %1713 = vmatmul.mubr.f32.gmra.mrb[0].mxu0 %v1635
    %v1714 = vpop.f32.mrb[0].mxu0
    %v1715 = vadd.f32 %v1629, %v1714
    %v1716 = vpop.f32.mrb[0].mxu0
    %1717 = vmatprep.mubr.f32.mxu0 0.0
    %1718 = vmatmul.mubr.f32.gmra.mrb[0].mxu0 %v1638
    %v1719 = vpop.f32.mrb[0].mxu0
    %v1720 = vadd.f32 %v1629, %v1719
    %v1721 = vpop.f32.mrb[0].mxu0
    %1722 = vmatprep.mubr.f32.mxu0 0.0
    %1723 = vmatmul.mubr.f32.gmra.mrb[0].mxu0 %v1641
    %v1724 = vpop.f32.mrb[0].mxu0
    %v1725 = vadd.f32 %v1629, %v1724
    %v1726 = vpop.f32.mrb[0].mxu0
    %1727 = vdwg.mxu0
    %v1728 = vmul.f32 %v1710, %v529
    %v1729 = vmul.f32 %v1715, %v531
    %v1730 = vmul.f32 %v1720, %v533
    %v1731 = vmul.f32 %v1725, %v535
    %v1732 = vmul.f32 %v1710, %v537
    %v1733 = vmul.f32 %v1715, %v539
    %v1734 = vmul.f32 %v1720, %v541
    %v1735 = vmul.f32 %v1725, %v543
    %v1736 = vmul.f32 %v1710, %v545
    %v1737 = vmul.f32 %v1715, %v547
    %v1738 = vmul.f32 %v1720, %v549
    %v1739 = vmul.f32 %v1725, %v551
    %v1740 = vmul.f32 %v1710, %v553
    %v1741 = vmul.f32 %v1715, %v555
    %v1742 = vmul.f32 %v1720, %v557
    %v1743 = vmul.f32 %v1725, %v559
    %v1744 = vmul.f32 %v1710, %v593
    %v1745 = vmul.f32 %v1715, %v595
    %v1746 = vmul.f32 %v1720, %v597
    %v1747 = vmul.f32 %v1725, %v599
    %v1748 = vmul.f32 %v1710, %v601
    %v1749 = vmul.f32 %v1715, %v603
    %v1750 = vmul.f32 %v1720, %v605
    %v1751 = vmul.f32 %v1725, %v607
    %v1752 = vmul.f32 %v1710, %v609
    %v1753 = vmul.f32 %v1715, %v611
    %v1754 = vmul.f32 %v1720, %v613
    %v1755 = vmul.f32 %v1725, %v615
    %v1756 = vmul.f32 %v1710, %v617
    %v1757 = vmul.f32 %v1715, %v619
    %v1758 = vmul.f32 %v1720, %v621
    %v1759 = vmul.f32 %v1725, %v623
    %1776 = vrot.lane.b32.xlu0 %v1728, 96
    %v1777 = vpop.permute.xlu0 %1776
    %1778 = vrot.lane.b32.xlu0 %v1729, 96
    %v1779 = vpop.permute.xlu0 %1778
    %1780 = vrot.lane.b32.xlu0 %v1730, 96
    %v1781 = vpop.permute.xlu0 %1780
    %1782 = vrot.lane.b32.xlu0 %v1731, 96
    %v1783 = vpop.permute.xlu0 %1782
    %1784 = vrot.lane.b32.xlu0 %v1732, 96
    %v1785 = vpop.permute.xlu0 %1784
    %1786 = vrot.lane.b32.xlu0 %v1733, 96
    %v1787 = vpop.permute.xlu0 %1786
    %1788 = vrot.lane.b32.xlu0 %v1734, 96
    %v1789 = vpop.permute.xlu0 %1788
    %1790 = vrot.lane.b32.xlu0 %v1735, 96
    %v1791 = vpop.permute.xlu0 %1790
    %1792 = vrot.lane.b32.xlu0 %v1736, 96
    %v1793 = vpop.permute.xlu0 %1792
    %1794 = vrot.lane.b32.xlu0 %v1737, 96
    %v1795 = vpop.permute.xlu0 %1794
    %1796 = vrot.lane.b32.xlu0 %v1738, 96
    %v1797 = vpop.permute.xlu0 %1796
    %1798 = vrot.lane.b32.xlu0 %v1739, 96
    %v1799 = vpop.permute.xlu0 %1798
    %1800 = vrot.lane.b32.xlu0 %v1740, 96
    %v1801 = vpop.permute.xlu0 %1800
    %1802 = vrot.lane.b32.xlu0 %v1741, 96
    %v1803 = vpop.permute.xlu0 %1802
    %1804 = vrot.lane.b32.xlu0 %v1742, 96
    %v1805 = vpop.permute.xlu0 %1804
    %1806 = vrot.lane.b32.xlu0 %v1743, 96
    %v1807 = vpop.permute.xlu0 %1806
    %v1809 = vsel %vm330, %v1710, 0
    %v1812 = vsel %vm330, %v1715, 0
    %v1815 = vsel %vm330, %v1720, 0
    %v1818 = vsel %vm330, %v1725, 0
    %v1820 = vsel %vm330, %v1777, 0
    %v1822 = vsel %vm330, %v1779, 0
    %v1824 = vsel %vm330, %v1781, 0
    %v1826 = vsel %vm330, %v1783, 0
    %v1828 = vsel %vm330, %v1785, 0
    %v1830 = vsel %vm330, %v1787, 0
    %v1832 = vsel %vm330, %v1789, 0
    %v1834 = vsel %vm330, %v1791, 0
    %v1836 = vsel %vm330, %v1793, 0
    %v1838 = vsel %vm330, %v1795, 0
    %v1840 = vsel %vm330, %v1797, 0
    %v1842 = vsel %vm330, %v1799, 0
    %v1844 = vsel %vm330, %v1801, 0
    %v1846 = vsel %vm330, %v1803, 0
    %v1848 = vsel %vm330, %v1805, 0
    %v1850 = vsel %vm330, %v1807, 0
    %1852 = vmatprep.subr.mxu0 0.0
    %1853 = vmatpush1.xpose.msra.mxu0 %v1820
    %1854 = vmatprep.subr.mxu0 0.0
    %1855 = vmatpush1.xpose.msra.mxu0 %v1822
    %1856 = vmatprep.subr.mxu0 0.0
    %1857 = vmatpush1.xpose.msra.mxu0 %v1824
    %1858 = vmatprep.subr.mxu0 0.0
    %1859 = vmatpush1.xpose.msra.mxu0 %v1826
    %1860 = vmatprep.subr.mxu0 0.0
    %1861 = vmatpush1.xpose.msra.mxu0 %v1828
    %1862 = vmatprep.subr.mxu0 0.0
    %1863 = vmatpush1.xpose.msra.mxu0 %v1830
    %1864 = vmatprep.subr.mxu0 0.0
    %1865 = vmatpush1.xpose.msra.mxu0 %v1832
    %1866 = vmatprep.subr.mxu0 0.0
    %1867 = vmatpush1.xpose.msra.mxu0 %v1834
    %1868 = vmatprep.subr.mxu0 0.0
    %1869 = vmatpush1.xpose.msra.mxu0 %v1836
    %1870 = vmatprep.subr.mxu0 0.0
    %1871 = vmatpush1.xpose.msra.mxu0 %v1838
    %1872 = vmatprep.subr.mxu0 0.0
    %1873 = vmatpush1.xpose.msra.mxu0 %v1840
    %1874 = vmatprep.subr.mxu0 0.0
    %1875 = vmatpush1.xpose.msra.mxu0 %v1842
    %1876 = vmatprep.subr.mxu0 0.0
    %1877 = vmatpush1.xpose.msra.mxu0 %v1844
    %1878 = vmatprep.subr.mxu0 0.0
    %1879 = vmatpush1.xpose.msra.mxu0 %v1846
    %1880 = vmatprep.subr.mxu0 0.0
    %1881 = vmatpush1.xpose.msra.mxu0 %v1848
    %1882 = vmatprep.subr.mxu0 0.0
    %1883 = vmatpush1.xpose.msra.mxu0 %v1850
    %1884 = vmatprep.subr.mxu0 0.0
    %1885 = vmatpush1.xpose.msra.mxu0 0.0
    %1886 = vmatprep.subr.mxu0 0.0
    %1887 = vmatpush1.xpose.msra.mxu0 0.0
    %1888 = vmatprep.subr.mxu0 0.0
    %1889 = vmatpush1.xpose.msra.mxu0 0.0
    %1890 = vmatprep.subr.mxu0 0.0
    %1891 = vmatpush1.xpose.msra.mxu0 0.0
    %1892 = vmatprep.subr.mxu0 0.0
    %1893 = vmatpush1.xpose.msra.mxu0 0.0
    %1894 = vmatprep.subr.mxu0 0.0
    %1895 = vmatpush1.xpose.msra.mxu0 0.0
    %1896 = vmatprep.subr.mxu0 0.0
    %1897 = vmatpush1.xpose.msra.mxu0 0.0
    %1898 = vmatprep.subr.mxu0 0.0
    %1899 = vmatpush1.xpose.msra.mxu0 0.0
    %1900 = vmatprep.subr.mxu0 0.0
    %1901 = vmatpush1.xpose.msra.mxu0 0.0
    %1902 = vmatprep.subr.mxu0 0.0
    %1903 = vmatpush1.xpose.msra.mxu0 0.0
    %1904 = vmatprep.subr.mxu0 0.0
    %1905 = vmatpush1.xpose.msra.mxu0 0.0
    %1906 = vmatprep.subr.mxu0 0.0
    %1907 = vmatpush1.xpose.msra.mxu0 0.0
    %1908 = vmatprep.subr.mxu0 0.0
    %1909 = vmatpush1.xpose.msra.mxu0 0.0
    %1910 = vmatprep.subr.mxu0 0.0
    %1911 = vmatpush1.xpose.msra.mxu0 0.0
    %1912 = vmatprep.subr.mxu0 0.0
    %1913 = vmatpush1.xpose.msra.mxu0 0.0
    %1914 = vmatprep.subr.mxu0 0.0
    %1915 = vmatpush1.xpose.msra.mxu0 0.0
    %1916 = vmatprep.mubr.f32.mxu0 0.0
    %1917 = vmatmul.mubr.f32.gmra.mrb[0].mxu0 %v1809
    %v1918 = vpop.f32.mrb[0].mxu0
    %v1919 = vadd.f32 %v292, %v1918
    %v1920 = vpop.f32.mrb[0].mxu0
    %1921 = vmatprep.mubr.f32.mxu0 0.0
    %1922 = vmatmul.mubr.f32.gmra.mrb[0].mxu0 %v1812
    %v1923 = vpop.f32.mrb[0].mxu0
    %v1924 = vadd.f32 %v293, %v1923
    %v1925 = vpop.f32.mrb[0].mxu0
    %1926 = vmatprep.mubr.f32.mxu0 0.0
    %1927 = vmatmul.mubr.f32.gmra.mrb[0].mxu0 %v1815
    %v1928 = vpop.f32.mrb[0].mxu0
    %v1929 = vadd.f32 %v294, %v1928
    %v1930 = vpop.f32.mrb[0].mxu0
    %1931 = vmatprep.mubr.f32.mxu0 0.0
    %1932 = vmatmul.mubr.f32.gmra.mrb[0].mxu0 %v1818
    %v1933 = vpop.f32.mrb[0].mxu0
    %v1934 = vadd.f32 %v295, %v1933
    %v1935 = vpop.f32.mrb[0].mxu0
    %1936 = vdwg.mxu0
    %1937 = vmax.xlane.f32.xlu0 %v1919
    %v1938 = vpop.xlane.xlu0 %1937
    %1939 = vmax.xlane.f32.xlu0 %v1924
    %v1940 = vpop.xlane.xlu0 %1939
    %1941 = vmax.xlane.f32.xlu0 %v1929
    %v1942 = vpop.xlane.xlu0 %1941
    %1943 = vmax.xlane.f32.xlu0 %v1934
    %v1944 = vpop.xlane.xlu0 %1943
    %v1945 = vsub.f32 %v1919, %v1938
    %v1946 = vsub.f32 %v1924, %v1940
    %v1947 = vsub.f32 %v1929, %v1942
    %v1948 = vsub.f32 %v1934, %v1944
    %v1949 = vmul.f32 %v1945, 1.442695
    %v1950 = vpow.pop %v1949
    %v1951 = vmul.f32 %v1946, 1.442695
    %v1952 = vpow.pop %v1951
    %v1953 = vmul.f32 %v1947, 1.442695
    %v1954 = vpow.pop %v1953
    %v1955 = vmul.f32 %v1948, 1.442695
    %v1956 = vpow.pop %v1955
    %1957 = vmatprep.subr.mxu0 0.0
    %1958 = vmatpush1.msra.mxu0 %v312
    %1959 = vmatprep.subr.mxu0 0.0
    %1960 = vmatpush1.msra.mxu0 %v313
    %1961 = vmatprep.subr.mxu0 0.0
    %1962 = vmatpush1.msra.mxu0 %v314
    %1963 = vmatprep.subr.mxu0 0.0
    %1964 = vmatpush1.msra.mxu0 %v315
    %1965 = vmatprep.subr.mxu0 0.0
    %1966 = vmatpush1.msra.mxu0 %v316
    %1967 = vmatprep.subr.mxu0 0.0
    %1968 = vmatpush1.msra.mxu0 %v317
    %1969 = vmatprep.subr.mxu0 0.0
    %1970 = vmatpush1.msra.mxu0 %v318
    %1971 = vmatprep.subr.mxu0 0.0
    %1972 = vmatpush1.msra.mxu0 %v319
    %1973 = vmatprep.subr.mxu0 0.0
    %1974 = vmatpush1.msra.mxu0 %v320
    %1975 = vmatprep.subr.mxu0 0.0
    %1976 = vmatpush1.msra.mxu0 %v321
    %1977 = vmatprep.subr.mxu0 0.0
    %1978 = vmatpush1.msra.mxu0 %v322
    %1979 = vmatprep.subr.mxu0 0.0
    %1980 = vmatpush1.msra.mxu0 %v323
    %1981 = vmatprep.subr.mxu0 0.0
    %1982 = vmatpush1.msra.mxu0 %v324
    %1983 = vmatprep.subr.mxu0 0.0
    %1984 = vmatpush1.msra.mxu0 %v325
    %1985 = vmatprep.subr.mxu0 0.0
    %1986 = vmatpush1.msra.mxu0 %v326
    %1987 = vmatprep.subr.mxu0 0.0
    %1988 = vmatpush1.msra.mxu0 %v327
    %1989 = vmatprep.subr.mxu0 0.0
    %1990 = vmatpush1.msra.mxu0 0.0
    %1991 = vmatprep.subr.mxu0 0.0
    %1992 = vmatpush1.msra.mxu0 0.0
    %1993 = vmatprep.subr.mxu0 0.0
    %1994 = vmatpush1.msra.mxu0 0.0
    %1995 = vmatprep.subr.mxu0 0.0
    %1996 = vmatpush1.msra.mxu0 0.0
    %1997 = vmatprep.subr.mxu0 0.0
    %1998 = vmatpush1.msra.mxu0 0.0
    %1999 = vmatprep.subr.mxu0 0.0
    %2000 = vmatpush1.msra.mxu0 0.0
    %2001 = vmatprep.subr.mxu0 0.0
    %2002 = vmatpush1.msra.mxu0 0.0
    %2003 = vmatprep.subr.mxu0 0.0
    %2004 = vmatpush1.msra.mxu0 0.0
    %2005 = vmatprep.subr.mxu0 0.0
    %2006 = vmatpush1.msra.mxu0 0.0
    %2007 = vmatprep.subr.mxu0 0.0
    %2008 = vmatpush1.msra.mxu0 0.0
    %2009 = vmatprep.subr.mxu0 0.0
    %2010 = vmatpush1.msra.mxu0 0.0
    %2011 = vmatprep.subr.mxu0 0.0
    %2012 = vmatpush1.msra.mxu0 0.0
    %2013 = vmatprep.subr.mxu0 0.0
    %2014 = vmatpush1.msra.mxu0 0.0
    %2015 = vmatprep.subr.mxu0 0.0
    %2016 = vmatpush1.msra.mxu0 0.0
    %2017 = vmatprep.subr.mxu0 0.0
    %2018 = vmatpush1.msra.mxu0 0.0
    %2019 = vmatprep.subr.mxu0 0.0
    %2020 = vmatpush1.msra.mxu0 0.0
    %2021 = vmatprep.mubr.f32.mxu0 0.0
    %2022 = vmatmul.mubr.f32.gmra.mrb[0].mxu0 %v1950
    %v2023 = vpop.f32.mrb[0].mxu0
    %v2024 = vadd.f32 0.0, %v2023
    %v2025 = vpop.f32.mrb[0].mxu0
    %2026 = vmatprep.mubr.f32.mxu0 0.0
    %2027 = vmatmul.mubr.f32.gmra.mrb[0].mxu0 %v1952
    %v2028 = vpop.f32.mrb[0].mxu0
    %v2029 = vadd.f32 0.0, %v2028
    %v2030 = vpop.f32.mrb[0].mxu0
    %2031 = vmatprep.mubr.f32.mxu0 0.0
    %2032 = vmatmul.mubr.f32.gmra.mrb[0].mxu0 %v1954
    %v2033 = vpop.f32.mrb[0].mxu0
    %v2034 = vadd.f32 0.0, %v2033
    %v2035 = vpop.f32.mrb[0].mxu0
    %2036 = vmatprep.mubr.f32.mxu0 0.0
    %2037 = vmatmul.mubr.f32.gmra.mrb[0].mxu0 %v1956
    %v2038 = vpop.f32.mrb[0].mxu0
    %v2039 = vadd.f32 0.0, %v2038
    %v2040 = vpop.f32.mrb[0].mxu0
    %2041 = vdwg.mxu0
    %v2042 = vrcp.pop %v2024
    %v2043 = vmul.f32 %v1950, %v2042
    %v2044 = vrcp.pop %v2029
    %v2045 = vmul.f32 %v1952, %v2044
    %v2046 = vrcp.pop %v2034
    %v2047 = vmul.f32 %v1954, %v2046
    %v2048 = vrcp.pop %v2039
    %v2049 = vmul.f32 %v1956, %v2048
    %2066 = vrot.lane.b32.xlu0 %v1744, 64
    %v2067 = vpop.permute.xlu0 %2066
    %2068 = vrot.lane.b32.xlu0 %v1745, 64
    %v2069 = vpop.permute.xlu0 %2068
    %2070 = vrot.lane.b32.xlu0 %v1746, 64
    %v2071 = vpop.permute.xlu0 %2070
    %2072 = vrot.lane.b32.xlu0 %v1747, 64
    %v2073 = vpop.permute.xlu0 %2072
    %2074 = vrot.lane.b32.xlu0 %v1748, 64
    %v2075 = vpop.permute.xlu0 %2074
    %2076 = vrot.lane.b32.xlu0 %v1749, 64
    %v2077 = vpop.permute.xlu0 %2076
    %2078 = vrot.lane.b32.xlu0 %v1750, 64
    %v2079 = vpop.permute.xlu0 %2078
    %2080 = vrot.lane.b32.xlu0 %v1751, 64
    %v2081 = vpop.permute.xlu0 %2080
    %2082 = vrot.lane.b32.xlu0 %v1752, 64
    %v2083 = vpop.permute.xlu0 %2082
    %2084 = vrot.lane.b32.xlu0 %v1753, 64
    %v2085 = vpop.permute.xlu0 %2084
    %2086 = vrot.lane.b32.xlu0 %v1754, 64
    %v2087 = vpop.permute.xlu0 %2086
    %2088 = vrot.lane.b32.xlu0 %v1755, 64
    %v2089 = vpop.permute.xlu0 %2088
    %2090 = vrot.lane.b32.xlu0 %v1756, 64
    %v2091 = vpop.permute.xlu0 %2090
    %2092 = vrot.lane.b32.xlu0 %v1757, 64
    %v2093 = vpop.permute.xlu0 %2092
    %2094 = vrot.lane.b32.xlu0 %v1758, 64
    %v2095 = vpop.permute.xlu0 %2094
    %2096 = vrot.lane.b32.xlu0 %v1759, 64
    %v2097 = vpop.permute.xlu0 %2096
    %2114 = vmatprep.subr.mxu0 0.0
    %2115 = vmatpush1.msra.mxu0 %v2067
    %2116 = vmatprep.subr.mxu0 0.0
    %2117 = vmatpush1.msra.mxu0 %v2069
    %2118 = vmatprep.subr.mxu0 0.0
    %2119 = vmatpush1.msra.mxu0 %v2071
    %2120 = vmatprep.subr.mxu0 0.0
    %2121 = vmatpush1.msra.mxu0 %v2073
    %2122 = vmatprep.subr.mxu0 0.0
    %2123 = vmatpush1.msra.mxu0 %v2075
    %2124 = vmatprep.subr.mxu0 0.0
    %2125 = vmatpush1.msra.mxu0 %v2077
    %2126 = vmatprep.subr.mxu0 0.0
    %2127 = vmatpush1.msra.mxu0 %v2079
    %2128 = vmatprep.subr.mxu0 0.0
    %2129 = vmatpush1.msra.mxu0 %v2081
    %2130 = vmatprep.subr.mxu0 0.0
    %2131 = vmatpush1.msra.mxu0 %v2083
    %2132 = vmatprep.subr.mxu0 0.0
    %2133 = vmatpush1.msra.mxu0 %v2085
    %2134 = vmatprep.subr.mxu0 0.0
    %2135 = vmatpush1.msra.mxu0 %v2087
    %2136 = vmatprep.subr.mxu0 0.0
    %2137 = vmatpush1.msra.mxu0 %v2089
    %2138 = vmatprep.subr.mxu0 0.0
    %2139 = vmatpush1.msra.mxu0 %v2091
    %2140 = vmatprep.subr.mxu0 0.0
    %2141 = vmatpush1.msra.mxu0 %v2093
    %2142 = vmatprep.subr.mxu0 0.0
    %2143 = vmatpush1.msra.mxu0 %v2095
    %2144 = vmatprep.subr.mxu0 0.0
    %2145 = vmatpush1.msra.mxu0 %v2097
    %2146 = vmatprep.subr.mxu0 0.0
    %2147 = vmatpush1.msra.mxu0 0.0
    %2148 = vmatprep.subr.mxu0 0.0
    %2149 = vmatpush1.msra.mxu0 0.0
    %2150 = vmatprep.subr.mxu0 0.0
    %2151 = vmatpush1.msra.mxu0 0.0
    %2152 = vmatprep.subr.mxu0 0.0
    %2153 = vmatpush1.msra.mxu0 0.0
    %2154 = vmatprep.subr.mxu0 0.0
    %2155 = vmatpush1.msra.mxu0 0.0
    %2156 = vmatprep.subr.mxu0 0.0
    %2157 = vmatpush1.msra.mxu0 0.0
    %2158 = vmatprep.subr.mxu0 0.0
    %2159 = vmatpush1.msra.mxu0 0.0
    %2160 = vmatprep.subr.mxu0 0.0
    %2161 = vmatpush1.msra.mxu0 0.0
    %2162 = vmatprep.subr.mxu0 0.0
    %2163 = vmatpush1.msra.mxu0 0.0
    %2164 = vmatprep.subr.mxu0 0.0
    %2165 = vmatpush1.msra.mxu0 0.0
    %2166 = vmatprep.subr.mxu0 0.0
    %2167 = vmatpush1.msra.mxu0 0.0
    %2168 = vmatprep.subr.mxu0 0.0
    %2169 = vmatpush1.msra.mxu0 0.0
    %2170 = vmatprep.subr.mxu0 0.0
    %2171 = vmatpush1.msra.mxu0 0.0
    %2172 = vmatprep.subr.mxu0 0.0
    %2173 = vmatpush1.msra.mxu0 0.0
    %2174 = vmatprep.subr.mxu0 0.0
    %2175 = vmatpush1.msra.mxu0 0.0
    %2176 = vmatprep.subr.mxu0 0.0
    %2177 = vmatpush1.msra.mxu0 0.0
    %2178 = vmatprep.mubr.f32.mxu0 0.0
    %2179 = vmatmul.mubr.f32.gmra.mrb[0].mxu0 %v2043
    %v2180 = vpop.f32.mrb[0].mxu0
    %v2181 = vadd.f32 0.0, %v2180
    %v2182 = vpop.f32.mrb[0].mxu0
    %2183 = vmatprep.mubr.f32.mxu0 0.0
    %2184 = vmatmul.mubr.f32.gmra.mrb[0].mxu0 %v2045
    %v2185 = vpop.f32.mrb[0].mxu0
    %v2186 = vadd.f32 0.0, %v2185
    %v2187 = vpop.f32.mrb[0].mxu0
    %2188 = vmatprep.mubr.f32.mxu0 0.0
    %2189 = vmatmul.mubr.f32.gmra.mrb[0].mxu0 %v2047
    %v2190 = vpop.f32.mrb[0].mxu0
    %v2191 = vadd.f32 0.0, %v2190
    %v2192 = vpop.f32.mrb[0].mxu0
    %2193 = vmatprep.mubr.f32.mxu0 0.0
    %2194 = vmatmul.mubr.f32.gmra.mrb[0].mxu0 %v2049
    %v2195 = vpop.f32.mrb[0].mxu0
    %v2196 = vadd.f32 0.0, %v2195
    %v2197 = vpop.f32.mrb[0].mxu0
    %2198 = vdwg.mxu0
    %s2199 = scalar_lea.vmem %s15, 32
    %v2200 = vld [vmem:[%s2199] sm:$0xff]
    %v2201 = vld [vmem:[%s2199 + $0x8] sm:$0xff]
    %v2202 = vld [vmem:[%s2199 + $0x10] sm:$0xff]
    %v2203 = vld [vmem:[%s2199 + $0x18] sm:$0xff]
    %s2204 = scalar_lea.vmem %s16, 1
    %v2205 = vld [vmem:[%s2204] sm:$0x1]
    %v2207 = vlaneseq
    %v2208 = vshrl.u32 %v2207, 7
    %v2209 = vsub.s32 0, %v2208
    %v2210 = vrot.slane %v2205, %v2209
    %v2213 = vsel %vm330, %v2181, 0
    %v2216 = vsel %vm330, %v2186, 0
    %v2219 = vsel %vm330, %v2191, 0
    %v2222 = vsel %vm330, %v2196, 0
    %2224 = vmatprep.subr.mxu0 0.0
    %2225 = vmatpush1.msra.mxu0 %v2200
    %2226 = vmatprep.subr.mxu0 0.0
    %2227 = vmatpush1.msra.mxu0 %v2201
    %2228 = vmatprep.subr.mxu0 0.0
    %2229 = vmatpush1.msra.mxu0 %v2202
    %2230 = vmatprep.subr.mxu0 0.0
    %2231 = vmatpush1.msra.mxu0 %v2203
    %2232 = vmatprep.subr.mxu0 0.0
    %2233 = vmatpush1.msra.mxu0 0.0
    %2234 = vmatprep.subr.mxu0 0.0
    %2235 = vmatpush1.msra.mxu0 0.0
    %2236 = vmatprep.subr.mxu0 0.0
    %2237 = vmatpush1.msra.mxu0 0.0
    %2238 = vmatprep.subr.mxu0 0.0
    %2239 = vmatpush1.msra.mxu0 0.0
    %2240 = vmatprep.subr.mxu0 0.0
    %2241 = vmatpush1.msra.mxu0 0.0
    %2242 = vmatprep.subr.mxu0 0.0
    %2243 = vmatpush1.msra.mxu0 0.0
    %2244 = vmatprep.subr.mxu0 0.0
    %2245 = vmatpush1.msra.mxu0 0.0
    %2246 = vmatprep.subr.mxu0 0.0
    %2247 = vmatpush1.msra.mxu0 0.0
    %2248 = vmatprep.subr.mxu0 0.0
    %2249 = vmatpush1.msra.mxu0 0.0
    %2250 = vmatprep.subr.mxu0 0.0
    %2251 = vmatpush1.msra.mxu0 0.0
    %2252 = vmatprep.subr.mxu0 0.0
    %2253 = vmatpush1.msra.mxu0 0.0
    %2254 = vmatprep.subr.mxu0 0.0
    %2255 = vmatpush1.msra.mxu0 0.0
    %2256 = vmatprep.subr.mxu0 0.0
    %2257 = vmatpush1.msra.mxu0 0.0
    %2258 = vmatprep.subr.mxu0 0.0
    %2259 = vmatpush1.msra.mxu0 0.0
    %2260 = vmatprep.subr.mxu0 0.0
    %2261 = vmatpush1.msra.mxu0 0.0
    %2262 = vmatprep.subr.mxu0 0.0
    %2263 = vmatpush1.msra.mxu0 0.0
    %2264 = vmatprep.subr.mxu0 0.0
    %2265 = vmatpush1.msra.mxu0 0.0
    %2266 = vmatprep.subr.mxu0 0.0
    %2267 = vmatpush1.msra.mxu0 0.0
    %2268 = vmatprep.subr.mxu0 0.0
    %2269 = vmatpush1.msra.mxu0 0.0
    %2270 = vmatprep.subr.mxu0 0.0
    %2271 = vmatpush1.msra.mxu0 0.0
    %2272 = vmatprep.subr.mxu0 0.0
    %2273 = vmatpush1.msra.mxu0 0.0
    %2274 = vmatprep.subr.mxu0 0.0
    %2275 = vmatpush1.msra.mxu0 0.0
    %2276 = vmatprep.subr.mxu0 0.0
    %2277 = vmatpush1.msra.mxu0 0.0
    %2278 = vmatprep.subr.mxu0 0.0
    %2279 = vmatpush1.msra.mxu0 0.0
    %2280 = vmatprep.subr.mxu0 0.0
    %2281 = vmatpush1.msra.mxu0 0.0
    %2282 = vmatprep.subr.mxu0 0.0
    %2283 = vmatpush1.msra.mxu0 0.0
    %2284 = vmatprep.subr.mxu0 0.0
    %2285 = vmatpush1.msra.mxu0 0.0
    %2286 = vmatprep.subr.mxu0 0.0
    %2287 = vmatpush1.msra.mxu0 0.0
    %2288 = vmatprep.mubr.f32.mxu0 0.0
    %2289 = vmatmul.mubr.f32.gmra.mrb[0].mxu0 %v2213
    %v2290 = vpop.f32.mrb[0].mxu0
    %v2291 = vadd.f32 %v2210, %v2290
    %v2292 = vpop.f32.mrb[0].mxu0
    %2293 = vmatprep.mubr.f32.mxu0 0.0
    %2294 = vmatmul.mubr.f32.gmra.mrb[0].mxu0 %v2216
    %v2295 = vpop.f32.mrb[0].mxu0
    %v2296 = vadd.f32 %v2210, %v2295
    %v2297 = vpop.f32.mrb[0].mxu0
    %2298 = vmatprep.mubr.f32.mxu0 0.0
    %2299 = vmatmul.mubr.f32.gmra.mrb[0].mxu0 %v2219
    %v2300 = vpop.f32.mrb[0].mxu0
    %v2301 = vadd.f32 %v2210, %v2300
    %v2302 = vpop.f32.mrb[0].mxu0
    %2303 = vmatprep.mubr.f32.mxu0 0.0
    %2304 = vmatmul.mubr.f32.gmra.mrb[0].mxu0 %v2222
    %v2305 = vpop.f32.mrb[0].mxu0
    %v2306 = vadd.f32 %v2210, %v2305
    %v2307 = vpop.f32.mrb[0].mxu0
    %2308 = vdwg.mxu0
    %v2309 = vadd.f32 %v1538, %v2291
    %v2310 = vadd.f32 %v1539, %v2296
    %v2311 = vadd.f32 %v1540, %v2301
    %v2312 = vadd.f32 %v1541, %v2306
    %s2313 = scalar_lea.vmem %s17, 1
    %v2314 = vld [vmem:[%s2313] sm:$0x1]
    %s2315 = scalar_lea.vmem %s18, 1
    %v2316 = vld [vmem:[%s2315] sm:$0x1]
    %v2317 = vsel %vm330, %v2309, 0.0
    %2318 = vadd.xlane.f32.xlu0 %v2317
    %v2319 = vpop.xlane.xlu0 %2318
    %v2320 = vsel %vm330, %v2310, 0.0
    %2321 = vadd.xlane.f32.xlu0 %v2320
    %v2322 = vpop.xlane.xlu0 %2321
    %v2323 = vsel %vm330, %v2311, 0.0
    %2324 = vadd.xlane.f32.xlu0 %v2323
    %v2325 = vpop.xlane.xlu0 %2324
    %v2326 = vsel %vm330, %v2312, 0.0
    %2327 = vadd.xlane.f32.xlu0 %v2326
    %v2328 = vpop.xlane.xlu0 %2327
    %v2329 = vmul.f32 %v2319, %v343
    %v2330 = vmul.f32 %v2322, %v343
    %v2331 = vmul.f32 %v2325, %v343
    %v2332 = vmul.f32 %v2328, %v343
    %v2333 = vsub.f32 %v2309, %v2329
    %v2334 = vsub.f32 %v2310, %v2330
    %v2335 = vsub.f32 %v2311, %v2331
    %v2336 = vsub.f32 %v2312, %v2332
    %v2337 = vmul.f32 %v2333, %v2333
    %v2338 = vmul.f32 %v2334, %v2334
    %v2339 = vmul.f32 %v2335, %v2335
    %v2340 = vmul.f32 %v2336, %v2336
    %v2341 = vsel %vm330, %v2337, 0.0
    %2342 = vadd.xlane.f32.xlu0 %v2341
    %v2343 = vpop.xlane.xlu0 %2342
    %v2344 = vsel %vm330, %v2338, 0.0
    %2345 = vadd.xlane.f32.xlu0 %v2344
    %v2346 = vpop.xlane.xlu0 %2345
    %v2347 = vsel %vm330, %v2339, 0.0
    %2348 = vadd.xlane.f32.xlu0 %v2347
    %v2349 = vpop.xlane.xlu0 %2348
    %v2350 = vsel %vm330, %v2340, 0.0
    %2351 = vadd.xlane.f32.xlu0 %v2350
    %v2352 = vpop.xlane.xlu0 %2351
    %v2353 = vmul.f32 %v2343, %v343
    %v2354 = vmul.f32 %v2346, %v343
    %v2355 = vmul.f32 %v2349, %v343
    %v2356 = vmul.f32 %v2352, %v343
    %v2357 = vadd.f32 %v2353, 1e-05
    %v2358 = vadd.f32 %v2354, 1e-05
    %v2359 = vadd.f32 %v2355, 1e-05
    %v2360 = vadd.f32 %v2356, 1e-05
    %v2361 = vrsqrt.pop %v2357
    %v2362 = vrsqrt.pop %v2358
    %v2363 = vrsqrt.pop %v2359
    %v2364 = vrsqrt.pop %v2360
    %v2365 = vmul.f32 %v2333, %v2361
    %v2366 = vmul.f32 %v2334, %v2362
    %v2367 = vmul.f32 %v2335, %v2363
    %v2368 = vmul.f32 %v2336, %v2364
    %v2370 = vlaneseq
    %v2371 = vshrl.u32 %v2370, 7
    %v2372 = vsub.s32 0, %v2371
    %v2373 = vrot.slane %v2314, %v2372
    %v2375 = vmul.f32 %v2365, %v2373
    %v2376 = vmul.f32 %v2366, %v2373
    %v2377 = vmul.f32 %v2367, %v2373
    %v2378 = vmul.f32 %v2368, %v2373
    %v2380 = vlaneseq
    %v2381 = vshrl.u32 %v2380, 7
    %v2382 = vsub.s32 0, %v2381
    %v2383 = vrot.slane %v2316, %v2382
    %v2385 = vadd.f32 %v2375, %v2383
    %v2386 = vadd.f32 %v2376, %v2383
    %v2387 = vadd.f32 %v2377, %v2383
    %v2388 = vadd.f32 %v2378, %v2383
    %s2389 = scalar_lea.vmem %s19, 32
    %v2390 = vld [vmem:[%s2389] sm:$0xff]
    %v2391 = vld [vmem:[%s2389 + $0x8] sm:$0xff]
    %v2392 = vld [vmem:[%s2389 + $0x10] sm:$0xff]
    %v2393 = vld [vmem:[%s2389 + $0x18] sm:$0xff]
    %s2394 = scalar_lea.vmem %s20, 1
    %v2395 = vld [vmem:[%s2394] sm:$0x1]
    %v2397 = vlaneseq
    %v2398 = vshrl.u32 %v2397, 7
    %v2399 = vsub.s32 0, %v2398
    %v2400 = vrot.slane %v2395, %v2399
    %v2403 = vsel %vm330, %v2385, 0
    %v2406 = vsel %vm330, %v2386, 0
    %v2409 = vsel %vm330, %v2387, 0
    %v2412 = vsel %vm330, %v2388, 0
    %2414 = vmatprep.subr.mxu0 0.0
    %2415 = vmatpush1.msra.mxu0 %v2390
    %2416 = vmatprep.subr.mxu0 0.0
    %2417 = vmatpush1.msra.mxu0 %v2391
    %2418 = vmatprep.subr.mxu0 0.0
    %2419 = vmatpush1.msra.mxu0 %v2392
    %2420 = vmatprep.subr.mxu0 0.0
    %2421 = vmatpush1.msra.mxu0 %v2393
    %2422 = vmatprep.subr.mxu0 0.0
    %2423 = vmatpush1.msra.mxu0 0.0
    %2424 = vmatprep.subr.mxu0 0.0
    %2425 = vmatpush1.msra.mxu0 0.0
    %2426 = vmatprep.subr.mxu0 0.0
    %2427 = vmatpush1.msra.mxu0 0.0
    %2428 = vmatprep.subr.mxu0 0.0
    %2429 = vmatpush1.msra.mxu0 0.0
    %2430 = vmatprep.subr.mxu0 0.0
    %2431 = vmatpush1.msra.mxu0 0.0
    %2432 = vmatprep.subr.mxu0 0.0
    %2433 = vmatpush1.msra.mxu0 0.0
    %2434 = vmatprep.subr.mxu0 0.0
    %2435 = vmatpush1.msra.mxu0 0.0
    %2436 = vmatprep.subr.mxu0 0.0
    %2437 = vmatpush1.msra.mxu0 0.0
    %2438 = vmatprep.subr.mxu0 0.0
    %2439 = vmatpush1.msra.mxu0 0.0
    %2440 = vmatprep.subr.mxu0 0.0
    %2441 = vmatpush1.msra.mxu0 0.0
    %2442 = vmatprep.subr.mxu0 0.0
    %2443 = vmatpush1.msra.mxu0 0.0
    %2444 = vmatprep.subr.mxu0 0.0
    %2445 = vmatpush1.msra.mxu0 0.0
    %2446 = vmatprep.subr.mxu0 0.0
    %2447 = vmatpush1.msra.mxu0 0.0
    %2448 = vmatprep.subr.mxu0 0.0
    %2449 = vmatpush1.msra.mxu0 0.0
    %2450 = vmatprep.subr.mxu0 0.0
    %2451 = vmatpush1.msra.mxu0 0.0
    %2452 = vmatprep.subr.mxu0 0.0
    %2453 = vmatpush1.msra.mxu0 0.0
    %2454 = vmatprep.subr.mxu0 0.0
    %2455 = vmatpush1.msra.mxu0 0.0
    %2456 = vmatprep.subr.mxu0 0.0
    %2457 = vmatpush1.msra.mxu0 0.0
    %2458 = vmatprep.subr.mxu0 0.0
    %2459 = vmatpush1.msra.mxu0 0.0
    %2460 = vmatprep.subr.mxu0 0.0
    %2461 = vmatpush1.msra.mxu0 0.0
    %2462 = vmatprep.subr.mxu0 0.0
    %2463 = vmatpush1.msra.mxu0 0.0
    %2464 = vmatprep.subr.mxu0 0.0
    %2465 = vmatpush1.msra.mxu0 0.0
    %2466 = vmatprep.subr.mxu0 0.0
    %2467 = vmatpush1.msra.mxu0 0.0
    %2468 = vmatprep.subr.mxu0 0.0
    %2469 = vmatpush1.msra.mxu0 0.0
    %2470 = vmatprep.subr.mxu0 0.0
    %2471 = vmatpush1.msra.mxu0 0.0
    %2472 = vmatprep.subr.mxu0 0.0
    %2473 = vmatpush1.msra.mxu0 0.0
    %2474 = vmatprep.subr.mxu0 0.0
    %2475 = vmatpush1.msra.mxu0 0.0
    %2476 = vmatprep.subr.mxu0 0.0
    %2477 = vmatpush1.msra.mxu0 0.0
    %2478 = vmatprep.mubr.f32.mxu0 0.0
    %2479 = vmatmul.mubr.f32.gmra.mrb[0].mxu0 %v2403
    %v2480 = vpop.f32.mrb[0].mxu0
    %v2481 = vadd.f32 %v2400, %v2480
    %v2482 = vpop.f32.mrb[0].mxu0
    %2483 = vmatprep.mubr.f32.mxu0 0.0
    %2484 = vmatmul.mubr.f32.gmra.mrb[0].mxu0 %v2406
    %v2485 = vpop.f32.mrb[0].mxu0
    %v2486 = vadd.f32 %v2400, %v2485
    %v2487 = vpop.f32.mrb[0].mxu0
    %2488 = vmatprep.mubr.f32.mxu0 0.0
    %2489 = vmatmul.mubr.f32.gmra.mrb[0].mxu0 %v2409
    %v2490 = vpop.f32.mrb[0].mxu0
    %v2491 = vadd.f32 %v2400, %v2490
    %v2492 = vpop.f32.mrb[0].mxu0
    %2493 = vmatprep.mubr.f32.mxu0 0.0
    %2494 = vmatmul.mubr.f32.gmra.mrb[0].mxu0 %v2412
    %v2495 = vpop.f32.mrb[0].mxu0
    %v2496 = vadd.f32 %v2400, %v2495
    %v2497 = vpop.f32.mrb[0].mxu0
    %2498 = vdwg.mxu0
    %v2499 = vmul.f32 %v2481, %v2481
    %v2500 = vmul.f32 %v2486, %v2486
    %v2501 = vmul.f32 %v2491, %v2491
    %v2502 = vmul.f32 %v2496, %v2496
    %v2503 = vmul.f32 %v2481, %v2499
    %v2504 = vmul.f32 %v2486, %v2500
    %v2505 = vmul.f32 %v2491, %v2501
    %v2506 = vmul.f32 %v2496, %v2502
    %v2507 = vmul.f32 %v2503, 0.044715
    %v2508 = vmul.f32 %v2504, 0.044715
    %v2509 = vmul.f32 %v2505, 0.044715
    %v2510 = vmul.f32 %v2506, 0.044715
    %v2511 = vadd.f32 %v2481, %v2507
    %v2512 = vadd.f32 %v2486, %v2508
    %v2513 = vadd.f32 %v2491, %v2509
    %v2514 = vadd.f32 %v2496, %v2510
    %v2515 = vmul.f32 %v2511, 0.7978846
    %v2516 = vmul.f32 %v2512, 0.7978846
    %v2517 = vmul.f32 %v2513, 0.7978846
    %v2518 = vmul.f32 %v2514, 0.7978846
    %v2519 = vtanh.pop %v2515
    %v2520 = vtanh.pop %v2516
    %v2521 = vtanh.pop %v2517
    %v2522 = vtanh.pop %v2518
    %v2523 = vadd.f32 %v2519, 1.0
    %v2524 = vadd.f32 %v2520, 1.0
    %v2525 = vadd.f32 %v2521, 1.0
    %v2526 = vadd.f32 %v2522, 1.0
    %v2527 = vmul.f32 %v2523, 0.5
    %v2528 = vmul.f32 %v2524, 0.5
    %v2529 = vmul.f32 %v2525, 0.5
    %v2530 = vmul.f32 %v2526, 0.5
    %v2531 = vmul.f32 %v2481, %v2527
    %v2532 = vmul.f32 %v2486, %v2528
    %v2533 = vmul.f32 %v2491, %v2529
    %v2534 = vmul.f32 %v2496, %v2530
    %s2535 = scalar_lea.vmem %s21, 64
    %v2536 = vld [vmem:[%s2535] sm:$0xff]
    %v2537 = vld [vmem:[%s2535 + $0x8] sm:$0xff]
    %v2538 = vld [vmem:[%s2535 + $0x10] sm:$0xff]
    %v2539 = vld [vmem:[%s2535 + $0x18] sm:$0xff]
    %v2540 = vld [vmem:[%s2535 + $0x20] sm:$0xff]
    %v2541 = vld [vmem:[%s2535 + $0x28] sm:$0xff]
    %v2542 = vld [vmem:[%s2535 + $0x30] sm:$0xff]
    %v2543 = vld [vmem:[%s2535 + $0x38] sm:$0xff]
    %s2544 = scalar_lea.vmem %s22, 1
    %v2545 = vld [vmem:[%s2544] sm:$0x1]
    %v2547 = vlaneseq
    %v2548 = vshrl.u32 %v2547, 7
    %v2549 = vsub.s32 0, %v2548
    %v2550 = vrot.slane %v2545, %v2549
    %v2553 = vsel %vm1440, %v2531, 0
    %v2556 = vsel %vm1440, %v2532, 0
    %v2559 = vsel %vm1440, %v2533, 0
    %v2562 = vsel %vm1440, %v2534, 0
    %2564 = vmatprep.subr.mxu0 0.0
    %2565 = vmatpush1.msra.mxu0 %v2536
    %2566 = vmatprep.subr.mxu0 0.0
    %2567 = vmatpush1.msra.mxu0 %v2537
    %2568 = vmatprep.subr.mxu0 0.0
    %2569 = vmatpush1.msra.mxu0 %v2538
    %2570 = vmatprep.subr.mxu0 0.0
    %2571 = vmatpush1.msra.mxu0 %v2539
    %2572 = vmatprep.subr.mxu0 0.0
    %2573 = vmatpush1.msra.mxu0 %v2540
    %2574 = vmatprep.subr.mxu0 0.0
    %2575 = vmatpush1.msra.mxu0 %v2541
    %2576 = vmatprep.subr.mxu0 0.0
    %2577 = vmatpush1.msra.mxu0 %v2542
    %2578 = vmatprep.subr.mxu0 0.0
    %2579 = vmatpush1.msra.mxu0 %v2543
    %2580 = vmatprep.subr.mxu0 0.0
    %2581 = vmatpush1.msra.mxu0 0.0
    %2582 = vmatprep.subr.mxu0 0.0
    %2583 = vmatpush1.msra.mxu0 0.0
    %2584 = vmatprep.subr.mxu0 0.0
    %2585 = vmatpush1.msra.mxu0 0.0
    %2586 = vmatprep.subr.mxu0 0.0
    %2587 = vmatpush1.msra.mxu0 0.0
    %2588 = vmatprep.subr.mxu0 0.0
    %2589 = vmatpush1.msra.mxu0 0.0
    %2590 = vmatprep.subr.mxu0 0.0
    %2591 = vmatpush1.msra.mxu0 0.0
    %2592 = vmatprep.subr.mxu0 0.0
    %2593 = vmatpush1.msra.mxu0 0.0
    %2594 = vmatprep.subr.mxu0 0.0
    %2595 = vmatpush1.msra.mxu0 0.0
    %2596 = vmatprep.subr.mxu0 0.0
    %2597 = vmatpush1.msra.mxu0 0.0
    %2598 = vmatprep.subr.mxu0 0.0
    %2599 = vmatpush1.msra.mxu0 0.0
    %2600 = vmatprep.subr.mxu0 0.0
    %2601 = vmatpush1.msra.mxu0 0.0
    %2602 = vmatprep.subr.mxu0 0.0
    %2603 = vmatpush1.msra.mxu0 0.0
    %2604 = vmatprep.subr.mxu0 0.0
    %2605 = vmatpush1.msra.mxu0 0.0
    %2606 = vmatprep.subr.mxu0 0.0
    %2607 = vmatpush1.msra.mxu0 0.0
    %2608 = vmatprep.subr.mxu0 0.0
    %2609 = vmatpush1.msra.mxu0 0.0
    %2610 = vmatprep.subr.mxu0 0.0
    %2611 = vmatpush1.msra.mxu0 0.0
    %2612 = vmatprep.subr.mxu0 0.0
    %2613 = vmatpush1.msra.mxu0 0.0
    %2614 = vmatprep.subr.mxu0 0.0
    %2615 = vmatpush1.msra.mxu0 0.0
    %2616 = vmatprep.subr.mxu0 0.0
    %2617 = vmatpush1.msra.mxu0 0.0
    %2618 = vmatprep.subr.mxu0 0.0
    %2619 = vmatpush1.msra.mxu0 0.0
    %2620 = vmatprep.subr.mxu0 0.0
    %2621 = vmatpush1.msra.mxu0 0.0
    %2622 = vmatprep.subr.mxu0 0.0
    %2623 = vmatpush1.msra.mxu0 0.0
    %2624 = vmatprep.subr.mxu0 0.0
    %2625 = vmatpush1.msra.mxu0 0.0
    %2626 = vmatprep.subr.mxu0 0.0
    %2627 = vmatpush1.msra.mxu0 0.0
    %2628 = vmatprep.mubr.f32.mxu0 0.0
    %2629 = vmatmul.mubr.f32.gmra.mrb[0].mxu0 %v2553
    %v2630 = vpop.f32.mrb[0].mxu0
    %v2631 = vadd.f32 %v2550, %v2630
    %v2632 = vpop.f32.mrb[0].mxu0
    %2633 = vmatprep.mubr.f32.mxu0 0.0
    %2634 = vmatmul.mubr.f32.gmra.mrb[0].mxu0 %v2556
    %v2635 = vpop.f32.mrb[0].mxu0
    %v2636 = vadd.f32 %v2550, %v2635
    %v2637 = vpop.f32.mrb[0].mxu0
    %2638 = vmatprep.mubr.f32.mxu0 0.0
    %2639 = vmatmul.mubr.f32.gmra.mrb[0].mxu0 %v2559
    %v2640 = vpop.f32.mrb[0].mxu0
    %v2641 = vadd.f32 %v2550, %v2640
    %v2642 = vpop.f32.mrb[0].mxu0
    %2643 = vmatprep.mubr.f32.mxu0 0.0
    %2644 = vmatmul.mubr.f32.gmra.mrb[0].mxu0 %v2562
    %v2645 = vpop.f32.mrb[0].mxu0
    %v2646 = vadd.f32 %v2550, %v2645
    %v2647 = vpop.f32.mrb[0].mxu0
    %2648 = vdwg.mxu0
    %v2649 = vadd.f32 %v2309, %v2631
    %v2650 = vadd.f32 %v2310, %v2636
    %v2651 = vadd.f32 %v2311, %v2641
    %v2652 = vadd.f32 %v2312, %v2646
    %v2653 = vld [vmem:[%s23] sm:$0x1]
    %v2654 = vld [vmem:[%s24] sm:$0x1]
    %v2655 = vsel %vm330, %v2649, 0.0
    %2656 = vadd.xlane.f32.xlu0 %v2655
    %v2657 = vpop.xlane.xlu0 %2656
    %v2658 = vsel %vm330, %v2650, 0.0
    %2659 = vadd.xlane.f32.xlu0 %v2658
    %v2660 = vpop.xlane.xlu0 %2659
    %v2661 = vsel %vm330, %v2651, 0.0
    %2662 = vadd.xlane.f32.xlu0 %v2661
    %v2663 = vpop.xlane.xlu0 %2662
    %v2664 = vsel %vm330, %v2652, 0.0
    %2665 = vadd.xlane.f32.xlu0 %v2664
    %v2666 = vpop.xlane.xlu0 %2665
    %v2667 = vmul.f32 %v2657, %v343
    %v2668 = vmul.f32 %v2660, %v343
    %v2669 = vmul.f32 %v2663, %v343
    %v2670 = vmul.f32 %v2666, %v343
    %v2671 = vsub.f32 %v2649, %v2667
    %v2672 = vsub.f32 %v2650, %v2668
    %v2673 = vsub.f32 %v2651, %v2669
    %v2674 = vsub.f32 %v2652, %v2670
    %v2675 = vmul.f32 %v2671, %v2671
    %v2676 = vmul.f32 %v2672, %v2672
    %v2677 = vmul.f32 %v2673, %v2673
    %v2678 = vmul.f32 %v2674, %v2674
    %v2679 = vsel %vm330, %v2675, 0.0
    %2680 = vadd.xlane.f32.xlu0 %v2679
    %v2681 = vpop.xlane.xlu0 %2680
    %v2682 = vsel %vm330, %v2676, 0.0
    %2683 = vadd.xlane.f32.xlu0 %v2682
    %v2684 = vpop.xlane.xlu0 %2683
    %v2685 = vsel %vm330, %v2677, 0.0
    %2686 = vadd.xlane.f32.xlu0 %v2685
    %v2687 = vpop.xlane.xlu0 %2686
    %v2688 = vsel %vm330, %v2678, 0.0
    %2689 = vadd.xlane.f32.xlu0 %v2688
    %v2690 = vpop.xlane.xlu0 %2689
    %v2691 = vmul.f32 %v2681, %v343
    %v2692 = vmul.f32 %v2684, %v343
    %v2693 = vmul.f32 %v2687, %v343
    %v2694 = vmul.f32 %v2690, %v343
    %v2695 = vadd.f32 %v2691, 1e-05
    %v2696 = vadd.f32 %v2692, 1e-05
    %v2697 = vadd.f32 %v2693, 1e-05
    %v2698 = vadd.f32 %v2694, 1e-05
    %v2699 = vrsqrt.pop %v2695
    %v2700 = vrsqrt.pop %v2696
    %v2701 = vrsqrt.pop %v2697
    %v2702 = vrsqrt.pop %v2698
    %v2703 = vmul.f32 %v2671, %v2699
    %v2704 = vmul.f32 %v2672, %v2700
    %v2705 = vmul.f32 %v2673, %v2701
    %v2706 = vmul.f32 %v2674, %v2702
    %v2708 = vlaneseq
    %v2709 = vshrl.u32 %v2708, 7
    %v2710 = vsub.s32 0, %v2709
    %v2711 = vrot.slane %v2653, %v2710
    %v2713 = vmul.f32 %v2703, %v2711
    %v2714 = vmul.f32 %v2704, %v2711
    %v2715 = vmul.f32 %v2705, %v2711
    %v2716 = vmul.f32 %v2706, %v2711
    %v2718 = vlaneseq
    %v2719 = vshrl.u32 %v2718, 7
    %v2720 = vsub.s32 0, %v2719
    %v2721 = vrot.slane %v2654, %v2720
    %v2723 = vadd.f32 %v2713, %v2721
    %v2724 = vadd.f32 %v2714, %v2721
    %v2725 = vadd.f32 %v2715, %v2721
    %v2726 = vadd.f32 %v2716, %v2721
    %2728 = vrot.lane.b32.xlu0 %v2724, 32
    %v2729 = vpop.permute.xlu0 %2728
    %2732 = vrot.lane.b32.xlu0 %v2725, 64
    %v2733 = vpop.permute.xlu0 %2732
    %2736 = vrot.lane.b32.xlu0 %v2726, 96
    %v2737 = vpop.permute.xlu0 %2736
    %v2739 = vsel %vm330, %v2723, %v2729
    %v2740 = vsel %vm1440, %v2739, %v2733
    %vm2741 = vcmask 785408
    %v2742 = vsel %vm2741, %v2740, %v2737
    %v2743 = vld [vmem:[%s25] sm:$0xff]
    %v2744 = vld [vmem:[%s25 + $0x8] sm:$0xff]
    %v2745 = vld [vmem:[%s25 + $0x10] sm:$0xff]
    %v2746 = vld [vmem:[%s25 + $0x18] sm:$0xff]
    %v2747 = vld [vmem:[%s25 + $0x20] sm:$0xff]
    %v2748 = vld [vmem:[%s25 + $0x28] sm:$0xff]
    %v2749 = vld [vmem:[%s25 + $0x30] sm:$0xff]
    %v2750 = vld [vmem:[%s25 + $0x38] sm:$0xff]
    %v2751 = vld [vmem:[%s25 + $0x40] sm:$0xff]
    %v2752 = vld [vmem:[%s25 + $0x48] sm:$0xff]
    %v2753 = vld [vmem:[%s25 + $0x50] sm:$0xff]
    %v2754 = vld [vmem:[%s25 + $0x58] sm:$0xff]
    %v2755 = vld [vmem:[%s25 + $0x60] sm:$0xff]
    %v2756 = vld [vmem:[%s25 + $0x68] sm:$0xff]
    %v2757 = vld [vmem:[%s25 + $0x70] sm:$0xff]
    %v2758 = vld [vmem:[%s25 + $0x78] sm:$0xff]
    %v2759 = vld [vmem:[%s26] sm:$0x1]
    %v2761 = vlaneseq
    %v2762 = vshrl.u32 %v2761, 7
    %v2763 = vsub.s32 0, %v2762
    %v2764 = vrot.slane %v2759, %v2763
    %2766 = vmatprep.subr.mxu0 0.0
    %2767 = vmatpush1.msra.mxu0 %v2743
    %2768 = vmatprep.subr.mxu0 0.0
    %2769 = vmatpush1.msra.mxu0 %v2744
    %2770 = vmatprep.subr.mxu0 0.0
    %2771 = vmatpush1.msra.mxu0 %v2745
    %2772 = vmatprep.subr.mxu0 0.0
    %2773 = vmatpush1.msra.mxu0 %v2746
    %2774 = vmatprep.subr.mxu0 0.0
    %2775 = vmatpush1.msra.mxu0 %v2747
    %2776 = vmatprep.subr.mxu0 0.0
    %2777 = vmatpush1.msra.mxu0 %v2748
    %2778 = vmatprep.subr.mxu0 0.0
    %2779 = vmatpush1.msra.mxu0 %v2749
    %2780 = vmatprep.subr.mxu0 0.0
    %2781 = vmatpush1.msra.mxu0 %v2750
    %2782 = vmatprep.subr.mxu0 0.0
    %2783 = vmatpush1.msra.mxu0 %v2751
    %2784 = vmatprep.subr.mxu0 0.0
    %2785 = vmatpush1.msra.mxu0 %v2752
    %2786 = vmatprep.subr.mxu0 0.0
    %2787 = vmatpush1.msra.mxu0 %v2753
    %2788 = vmatprep.subr.mxu0 0.0
    %2789 = vmatpush1.msra.mxu0 %v2754
    %2790 = vmatprep.subr.mxu0 0.0
    %2791 = vmatpush1.msra.mxu0 %v2755
    %2792 = vmatprep.subr.mxu0 0.0
    %2793 = vmatpush1.msra.mxu0 %v2756
    %2794 = vmatprep.subr.mxu0 0.0
    %2795 = vmatpush1.msra.mxu0 %v2757
    %2796 = vmatprep.subr.mxu0 0.0
    %2797 = vmatpush1.msra.mxu0 %v2758
    %2798 = vmatprep.subr.mxu0 0.0
    %2799 = vmatpush1.msra.mxu0 0.0
    %2800 = vmatprep.subr.mxu0 0.0
    %2801 = vmatpush1.msra.mxu0 0.0
    %2802 = vmatprep.subr.mxu0 0.0
    %2803 = vmatpush1.msra.mxu0 0.0
    %2804 = vmatprep.subr.mxu0 0.0
    %2805 = vmatpush1.msra.mxu0 0.0
    %2806 = vmatprep.subr.mxu0 0.0
    %2807 = vmatpush1.msra.mxu0 0.0
    %2808 = vmatprep.subr.mxu0 0.0
    %2809 = vmatpush1.msra.mxu0 0.0
    %2810 = vmatprep.subr.mxu0 0.0
    %2811 = vmatpush1.msra.mxu0 0.0
    %2812 = vmatprep.subr.mxu0 0.0
    %2813 = vmatpush1.msra.mxu0 0.0
    %2814 = vmatprep.subr.mxu0 0.0
    %2815 = vmatpush1.msra.mxu0 0.0
    %2816 = vmatprep.subr.mxu0 0.0
    %2817 = vmatpush1.msra.mxu0 0.0
    %2818 = vmatprep.subr.mxu0 0.0
    %2819 = vmatpush1.msra.mxu0 0.0
    %2820 = vmatprep.subr.mxu0 0.0
    %2821 = vmatpush1.msra.mxu0 0.0
    %2822 = vmatprep.subr.mxu0 0.0
    %2823 = vmatpush1.msra.mxu0 0.0
    %2824 = vmatprep.subr.mxu0 0.0
    %2825 = vmatpush1.msra.mxu0 0.0
    %2826 = vmatprep.subr.mxu0 0.0
    %2827 = vmatpush1.msra.mxu0 0.0
    %2828 = vmatprep.subr.mxu0 0.0
    %2829 = vmatpush1.msra.mxu0 0.0
    %2830 = vmatprep.mubr.f32.mxu0 0.0
    %2831 = vmatmul.mubr.f32.gmra.mrb[0].mxu0 %v2742
    %v2832 = vpop.f32.mrb[0].mxu0
    %v2833 = vadd.f32 %v2764, %v2832
    %v2834 = vpop.f32.mrb[0].mxu0
    %2835 = vdwg.mxu0
    %v2836 = vsub.f32 %v2833, %v147
    %v2837 = vld [vmem:[%s5] sm:$0xff]
    %2839 = vset.pattern.permute.xlu0 0
    %2840 = vperm.xlu0 %2839, %v2837
    %v2841 = vpop.permute.xlu0 %2840
    %v2843 = vmul.f32 %v2836, %v2841
    %v2844 = vmul.f32 %v2843, %v109
    %v2845 = vadd.f32 %v2844, %v95
    %vm2846 = vcmask 64512
    %2847 = vst.msk [vmem:[#allocation2] sm:$0xff] %vm2846, %v2845
    // Predicated region
    $region110: #{llm4ts_forward.1} parent=1 // pred_check
      _
    $region111: #{llm4ts_forward.1} parent=1 // pred_check_branch
      %2849 = sbr.rel (0) target = $region113
    $region112: #{llm4ts_forward.1} parent=1 // pred_region
      _
    $region113: #{llm4ts_forward.1} parent=1 // pred_fallthru
      _
    // Predicated region
    $region114: #{llm4ts_forward.1} parent=1 // pred_check
      _
    $region115: #{llm4ts_forward.1} parent=1 // pred_check_branch
      %2851 = sbr.rel (0) target = $region117
    $region116: #{llm4ts_forward.1} parent=1 // pred_region
      %s2853 = ssub.s32 128, 128
      %2854 = vsyncadd [#allocation3], %s2853
      %s2856 = sshll.u32 [#allocation2], 4
      %s2857 = int_to_ptr.vmem [resolvable:$true] %s2856
      %2859 = dma.vmem_to_hbm [thread:$0]  %s2857, 128, %s28, [#allocation3]
    $region117: #{llm4ts_forward.1} parent=1 // pred_fallthru
      _
    // Predicated region
    $region118: #{llm4ts_forward.1} parent=1 // pred_check
      _
    $region119: #{llm4ts_forward.1} parent=1 // pred_check_branch
      %2861 = sbr.rel (0) target = $region121
    $region120: #{llm4ts_forward.1} parent=1 // pred_region
      _
    $region121: #{llm4ts_forward.1} parent=1 // pred_fallthru
      _
    // Predicated region
    $region122: #{llm4ts_forward.1} parent=1 // pred_check
      _
    $region123: #{llm4ts_forward.1} parent=1 // pred_check_branch
      %2863 = sbr.rel (0) target = $region125
    $region124: #{llm4ts_forward.1} parent=1 // pred_region
      %2864 = dma.done [#allocation3], 128
    $region125: #{llm4ts_forward.1} parent=1 // pred_fallthru
      _
    %2865 = vsyncpa [#allocation3], 1

</llo_original>
